<compile_context>
chip_gen: v6e
topology: v6e:2x2x1
jax: 0.10.0
libtpu: 0.0.40
codegen_flags: <defaults>
</compile_context>

<pallas_src>
import functools

import jax
import jax.numpy as jnp
from jax import lax
from jax.experimental import pallas as pl
from jax.experimental.pallas import tpu as pltpu


def _round_up(n, m):
    return ((n + m - 1) // m) * m


# ------------------------------ fused kernel --------------------------------

def _clip_fused_kernel(
        embed_ref,      # (M, Kp)     bf16  patch rows + CLS one-hot (M = Bt*Tp)
        pos_ref,        # (M, W)      f32   positional embedding (tiled over Bt)
        gbias_ref,      # (8, GW)     f32   ln_pre/ln_post gamma/beta + head bias
        lbias_ref,      # (L, 8, 4W)  f32   per-layer LN params + biases slab
        embed_w_ref,    # (Kp, W)     bf16  conv1-as-matmul + class-embedding row
        wqkv_ref,       # (L, W, 3W)  bf16  fused QKV (attn scale folded into q)
        wout_ref,       # (L, W, W)   bf16
        wfc_ref,        # (L, W, 4W)  bf16
        wproj_ref,      # (L, 4W, W)  bf16
        head_w_ref,     # (W, GW)     bf16  [visual proj | proj @ fc_w^T | 0-pad]
        out_ref,        # (Bt, 1, GW) f32   lanes [0:Dout]=feat, [Dout:Dout+NC]=logit
        q_scr, k_scr, v_scr,   # (Bt*H, Tp, Dh) bf16 scratch
        o_scr,                 # (M, W)         bf16 scratch
        *, num_heads, num_layers, batch_tile, seq_len, valid_t):
    f32, bf16 = jnp.float32, jnp.bfloat16
    M, W = pos_ref.shape
    Tp = seq_len
    H = num_heads
    Dh = W // H

    def ln(v, g, b):
        m = jnp.mean(v, axis=-1, keepdims=True)
        c = v - m
        var = jnp.mean(c * c, axis=-1, keepdims=True)
        return c * lax.rsqrt(var + 1e-5) * g + b

    gb = gbias_ref[...]
    ln_pre_g, ln_pre_b = gb[0:1, :W], gb[1:2, :W]
    ln_post_g, ln_post_b = gb[2:3, :W], gb[3:4, :W]
    head_b = gb[4:5, :]

    # patch-embed + class token + positional embedding as a single matmul.
    x = jnp.dot(embed_ref[...], embed_w_ref[...],
                preferred_element_type=f32) + pos_ref[...]            # (M, W)
    x = ln(x, ln_pre_g, ln_pre_b)                                      # ln_pre

    # mask padded key positions (one tile, broadcast over Bt*H batch entries).
    key_ids = lax.broadcasted_iota(jnp.int32, (1, Tp, Tp), 2)
    key_bias = jnp.where(key_ids < valid_t, 0.0, -1e30).astype(f32)

    dn_qk = (((2,), (2,)), ((0,), (0,)))   # q.k^T : contract Dh, batch Bt*H
    dn_pv = (((2,), (1,)), ((0,), (0,)))   # p.v   : standard batched matmul

    for li in range(num_layers):
        lb = lbias_ref[li]                                             # (8, 4W)
        ln1_g, ln1_b = lb[0:1, :W], lb[1:2, :W]
        ln2_g, ln2_b = lb[2:3, :W], lb[3:4, :W]
        bqkv = lb[4:5, :3 * W]
        bout = lb[5:6, :W]
        bfc = lb[6:7, :]
        bproj = lb[7:8, :W]

        # ---------------- multi-head self attention (fused QKV) ----------------
        hb = ln(x, ln1_g, ln1_b).astype(bf16)                          # (M, W)
        qkv = (jnp.dot(hb, wqkv_ref[li],
                       preferred_element_type=f32) + bqkv).astype(bf16)  # (M, 3W)
        for b in range(batch_tile):
            r0 = b * Tp
            for h in range(H):
                bh = b * H + h
                c0 = h * Dh
                q_scr[bh] = qkv[r0:r0 + Tp, c0:c0 + Dh]
                k_scr[bh] = qkv[r0:r0 + Tp, W + c0:W + c0 + Dh]
                v_scr[bh] = qkv[r0:r0 + Tp, 2 * W + c0:2 * W + c0 + Dh]

        s = lax.dot_general(q_scr[...], k_scr[...], dn_qk,
                            preferred_element_type=f32) + key_bias     # (BtH,Tp,Tp)
        s = s - jnp.max(s, axis=-1, keepdims=True)
        p = jnp.exp(s)
        p = p * pl.reciprocal(jnp.sum(p, axis=-1, keepdims=True), approx=True)
        o = lax.dot_general(p.astype(bf16), v_scr[...], dn_pv,
                            preferred_element_type=f32)                # (BtH,Tp,Dh)

        # re-assemble head-concat layout; head-sum happens inside the out matmul.
        for b in range(batch_tile):
            r0 = b * Tp
            for h in range(H):
                o_scr[r0:r0 + Tp, h * Dh:(h + 1) * Dh] = o[b * H + h].astype(bf16)
        x = x + jnp.dot(o_scr[...], wout_ref[li],
                        preferred_element_type=f32) + bout

        # ------------------------ MLP with QuickGELU ---------------------------
        hb = ln(x, ln2_g, ln2_b).astype(bf16)
        h1 = jnp.dot(hb, wfc_ref[li], preferred_element_type=f32) + bfc   # (M, 4W)
        h1 = h1 * pl.reciprocal(1.0 + jnp.exp(-1.702 * h1), approx=True)  # QuickGELU
        h2 = jnp.dot(h1.astype(bf16), wproj_ref[li],
                     preferred_element_type=f32) + bproj                  # (M, W)
        x = x + h2

    # ln_post on each CLS token, fused visual-projection + fc head,
    # lane-dense 128-wide output row per image.
    for b in range(batch_tile):
        cls = x[b * Tp:b * Tp + 1, :]                                  # (1, W)
        pooled = ln(cls, ln_post_g, ln_post_b).astype(bf16)
        row = jnp.dot(pooled, head_w_ref[...],
                      preferred_element_type=f32) + head_b             # (1, GW)
        out_ref[b] = row.astype(out_ref.dtype)


# --------------------------- parameter construction -------------------------

def init_params(key, *, in_ch=3, image_size=16, patch=4, width=32, layers=2,
                heads=4, output_dim=32, num_classes=1):
    T = (image_size // patch) ** 2 + 1
    n_keys = 8 + layers * 4
    keys = iter(jax.random.split(key, n_keys))
    nrm = lambda shape, s=0.02: (s * jax.random.normal(next(keys), shape)).astype(jnp.float32)
    ones = lambda shape: jnp.ones(shape, jnp.float32)
    zeros = lambda shape: jnp.zeros(shape, jnp.float32)

    params = {
        'conv1_w': nrm((width, in_ch, patch, patch)),
        'class_embedding': nrm((width,)),
        'positional_embedding': nrm((T, width)),
        'ln_pre_g': ones((1, width)), 'ln_pre_b': zeros((1, width)),
        'ln_post_g': ones((1, width)), 'ln_post_b': zeros((1, width)),
        'proj': nrm((width, output_dim)),
        'fc_w': nrm((num_classes, output_dim)),
        'fc_b': zeros((1, num_classes)),
        'blocks': [],
        'cfg': dict(in_ch=in_ch, image_size=image_size, patch=patch, width=width,
                    layers=layers, heads=heads, output_dim=output_dim,
                    num_classes=num_classes, T=T),
    }
    for _ in range(layers):
        blk = {
            'ln1_g': ones((1, width)), 'ln1_b': zeros((1, width)),
            'wqkv': nrm((3 * width, width)), 'bqkv': zeros((1, 3 * width)),
            'wout': nrm((width, width)), 'bout': zeros((1, width)),
            'ln2_g': ones((1, width)), 'ln2_b': zeros((1, width)),
            'wfc': nrm((4 * width, width)), 'bfc': zeros((1, 4 * width)),
            'wproj': nrm((width, 4 * width)), 'bproj': zeros((1, width)),
        }
        params['blocks'].append(blk)
    return params


def pack_params(params):
    """Reshape / pad / fold / cast parameters into kernel-ready layout (once)."""
    cfg = dict(params['cfg'])
    W, heads, L = cfg['width'], cfg['heads'], cfg['layers']
    C, psz, T = cfg['in_ch'], cfg['patch'], cfg['T']
    Dout, NC = cfg['output_dim'], cfg['num_classes']
    Dh = W // heads
    Tp = _round_up(T, 8)
    kpat = C * psz * psz
    Kp = _round_up(kpat + 1, 8)
    FW = 4 * W
    GW = _round_up(max(W, Dout + NC), 128)
    bf16 = jnp.bfloat16
    scale = Dh ** -0.5

    # conv1 as a (Kp, W) matmul; row `kpat` holds the class embedding so the
    # CLS token comes out of the same matmul via a one-hot input row.
    embed_w = jnp.zeros((Kp, W), jnp.float32)
    embed_w = embed_w.at[:kpat].set(params['conv1_w'].reshape(W, kpat).T)
    embed_w = embed_w.at[kpat].set(params['class_embedding'])

    pos = jnp.zeros((Tp, W), jnp.float32).at[:T].set(params['positional_embedding'])

    wqkv, wout, wfc, wproj, lbias = [], [], [], [], []
    for blk in params['blocks']:
        wq = blk['wqkv'].T                              # (W, 3W): cols [q | k | v]
        wq = wq.at[:, :W].multiply(scale)               # fold attention scale into q
        bq = blk['bqkv'][0].at[:W].multiply(scale)      # (3W,)
        wqkv.append(wq.astype(bf16))
        wout.append(blk['wout'].T.astype(bf16))         # (W, W)
        wfc.append(blk['wfc'].T.astype(bf16))           # (W, 4W)
        wproj.append(blk['wproj'].T.astype(bf16))       # (4W, W)
        slab = jnp.zeros((8, FW), jnp.float32)          # per-layer bias/LN slab
        slab = slab.at[0, :W].set(blk['ln1_g'][0])
        slab = slab.at[1, :W].set(blk['ln1_b'][0])
        slab = slab.at[2, :W].set(blk['ln2_g'][0])
        slab = slab.at[3, :W].set(blk['ln2_b'][0])
        slab = slab.at[4, :3 * W].set(bq)
        slab = slab.at[5, :W].set(blk['bout'][0])
        slab = slab.at[6, :FW].set(blk['bfc'][0])
        slab = slab.at[7, :W].set(blk['bproj'][0])
        lbias.append(slab)

    # visual projection + fc head folded into one lane-dense (W, GW) matrix:
    # lanes [0:Dout] -> features, lanes [Dout:Dout+NC] -> logits.
    head_w = jnp.zeros((W, GW), jnp.float32)
    head_w = head_w.at[:, :Dout].set(params['proj'])
    head_w = head_w.at[:, Dout:Dout + NC].set(params['proj'] @ params['fc_w'].T)
    head_b = jnp.zeros((GW,), jnp.float32).at[Dout:Dout + NC].set(params['fc_b'][0])

    gbias = jnp.zeros((8, GW), jnp.float32)             # global bias/LN slab
    gbias = gbias.at[0, :W].set(params['ln_pre_g'][0])
    gbias = gbias.at[1, :W].set(params['ln_pre_b'][0])
    gbias = gbias.at[2, :W].set(params['ln_post_g'][0])
    gbias = gbias.at[3, :W].set(params['ln_post_b'][0])
    gbias = gbias.at[4].set(head_b)

    packed = dict(
        embed_w=embed_w.astype(bf16), pos=pos, gbias=gbias,
        lbias=jnp.stack(lbias),
        wqkv=jnp.stack(wqkv), wout=jnp.stack(wout),
        wfc=jnp.stack(wfc), wproj=jnp.stack(wproj),
        head_w=head_w.astype(bf16),
    )
    meta = dict(cfg)
    meta.update(Tp=Tp, kpat=kpat, Kp=Kp, Dh=Dh, GW=GW)
    return packed, meta


# ------------------------------- forward pass --------------------------------

def _pick_batch_tile(B):
    # Bt>1 raises every matmul's M dimension and amortizes per-grid-step cost;
    # keep >=2 grid steps so both v7x TensorCores stay busy at tiny B.
    if B <= 2:
        return 1
    bt = min(8, B // 2)
    while B % bt:
        bt -= 1
    return max(bt, 1)


def make_clip_forward(params, batch_tile=None):
    packed, meta = pack_params(params)
    heads, L, T = meta['heads'], meta['layers'], meta['T']
    W, Dh = meta['width'], meta['Dh']
    Tp, Kp, kpat = meta['Tp'], meta['Kp'], meta['kpat']
    C, psz = meta['in_ch'], meta['patch']
    Dout, NC, GW = meta['output_dim'], meta['num_classes'], meta['GW']

    def _resident_spec(a):
        # full-array block; constant block index => fetched once, never re-DMA'd.
        # TODO(synk): add pipeline_mode=pl.Buffered(1) to halve resident weight
        #             VMEM once single-buffered specs are verified on this JAX.
        nd = a.ndim
        return pl.BlockSpec(a.shape, lambda i, _nd=nd: (0,) * _nd)

    weight_names = ['pos', 'gbias', 'lbias', 'embed_w', 'wqkv', 'wout',
                    'wfc', 'wproj', 'head_w']

    @jax.jit
    def forward(x_nchw):
        B, _, Himg, Wimg = x_nchw.shape
        gh, gw = Himg // psz, Wimg // psz
        assert gh * gw + 1 == T, "image size / patch size mismatch with params"
        Bt = batch_tile if batch_tile else _pick_batch_tile(B)
        assert B % Bt == 0

        # im2col patch extraction, built directly in bf16 (tiny XLA glue here).
        # TODO(synk): at real image sizes express this gather via a BlockSpec
        #             index_map / in-kernel DMA instead of an XLA transpose.
        patches = (x_nchw.reshape(B, C, gh, psz, gw, psz)
                   .transpose(0, 2, 4, 1, 3, 5)
                   .reshape(B, gh * gw, kpat)).astype(jnp.bfloat16)
        embed = jnp.zeros((B, Tp, Kp), jnp.bfloat16)
        embed = embed.at[:, 0, kpat].set(1.0)                    # CLS one-hot row
        embed = embed.at[:, 1:1 + gh * gw, :kpat].set(patches)
        embed = embed.reshape(B * Tp, Kp)                        # token-stream layout

        weights = [packed[k] for k in weight_names]
        weights[0] = jnp.tile(packed['pos'], (Bt, 1))            # pos over Bt images

        in_specs = ([pl.BlockSpec((Bt * Tp, Kp), lambda i: (i, 0))] +
                    [_resident_spec(a) for a in weights])
        out_spec = pl.BlockSpec((Bt, 1, GW), lambda i: (i, 0, 0))
        scratch = ([pltpu.VMEM((Bt * heads, Tp, Dh), jnp.bfloat16) for _ in range(3)]
                   + [pltpu.VMEM((Bt * Tp, W), jnp.bfloat16)])

        kernel = functools.partial(
            _clip_fused_kernel, num_heads=heads, num_layers=L,
            batch_tile=Bt, seq_len=Tp, valid_t=T)

        out = pl.pallas_call(
            kernel,
            grid=(B // Bt,),
            in_specs=in_specs,
            out_specs=out_spec,
            out_shape=jax.ShapeDtypeStruct((B, 1, GW), jnp.float32),
            scratch_shapes=scratch,
            compiler_params=pltpu.CompilerParams(
                dimension_semantics=("parallel",)),
        )(embed, *weights)

        feats = out[:, 0, :Dout]
        logits = out[:, 0, Dout:Dout + NC]
        return feats, logits

    return forward


def clip_model_forward(forward_fn, x, return_feature=True):
    features, logits = forward_fn(x)
    return features if return_feature else logits


# ----------------------------------- main ------------------------------------

if __name__ == "__main__":
    key = jax.random.PRNGKey(0)
    k_param, k_x = jax.random.split(key)

    # Scaled-down 'ViT-L/14'-style config: 16x16 image, patch 4, width 32,
    # 2 layers, 4 heads, feature dim 32 (stands in for CHANNELS['ViT-L/14']=768).
    params = init_params(k_param, in_ch=3, image_size=16, patch=4, width=32,
                         layers=2, heads=4, output_dim=32, num_classes=1)
    forward = make_clip_forward(params)

    x = jax.random.normal(k_x, (2, 3, 16, 16), dtype=jnp.float32)  # NCHW like PyTorch

    features = clip_model_forward(forward, x, return_feature=True)   # (2, 32)
    logits = clip_model_forward(forward, x, return_feature=False)    # (2, 1)

    jax.block_until_ready(features)
    jax.block_until_ready(logits)

    assert features.shape == (2, 32) and logits.shape == (2, 1)
    assert bool(jnp.all(jnp.isfinite(features))) and bool(jnp.all(jnp.isfinite(logits)))
    print("KERNEL_OK")
</pallas_src>

<mosaic_0001>
module attributes {stable_mosaic.version = 11 : i64} {
  func.func @_clip_fused_kernel(%arg0: i32, %arg1: memref<24x56xbf16, #tpu.memory_space<vmem>>, %arg2: memref<24x32xf32, #tpu.memory_space<vmem>>, %arg3: memref<8x128xf32, #tpu.memory_space<vmem>>, %arg4: memref<2x8x128xf32, #tpu.memory_space<vmem>>, %arg5: memref<56x32xbf16, #tpu.memory_space<vmem>>, %arg6: memref<2x32x96xbf16, #tpu.memory_space<vmem>>, %arg7: memref<2x32x32xbf16, #tpu.memory_space<vmem>>, %arg8: memref<2x32x128xbf16, #tpu.memory_space<vmem>>, %arg9: memref<2x128x32xbf16, #tpu.memory_space<vmem>>, %arg10: memref<32x128xbf16, #tpu.memory_space<vmem>>, %arg11: memref<1x1x128xf32, #tpu.memory_space<vmem>>, %arg12: memref<4x24x8xbf16, #tpu.memory_space<vmem>>, %arg13: memref<4x24x8xbf16, #tpu.memory_space<vmem>>, %arg14: memref<4x24x8xbf16, #tpu.memory_space<vmem>>, %arg15: memref<24x32xbf16, #tpu.memory_space<vmem>>) attributes {dimension_semantics = [#tpu.dimension_semantics<parallel>], iteration_bounds = array<i64: 2>, scalar_prefetch = 0 : i64, scratch_operands = 4 : i64, tpu.core_type = #tpu.core_type<tc>, window_params = [{transform_indices = @transform_0, window_bounds = array<i64: 24, 56>}, {pipeline_mode = #tpu.pipeline_mode<synchronous>, transform_indices = @transform_1, window_bounds = array<i64: 24, 32>}, {pipeline_mode = #tpu.pipeline_mode<synchronous>, transform_indices = @transform_2, window_bounds = array<i64: 8, 128>}, {pipeline_mode = #tpu.pipeline_mode<synchronous>, transform_indices = @transform_3, window_bounds = array<i64: 2, 8, 128>}, {pipeline_mode = #tpu.pipeline_mode<synchronous>, transform_indices = @transform_4, window_bounds = array<i64: 56, 32>}, {pipeline_mode = #tpu.pipeline_mode<synchronous>, transform_indices = @transform_5, window_bounds = array<i64: 2, 32, 96>}, {pipeline_mode = #tpu.pipeline_mode<synchronous>, transform_indices = @transform_6, window_bounds = array<i64: 2, 32, 32>}, {pipeline_mode = #tpu.pipeline_mode<synchronous>, transform_indices = @transform_7, window_bounds = array<i64: 2, 32, 128>}, {pipeline_mode = #tpu.pipeline_mode<synchronous>, transform_indices = @transform_8, window_bounds = array<i64: 2, 128, 32>}, {pipeline_mode = #tpu.pipeline_mode<synchronous>, transform_indices = @transform_9, window_bounds = array<i64: 32, 128>}, {transform_indices = @transform_10, window_bounds = array<i64: 1, 1, 128>}]} {
    %c0 = arith.constant 0 : index
    %c0_0 = arith.constant 0 : index
    %0 = vector.load %arg3[%c0, %c0_0] : memref<8x128xf32, #tpu.memory_space<vmem>>, vector<8x128xf32>
    %1 = vector.extract_strided_slice %0 {offsets = [0, 0], sizes = [1, 32], strides = [1, 1]} : vector<8x128xf32> to vector<1x32xf32>
    %2 = vector.extract_strided_slice %0 {offsets = [1, 0], sizes = [1, 32], strides = [1, 1]} : vector<8x128xf32> to vector<1x32xf32>
    %3 = vector.extract_strided_slice %0 {offsets = [2, 0], sizes = [1, 32], strides = [1, 1]} : vector<8x128xf32> to vector<1x32xf32>
    %4 = vector.extract_strided_slice %0 {offsets = [3, 0], sizes = [1, 32], strides = [1, 1]} : vector<8x128xf32> to vector<1x32xf32>
    %5 = vector.extract_strided_slice %0 {offsets = [4, 0], sizes = [1, 128], strides = [1, 1]} : vector<8x128xf32> to vector<1x128xf32>
    %c0_1 = arith.constant 0 : index
    %c0_2 = arith.constant 0 : index
    %6 = vector.load %arg1[%c0_1, %c0_2] : memref<24x56xbf16, #tpu.memory_space<vmem>>, vector<24x56xbf16>
    %c0_3 = arith.constant 0 : index
    %c0_4 = arith.constant 0 : index
    %7 = vector.load %arg5[%c0_3, %c0_4] : memref<56x32xbf16, #tpu.memory_space<vmem>>, vector<56x32xbf16>
    %cst = arith.constant dense<0.000000e+00> : vector<24x32xf32>
    %8 = tpu.matmul %6, %7, %cst {dimension_numbers = #tpu.dot_dimension_numbers<[1], [0], [0], [1], [0, 0, 1, 1], [], []>} : vector<24x56xbf16>, vector<56x32xbf16>, vector<24x32xf32> -> vector<24x32xf32>
    %c0_5 = arith.constant 0 : index
    %c0_6 = arith.constant 0 : index
    %9 = vector.load %arg2[%c0_5, %c0_6] : memref<24x32xf32, #tpu.memory_space<vmem>>, vector<24x32xf32>
    %10 = arith.addf %8, %9 : vector<24x32xf32>
    %cst_7 = arith.constant dense<0.000000e+00> : vector<24xf32>
    %11 = vector.multi_reduction <add>, %10, %cst_7 [1] : vector<24x32xf32> to vector<24xf32>
    %12 = vector.shape_cast %11 : vector<24xf32> to vector<24x1xf32>
    %cst_8 = arith.constant 3.200000e+01 : f32
    %13 = vector.broadcast %cst_8 : f32 to vector<24x1xf32>
    %14 = arith.divf %12, %13 : vector<24x1xf32>
    %15 = vector.broadcast %14 : vector<24x1xf32> to vector<24x32xf32>
    %16 = arith.subf %10, %15 : vector<24x32xf32>
    %17 = arith.mulf %16, %16 : vector<24x32xf32>
    %cst_9 = arith.constant dense<0.000000e+00> : vector<24xf32>
    %18 = vector.multi_reduction <add>, %17, %cst_9 [1] : vector<24x32xf32> to vector<24xf32>
    %19 = vector.shape_cast %18 : vector<24xf32> to vector<24x1xf32>
    %cst_10 = arith.constant 3.200000e+01 : f32
    %20 = vector.broadcast %cst_10 : f32 to vector<24x1xf32>
    %21 = arith.divf %19, %20 : vector<24x1xf32>
    %cst_11 = arith.constant 9.99999974E-6 : f32
    %22 = vector.broadcast %cst_11 : f32 to vector<24x1xf32>
    %23 = arith.addf %21, %22 : vector<24x1xf32>
    %24 = math.rsqrt %23 : vector<24x1xf32>
    %25 = vector.broadcast %24 : vector<24x1xf32> to vector<24x32xf32>
    %26 = arith.mulf %16, %25 : vector<24x32xf32>
    %27 = vector.broadcast %1 : vector<1x32xf32> to vector<24x32xf32>
    %28 = arith.mulf %26, %27 : vector<24x32xf32>
    %29 = vector.broadcast %2 : vector<1x32xf32> to vector<24x32xf32>
    %30 = arith.addf %28, %29 : vector<24x32xf32>
    %31 = tpu.iota {dimensions = array<i32: 2>} : vector<1x24x24xi32>
    %c17_i32 = arith.constant 17 : i32
    %32 = vector.broadcast %c17_i32 : i32 to vector<1x24x24xi32>
    %33 = arith.cmpi slt, %31, %32 : vector<1x24x24xi32>
    %cst_12 = arith.constant 0.000000e+00 : f32
    %cst_13 = arith.constant -1.000000e+30 : f32
    %34 = vector.broadcast %cst_12 : f32 to vector<1x24x24xf32>
    %35 = vector.broadcast %cst_13 : f32 to vector<1x24x24xf32>
    %36 = arith.select %33, %34, %35 : vector<1x24x24xi1>, vector<1x24x24xf32>
    %c0_14 = arith.constant 0 : index
    %c0_15 = arith.constant 0 : index
    %c0_16 = arith.constant 0 : index
    %37 = vector.load %arg4[%c0_14, %c0_15, %c0_16] : memref<2x8x128xf32, #tpu.memory_space<vmem>>, vector<1x8x128xf32>
    %38 = vector.shape_cast %37 : vector<1x8x128xf32> to vector<8x128xf32>
    %39 = vector.extract_strided_slice %38 {offsets = [0, 0], sizes = [1, 32], strides = [1, 1]} : vector<8x128xf32> to vector<1x32xf32>
    %40 = vector.extract_strided_slice %38 {offsets = [1, 0], sizes = [1, 32], strides = [1, 1]} : vector<8x128xf32> to vector<1x32xf32>
    %41 = vector.extract_strided_slice %38 {offsets = [2, 0], sizes = [1, 32], strides = [1, 1]} : vector<8x128xf32> to vector<1x32xf32>
    %42 = vector.extract_strided_slice %38 {offsets = [3, 0], sizes = [1, 32], strides = [1, 1]} : vector<8x128xf32> to vector<1x32xf32>
    %43 = vector.extract_strided_slice %38 {offsets = [4, 0], sizes = [1, 96], strides = [1, 1]} : vector<8x128xf32> to vector<1x96xf32>
    %44 = vector.extract_strided_slice %38 {offsets = [5, 0], sizes = [1, 32], strides = [1, 1]} : vector<8x128xf32> to vector<1x32xf32>
    %45 = vector.extract_strided_slice %38 {offsets = [6, 0], sizes = [1, 128], strides = [1, 1]} : vector<8x128xf32> to vector<1x128xf32>
    %46 = vector.extract_strided_slice %38 {offsets = [7, 0], sizes = [1, 32], strides = [1, 1]} : vector<8x128xf32> to vector<1x32xf32>
    %cst_17 = arith.constant dense<0.000000e+00> : vector<24xf32>
    %47 = vector.multi_reduction <add>, %30, %cst_17 [1] : vector<24x32xf32> to vector<24xf32>
    %48 = vector.shape_cast %47 : vector<24xf32> to vector<24x1xf32>
    %cst_18 = arith.constant 3.200000e+01 : f32
    %49 = vector.broadcast %cst_18 : f32 to vector<24x1xf32>
    %50 = arith.divf %48, %49 : vector<24x1xf32>
    %51 = vector.broadcast %50 : vector<24x1xf32> to vector<24x32xf32>
    %52 = arith.subf %30, %51 : vector<24x32xf32>
    %53 = arith.mulf %52, %52 : vector<24x32xf32>
    %cst_19 = arith.constant dense<0.000000e+00> : vector<24xf32>
    %54 = vector.multi_reduction <add>, %53, %cst_19 [1] : vector<24x32xf32> to vector<24xf32>
    %55 = vector.shape_cast %54 : vector<24xf32> to vector<24x1xf32>
    %cst_20 = arith.constant 3.200000e+01 : f32
    %56 = vector.broadcast %cst_20 : f32 to vector<24x1xf32>
    %57 = arith.divf %55, %56 : vector<24x1xf32>
    %cst_21 = arith.constant 9.99999974E-6 : f32
    %58 = vector.broadcast %cst_21 : f32 to vector<24x1xf32>
    %59 = arith.addf %57, %58 : vector<24x1xf32>
    %60 = math.rsqrt %59 : vector<24x1xf32>
    %61 = vector.broadcast %60 : vector<24x1xf32> to vector<24x32xf32>
    %62 = arith.mulf %52, %61 : vector<24x32xf32>
    %63 = vector.broadcast %39 : vector<1x32xf32> to vector<24x32xf32>
    %64 = arith.mulf %62, %63 : vector<24x32xf32>
    %65 = vector.broadcast %40 : vector<1x32xf32> to vector<24x32xf32>
    %66 = arith.addf %64, %65 : vector<24x32xf32>
    %67 = arith.truncf %66 : vector<24x32xf32> to vector<24x32xbf16>
    %c0_22 = arith.constant 0 : index
    %c0_23 = arith.constant 0 : index
    %c0_24 = arith.constant 0 : index
    %68 = vector.load %arg6[%c0_22, %c0_23, %c0_24] : memref<2x32x96xbf16, #tpu.memory_space<vmem>>, vector<1x32x96xbf16>
    %69 = vector.shape_cast %68 : vector<1x32x96xbf16> to vector<32x96xbf16>
    %cst_25 = arith.constant dense<0.000000e+00> : vector<24x96xf32>
    %70 = tpu.matmul %67, %69, %cst_25 {dimension_numbers = #tpu.dot_dimension_numbers<[1], [0], [0], [1], [0, 0, 1, 1], [], []>} : vector<24x32xbf16>, vector<32x96xbf16>, vector<24x96xf32> -> vector<24x96xf32>
    %71 = vector.broadcast %43 : vector<1x96xf32> to vector<24x96xf32>
    %72 = arith.addf %70, %71 : vector<24x96xf32>
    %73 = arith.truncf %72 : vector<24x96xf32> to vector<24x96xbf16>
    %74 = vector.extract_strided_slice %73 {offsets = [0, 0], sizes = [24, 8], strides = [1, 1]} : vector<24x96xbf16> to vector<24x8xbf16>
    %c0_26 = arith.constant 0 : index
    %c0_27 = arith.constant 0 : index
    %c0_28 = arith.constant 0 : index
    %75 = vector.load %arg12[%c0_26, %c0_27, %c0_28] : memref<4x24x8xbf16, #tpu.memory_space<vmem>>, vector<1x24x8xbf16>
    %76 = vector.shape_cast %75 : vector<1x24x8xbf16> to vector<24x8xbf16>
    %77 = vector.shape_cast %74 : vector<24x8xbf16> to vector<1x24x8xbf16>
    tpu.vector_store %arg12[%c0_26, %c0_27, %c0_28], %77 {strides = array<i32>} : memref<4x24x8xbf16, #tpu.memory_space<vmem>>, vector<1x24x8xbf16>,
    %78 = vector.extract_strided_slice %73 {offsets = [0, 32], sizes = [24, 8], strides = [1, 1]} : vector<24x96xbf16> to vector<24x8xbf16>
    %c0_29 = arith.constant 0 : index
    %c0_30 = arith.constant 0 : index
    %c0_31 = arith.constant 0 : index
    %79 = vector.load %arg13[%c0_29, %c0_30, %c0_31] : memref<4x24x8xbf16, #tpu.memory_space<vmem>>, vector<1x24x8xbf16>
    %80 = vector.shape_cast %79 : vector<1x24x8xbf16> to vector<24x8xbf16>
    %81 = vector.shape_cast %78 : vector<24x8xbf16> to vector<1x24x8xbf16>
    tpu.vector_store %arg13[%c0_29, %c0_30, %c0_31], %81 {strides = array<i32>} : memref<4x24x8xbf16, #tpu.memory_space<vmem>>, vector<1x24x8xbf16>,
    %82 = vector.extract_strided_slice %73 {offsets = [0, 64], sizes = [24, 8], strides = [1, 1]} : vector<24x96xbf16> to vector<24x8xbf16>
    %c0_32 = arith.constant 0 : index
    %c0_33 = arith.constant 0 : index
    %c0_34 = arith.constant 0 : index
    %83 = vector.load %arg14[%c0_32, %c0_33, %c0_34] : memref<4x24x8xbf16, #tpu.memory_space<vmem>>, vector<1x24x8xbf16>
    %84 = vector.shape_cast %83 : vector<1x24x8xbf16> to vector<24x8xbf16>
    %85 = vector.shape_cast %82 : vector<24x8xbf16> to vector<1x24x8xbf16>
    tpu.vector_store %arg14[%c0_32, %c0_33, %c0_34], %85 {strides = array<i32>} : memref<4x24x8xbf16, #tpu.memory_space<vmem>>, vector<1x24x8xbf16>,
    %86 = vector.extract_strided_slice %73 {offsets = [0, 8], sizes = [24, 8], strides = [1, 1]} : vector<24x96xbf16> to vector<24x8xbf16>
    %c1 = arith.constant 1 : index
    %c0_35 = arith.constant 0 : index
    %c0_36 = arith.constant 0 : index
    %87 = vector.load %arg12[%c1, %c0_35, %c0_36] : memref<4x24x8xbf16, #tpu.memory_space<vmem>>, vector<1x24x8xbf16>
    %88 = vector.shape_cast %87 : vector<1x24x8xbf16> to vector<24x8xbf16>
    %89 = vector.shape_cast %86 : vector<24x8xbf16> to vector<1x24x8xbf16>
    tpu.vector_store %arg12[%c1, %c0_35, %c0_36], %89 {strides = array<i32>} : memref<4x24x8xbf16, #tpu.memory_space<vmem>>, vector<1x24x8xbf16>,
    %90 = vector.extract_strided_slice %73 {offsets = [0, 40], sizes = [24, 8], strides = [1, 1]} : vector<24x96xbf16> to vector<24x8xbf16>
    %c1_37 = arith.constant 1 : index
    %c0_38 = arith.constant 0 : index
    %c0_39 = arith.constant 0 : index
    %91 = vector.load %arg13[%c1_37, %c0_38, %c0_39] : memref<4x24x8xbf16, #tpu.memory_space<vmem>>, vector<1x24x8xbf16>
    %92 = vector.shape_cast %91 : vector<1x24x8xbf16> to vector<24x8xbf16>
    %93 = vector.shape_cast %90 : vector<24x8xbf16> to vector<1x24x8xbf16>
    tpu.vector_store %arg13[%c1_37, %c0_38, %c0_39], %93 {strides = array<i32>} : memref<4x24x8xbf16, #tpu.memory_space<vmem>>, vector<1x24x8xbf16>,
    %94 = vector.extract_strided_slice %73 {offsets = [0, 72], sizes = [24, 8], strides = [1, 1]} : vector<24x96xbf16> to vector<24x8xbf16>
    %c1_40 = arith.constant 1 : index
    %c0_41 = arith.constant 0 : index
    %c0_42 = arith.constant 0 : index
    %95 = vector.load %arg14[%c1_40, %c0_41, %c0_42] : memref<4x24x8xbf16, #tpu.memory_space<vmem>>, vector<1x24x8xbf16>
    %96 = vector.shape_cast %95 : vector<1x24x8xbf16> to vector<24x8xbf16>
    %97 = vector.shape_cast %94 : vector<24x8xbf16> to vector<1x24x8xbf16>
    tpu.vector_store %arg14[%c1_40, %c0_41, %c0_42], %97 {strides = array<i32>} : memref<4x24x8xbf16, #tpu.memory_space<vmem>>, vector<1x24x8xbf16>,
    %98 = vector.extract_strided_slice %73 {offsets = [0, 16], sizes = [24, 8], strides = [1, 1]} : vector<24x96xbf16> to vector<24x8xbf16>
    %c2 = arith.constant 2 : index
    %c0_43 = arith.constant 0 : index
    %c0_44 = arith.constant 0 : index
    %99 = vector.load %arg12[%c2, %c0_43, %c0_44] : memref<4x24x8xbf16, #tpu.memory_space<vmem>>, vector<1x24x8xbf16>
    %100 = vector.shape_cast %99 : vector<1x24x8xbf16> to vector<24x8xbf16>
    %101 = vector.shape_cast %98 : vector<24x8xbf16> to vector<1x24x8xbf16>
    tpu.vector_store %arg12[%c2, %c0_43, %c0_44], %101 {strides = array<i32>} : memref<4x24x8xbf16, #tpu.memory_space<vmem>>, vector<1x24x8xbf16>,
    %102 = vector.extract_strided_slice %73 {offsets = [0, 48], sizes = [24, 8], strides = [1, 1]} : vector<24x96xbf16> to vector<24x8xbf16>
    %c2_45 = arith.constant 2 : index
    %c0_46 = arith.constant 0 : index
    %c0_47 = arith.constant 0 : index
    %103 = vector.load %arg13[%c2_45, %c0_46, %c0_47] : memref<4x24x8xbf16, #tpu.memory_space<vmem>>, vector<1x24x8xbf16>
    %104 = vector.shape_cast %103 : vector<1x24x8xbf16> to vector<24x8xbf16>
    %105 = vector.shape_cast %102 : vector<24x8xbf16> to vector<1x24x8xbf16>
    tpu.vector_store %arg13[%c2_45, %c0_46, %c0_47], %105 {strides = array<i32>} : memref<4x24x8xbf16, #tpu.memory_space<vmem>>, vector<1x24x8xbf16>,
    %106 = vector.extract_strided_slice %73 {offsets = [0, 80], sizes = [24, 8], strides = [1, 1]} : vector<24x96xbf16> to vector<24x8xbf16>
    %c2_48 = arith.constant 2 : index
    %c0_49 = arith.constant 0 : index
    %c0_50 = arith.constant 0 : index
    %107 = vector.load %arg14[%c2_48, %c0_49, %c0_50] : memref<4x24x8xbf16, #tpu.memory_space<vmem>>, vector<1x24x8xbf16>
    %108 = vector.shape_cast %107 : vector<1x24x8xbf16> to vector<24x8xbf16>
    %109 = vector.shape_cast %106 : vector<24x8xbf16> to vector<1x24x8xbf16>
    tpu.vector_store %arg14[%c2_48, %c0_49, %c0_50], %109 {strides = array<i32>} : memref<4x24x8xbf16, #tpu.memory_space<vmem>>, vector<1x24x8xbf16>,
    %110 = vector.extract_strided_slice %73 {offsets = [0, 24], sizes = [24, 8], strides = [1, 1]} : vector<24x96xbf16> to vector<24x8xbf16>
    %c3 = arith.constant 3 : index
    %c0_51 = arith.constant 0 : index
    %c0_52 = arith.constant 0 : index
    %111 = vector.load %arg12[%c3, %c0_51, %c0_52] : memref<4x24x8xbf16, #tpu.memory_space<vmem>>, vector<1x24x8xbf16>
    %112 = vector.shape_cast %111 : vector<1x24x8xbf16> to vector<24x8xbf16>
    %113 = vector.shape_cast %110 : vector<24x8xbf16> to vector<1x24x8xbf16>
    tpu.vector_store %arg12[%c3, %c0_51, %c0_52], %113 {strides = array<i32>} : memref<4x24x8xbf16, #tpu.memory_space<vmem>>, vector<1x24x8xbf16>,
    %114 = vector.extract_strided_slice %73 {offsets = [0, 56], sizes = [24, 8], strides = [1, 1]} : vector<24x96xbf16> to vector<24x8xbf16>
    %c3_53 = arith.constant 3 : index
    %c0_54 = arith.constant 0 : index
    %c0_55 = arith.constant 0 : index
    %115 = vector.load %arg13[%c3_53, %c0_54, %c0_55] : memref<4x24x8xbf16, #tpu.memory_space<vmem>>, vector<1x24x8xbf16>
    %116 = vector.shape_cast %115 : vector<1x24x8xbf16> to vector<24x8xbf16>
    %117 = vector.shape_cast %114 : vector<24x8xbf16> to vector<1x24x8xbf16>
    tpu.vector_store %arg13[%c3_53, %c0_54, %c0_55], %117 {strides = array<i32>} : memref<4x24x8xbf16, #tpu.memory_space<vmem>>, vector<1x24x8xbf16>,
    %118 = vector.extract_strided_slice %73 {offsets = [0, 88], sizes = [24, 8], strides = [1, 1]} : vector<24x96xbf16> to vector<24x8xbf16>
    %c3_56 = arith.constant 3 : index
    %c0_57 = arith.constant 0 : index
    %c0_58 = arith.constant 0 : index
    %119 = vector.load %arg14[%c3_56, %c0_57, %c0_58] : memref<4x24x8xbf16, #tpu.memory_space<vmem>>, vector<1x24x8xbf16>
    %120 = vector.shape_cast %119 : vector<1x24x8xbf16> to vector<24x8xbf16>
    %121 = vector.shape_cast %118 : vector<24x8xbf16> to vector<1x24x8xbf16>
    tpu.vector_store %arg14[%c3_56, %c0_57, %c0_58], %121 {strides = array<i32>} : memref<4x24x8xbf16, #tpu.memory_space<vmem>>, vector<1x24x8xbf16>,
    %c0_59 = arith.constant 0 : index
    %c0_60 = arith.constant 0 : index
    %c0_61 = arith.constant 0 : index
    %122 = vector.load %arg12[%c0_59, %c0_60, %c0_61] : memref<4x24x8xbf16, #tpu.memory_space<vmem>>, vector<4x24x8xbf16>
    %c0_62 = arith.constant 0 : index
    %c0_63 = arith.constant 0 : index
    %c0_64 = arith.constant 0 : index
    %123 = vector.load %arg13[%c0_62, %c0_63, %c0_64] : memref<4x24x8xbf16, #tpu.memory_space<vmem>>, vector<4x24x8xbf16>
    %cst_65 = arith.constant dense<0.000000e+00> : vector<4x24x24xf32>
    %124 = tpu.matmul %122, %123, %cst_65 {dimension_numbers = #tpu.dot_dimension_numbers<[2], [2], [1], [1], [0, 0, 0, 1, 1, 1], [0], [0]>} : vector<4x24x8xbf16>, vector<4x24x8xbf16>, vector<4x24x24xf32> -> vector<4x24x24xf32>
    %125 = vector.broadcast %36 : vector<1x24x24xf32> to vector<4x24x24xf32>
    %126 = arith.addf %124, %125 : vector<4x24x24xf32>
    %cst_66 = arith.constant dense<0xFF800000> : vector<4x24xf32>
    %127 = vector.multi_reduction <maximumf>, %126, %cst_66 [2] : vector<4x24x24xf32> to vector<4x24xf32>
    %128 = vector.shape_cast %127 : vector<4x24xf32> to vector<4x24x1xf32>
    %129 = vector.broadcast %128 : vector<4x24x1xf32> to vector<4x24x24xf32>
    %130 = arith.subf %126, %129 : vector<4x24x24xf32>
    %131 = math.exp %130 : vector<4x24x24xf32>
    %cst_67 = arith.constant dense<0.000000e+00> : vector<4x24xf32>
    %132 = vector.multi_reduction <add>, %131, %cst_67 [2] : vector<4x24x24xf32> to vector<4x24xf32>
    %133 = vector.shape_cast %132 : vector<4x24xf32> to vector<4x24x1xf32>
    %134 = tpu.reciprocal %133 {approx = true} : vector<4x24x1xf32> -> vector<4x24x1xf32>
    %135 = vector.broadcast %134 : vector<4x24x1xf32> to vector<4x24x24xf32>
    %136 = arith.mulf %131, %135 : vector<4x24x24xf32>
    %137 = arith.truncf %136 : vector<4x24x24xf32> to vector<4x24x24xbf16>
    %c0_68 = arith.constant 0 : index
    %c0_69 = arith.constant 0 : index
    %c0_70 = arith.constant 0 : index
    %138 = vector.load %arg14[%c0_68, %c0_69, %c0_70] : memref<4x24x8xbf16, #tpu.memory_space<vmem>>, vector<4x24x8xbf16>
    %cst_71 = arith.constant dense<0.000000e+00> : vector<4x24x8xf32>
    %139 = tpu.matmul %137, %138, %cst_71 {dimension_numbers = #tpu.dot_dimension_numbers<[2], [1], [1], [2], [0, 0, 0, 1, 1, 2], [0], [0]>} : vector<4x24x24xbf16>, vector<4x24x8xbf16>, vector<4x24x8xf32> -> vector<4x24x8xf32>
    %140 = vector.extract_strided_slice %139 {offsets = [0, 0, 0], sizes = [1, 24, 8], strides = [1, 1, 1]} : vector<4x24x8xf32> to vector<1x24x8xf32>
    %141 = vector.shape_cast %140 : vector<1x24x8xf32> to vector<24x8xf32>
    %142 = arith.truncf %141 : vector<24x8xf32> to vector<24x8xbf16>
    %c0_72 = arith.constant 0 : index
    %c0_73 = arith.constant 0 : index
    %143 = vector.load %arg15[%c0_72, %c0_73] : memref<24x32xbf16, #tpu.memory_space<vmem>>, vector<24x8xbf16>
    tpu.vector_store %arg15[%c0_72, %c0_73], %142 {strides = array<i32>} : memref<24x32xbf16, #tpu.memory_space<vmem>>, vector<24x8xbf16>,
    %144 = vector.extract_strided_slice %139 {offsets = [1, 0, 0], sizes = [1, 24, 8], strides = [1, 1, 1]} : vector<4x24x8xf32> to vector<1x24x8xf32>
    %145 = vector.shape_cast %144 : vector<1x24x8xf32> to vector<24x8xf32>
    %146 = arith.truncf %145 : vector<24x8xf32> to vector<24x8xbf16>
    %c0_74 = arith.constant 0 : index
    %c8 = arith.constant 8 : index
    %147 = vector.load %arg15[%c0_74, %c8] : memref<24x32xbf16, #tpu.memory_space<vmem>>, vector<24x8xbf16>
    tpu.vector_store %arg15[%c0_74, %c8], %146 {strides = array<i32>} : memref<24x32xbf16, #tpu.memory_space<vmem>>, vector<24x8xbf16>,
    %148 = vector.extract_strided_slice %139 {offsets = [2, 0, 0], sizes = [1, 24, 8], strides = [1, 1, 1]} : vector<4x24x8xf32> to vector<1x24x8xf32>
    %149 = vector.shape_cast %148 : vector<1x24x8xf32> to vector<24x8xf32>
    %150 = arith.truncf %149 : vector<24x8xf32> to vector<24x8xbf16>
    %c0_75 = arith.constant 0 : index
    %c16 = arith.constant 16 : index
    %151 = vector.load %arg15[%c0_75, %c16] : memref<24x32xbf16, #tpu.memory_space<vmem>>, vector<24x8xbf16>
    tpu.vector_store %arg15[%c0_75, %c16], %150 {strides = array<i32>} : memref<24x32xbf16, #tpu.memory_space<vmem>>, vector<24x8xbf16>,
    %152 = vector.extract_strided_slice %139 {offsets = [3, 0, 0], sizes = [1, 24, 8], strides = [1, 1, 1]} : vector<4x24x8xf32> to vector<1x24x8xf32>
    %153 = vector.shape_cast %152 : vector<1x24x8xf32> to vector<24x8xf32>
    %154 = arith.truncf %153 : vector<24x8xf32> to vector<24x8xbf16>
    %c0_76 = arith.constant 0 : index
    %c24 = arith.constant 24 : index
    %155 = vector.load %arg15[%c0_76, %c24] : memref<24x32xbf16, #tpu.memory_space<vmem>>, vector<24x8xbf16>
    tpu.vector_store %arg15[%c0_76, %c24], %154 {strides = array<i32>} : memref<24x32xbf16, #tpu.memory_space<vmem>>, vector<24x8xbf16>,
    %c0_77 = arith.constant 0 : index
    %c0_78 = arith.constant 0 : index
    %156 = vector.load %arg15[%c0_77, %c0_78] : memref<24x32xbf16, #tpu.memory_space<vmem>>, vector<24x32xbf16>
    %c0_79 = arith.constant 0 : index
    %c0_80 = arith.constant 0 : index
    %c0_81 = arith.constant 0 : index
    %157 = vector.load %arg7[%c0_79, %c0_80, %c0_81] : memref<2x32x32xbf16, #tpu.memory_space<vmem>>, vector<1x32x32xbf16>
    %158 = vector.shape_cast %157 : vector<1x32x32xbf16> to vector<32x32xbf16>
    %cst_82 = arith.constant dense<0.000000e+00> : vector<24x32xf32>
    %159 = tpu.matmul %156, %158, %cst_82 {dimension_numbers = #tpu.dot_dimension_numbers<[1], [0], [0], [1], [0, 0, 1, 1], [], []>} : vector<24x32xbf16>, vector<32x32xbf16>, vector<24x32xf32> -> vector<24x32xf32>
    %160 = arith.addf %30, %159 : vector<24x32xf32>
    %161 = vector.broadcast %44 : vector<1x32xf32> to vector<24x32xf32>
    %162 = arith.addf %160, %161 : vector<24x32xf32>
    %cst_83 = arith.constant dense<0.000000e+00> : vector<24xf32>
    %163 = vector.multi_reduction <add>, %162, %cst_83 [1] : vector<24x32xf32> to vector<24xf32>
    %164 = vector.shape_cast %163 : vector<24xf32> to vector<24x1xf32>
    %cst_84 = arith.constant 3.200000e+01 : f32
    %165 = vector.broadcast %cst_84 : f32 to vector<24x1xf32>
    %166 = arith.divf %164, %165 : vector<24x1xf32>
    %167 = vector.broadcast %166 : vector<24x1xf32> to vector<24x32xf32>
    %168 = arith.subf %162, %167 : vector<24x32xf32>
    %169 = arith.mulf %168, %168 : vector<24x32xf32>
    %cst_85 = arith.constant dense<0.000000e+00> : vector<24xf32>
    %170 = vector.multi_reduction <add>, %169, %cst_85 [1] : vector<24x32xf32> to vector<24xf32>
    %171 = vector.shape_cast %170 : vector<24xf32> to vector<24x1xf32>
    %cst_86 = arith.constant 3.200000e+01 : f32
    %172 = vector.broadcast %cst_86 : f32 to vector<24x1xf32>
    %173 = arith.divf %171, %172 : vector<24x1xf32>
    %cst_87 = arith.constant 9.99999974E-6 : f32
    %174 = vector.broadcast %cst_87 : f32 to vector<24x1xf32>
    %175 = arith.addf %173, %174 : vector<24x1xf32>
    %176 = math.rsqrt %175 : vector<24x1xf32>
    %177 = vector.broadcast %176 : vector<24x1xf32> to vector<24x32xf32>
    %178 = arith.mulf %168, %177 : vector<24x32xf32>
    %179 = vector.broadcast %41 : vector<1x32xf32> to vector<24x32xf32>
    %180 = arith.mulf %178, %179 : vector<24x32xf32>
    %181 = vector.broadcast %42 : vector<1x32xf32> to vector<24x32xf32>
    %182 = arith.addf %180, %181 : vector<24x32xf32>
    %183 = arith.truncf %182 : vector<24x32xf32> to vector<24x32xbf16>
    %c0_88 = arith.constant 0 : index
    %c0_89 = arith.constant 0 : index
    %c0_90 = arith.constant 0 : index
    %184 = vector.load %arg8[%c0_88, %c0_89, %c0_90] : memref<2x32x128xbf16, #tpu.memory_space<vmem>>, vector<1x32x128xbf16>
    %185 = vector.shape_cast %184 : vector<1x32x128xbf16> to vector<32x128xbf16>
    %cst_91 = arith.constant dense<0.000000e+00> : vector<24x128xf32>
    %186 = tpu.matmul %183, %185, %cst_91 {dimension_numbers = #tpu.dot_dimension_numbers<[1], [0], [0], [1], [0, 0, 1, 1], [], []>} : vector<24x32xbf16>, vector<32x128xbf16>, vector<24x128xf32> -> vector<24x128xf32>
    %187 = vector.broadcast %45 : vector<1x128xf32> to vector<24x128xf32>
    %188 = arith.addf %186, %187 : vector<24x128xf32>
    %cst_92 = arith.constant -1.702000e+00 : f32
    %189 = vector.broadcast %cst_92 : f32 to vector<24x128xf32>
    %190 = arith.mulf %189, %188 : vector<24x128xf32>
    %191 = math.exp %190 : vector<24x128xf32>
    %cst_93 = arith.constant 1.000000e+00 : f32
    %192 = vector.broadcast %cst_93 : f32 to vector<24x128xf32>
    %193 = arith.addf %192, %191 : vector<24x128xf32>
    %194 = tpu.reciprocal %193 {approx = true} : vector<24x128xf32> -> vector<24x128xf32>
    %195 = arith.mulf %188, %194 : vector<24x128xf32>
    %196 = arith.truncf %195 : vector<24x128xf32> to vector<24x128xbf16>
    %c0_94 = arith.constant 0 : index
    %c0_95 = arith.constant 0 : index
    %c0_96 = arith.constant 0 : index
    %197 = vector.load %arg9[%c0_94, %c0_95, %c0_96] : memref<2x128x32xbf16, #tpu.memory_space<vmem>>, vector<1x128x32xbf16>
    %198 = vector.shape_cast %197 : vector<1x128x32xbf16> to vector<128x32xbf16>
    %cst_97 = arith.constant dense<0.000000e+00> : vector<24x32xf32>
    %199 = tpu.matmul %196, %198, %cst_97 {dimension_numbers = #tpu.dot_dimension_numbers<[1], [0], [0], [1], [0, 0, 1, 1], [], []>} : vector<24x128xbf16>, vector<128x32xbf16>, vector<24x32xf32> -> vector<24x32xf32>
    %200 = vector.broadcast %46 : vector<1x32xf32> to vector<24x32xf32>
    %201 = arith.addf %199, %200 : vector<24x32xf32>
    %202 = arith.addf %162, %201 : vector<24x32xf32>
    %c1_98 = arith.constant 1 : index
    %c0_99 = arith.constant 0 : index
    %c0_100 = arith.constant 0 : index
    %203 = vector.load %arg4[%c1_98, %c0_99, %c0_100] : memref<2x8x128xf32, #tpu.memory_space<vmem>>, vector<1x8x128xf32>
    %204 = vector.shape_cast %203 : vector<1x8x128xf32> to vector<8x128xf32>
    %205 = vector.extract_strided_slice %204 {offsets = [0, 0], sizes = [1, 32], strides = [1, 1]} : vector<8x128xf32> to vector<1x32xf32>
    %206 = vector.extract_strided_slice %204 {offsets = [1, 0], sizes = [1, 32], strides = [1, 1]} : vector<8x128xf32> to vector<1x32xf32>
    %207 = vector.extract_strided_slice %204 {offsets = [2, 0], sizes = [1, 32], strides = [1, 1]} : vector<8x128xf32> to vector<1x32xf32>
    %208 = vector.extract_strided_slice %204 {offsets = [3, 0], sizes = [1, 32], strides = [1, 1]} : vector<8x128xf32> to vector<1x32xf32>
    %209 = vector.extract_strided_slice %204 {offsets = [4, 0], sizes = [1, 96], strides = [1, 1]} : vector<8x128xf32> to vector<1x96xf32>
    %210 = vector.extract_strided_slice %204 {offsets = [5, 0], sizes = [1, 32], strides = [1, 1]} : vector<8x128xf32> to vector<1x32xf32>
    %211 = vector.extract_strided_slice %204 {offsets = [6, 0], sizes = [1, 128], strides = [1, 1]} : vector<8x128xf32> to vector<1x128xf32>
    %212 = vector.extract_strided_slice %204 {offsets = [7, 0], sizes = [1, 32], strides = [1, 1]} : vector<8x128xf32> to vector<1x32xf32>
    %cst_101 = arith.constant dense<0.000000e+00> : vector<24xf32>
    %213 = vector.multi_reduction <add>, %202, %cst_101 [1] : vector<24x32xf32> to vector<24xf32>
    %214 = vector.shape_cast %213 : vector<24xf32> to vector<24x1xf32>
    %cst_102 = arith.constant 3.200000e+01 : f32
    %215 = vector.broadcast %cst_102 : f32 to vector<24x1xf32>
    %216 = arith.divf %214, %215 : vector<24x1xf32>
    %217 = vector.broadcast %216 : vector<24x1xf32> to vector<24x32xf32>
    %218 = arith.subf %202, %217 : vector<24x32xf32>
    %219 = arith.mulf %218, %218 : vector<24x32xf32>
    %cst_103 = arith.constant dense<0.000000e+00> : vector<24xf32>
    %220 = vector.multi_reduction <add>, %219, %cst_103 [1] : vector<24x32xf32> to vector<24xf32>
    %221 = vector.shape_cast %220 : vector<24xf32> to vector<24x1xf32>
    %cst_104 = arith.constant 3.200000e+01 : f32
    %222 = vector.broadcast %cst_104 : f32 to vector<24x1xf32>
    %223 = arith.divf %221, %222 : vector<24x1xf32>
    %cst_105 = arith.constant 9.99999974E-6 : f32
    %224 = vector.broadcast %cst_105 : f32 to vector<24x1xf32>
    %225 = arith.addf %223, %224 : vector<24x1xf32>
    %226 = math.rsqrt %225 : vector<24x1xf32>
    %227 = vector.broadcast %226 : vector<24x1xf32> to vector<24x32xf32>
    %228 = arith.mulf %218, %227 : vector<24x32xf32>
    %229 = vector.broadcast %205 : vector<1x32xf32> to vector<24x32xf32>
    %230 = arith.mulf %228, %229 : vector<24x32xf32>
    %231 = vector.broadcast %206 : vector<1x32xf32> to vector<24x32xf32>
    %232 = arith.addf %230, %231 : vector<24x32xf32>
    %233 = arith.truncf %232 : vector<24x32xf32> to vector<24x32xbf16>
    %c1_106 = arith.constant 1 : index
    %c0_107 = arith.constant 0 : index
    %c0_108 = arith.constant 0 : index
    %234 = vector.load %arg6[%c1_106, %c0_107, %c0_108] : memref<2x32x96xbf16, #tpu.memory_space<vmem>>, vector<1x32x96xbf16>
    %235 = vector.shape_cast %234 : vector<1x32x96xbf16> to vector<32x96xbf16>
    %cst_109 = arith.constant dense<0.000000e+00> : vector<24x96xf32>
    %236 = tpu.matmul %233, %235, %cst_109 {dimension_numbers = #tpu.dot_dimension_numbers<[1], [0], [0], [1], [0, 0, 1, 1], [], []>} : vector<24x32xbf16>, vector<32x96xbf16>, vector<24x96xf32> -> vector<24x96xf32>
    %237 = vector.broadcast %209 : vector<1x96xf32> to vector<24x96xf32>
    %238 = arith.addf %236, %237 : vector<24x96xf32>
    %239 = arith.truncf %238 : vector<24x96xf32> to vector<24x96xbf16>
    %240 = vector.extract_strided_slice %239 {offsets = [0, 0], sizes = [24, 8], strides = [1, 1]} : vector<24x96xbf16> to vector<24x8xbf16>
    %c0_110 = arith.constant 0 : index
    %c0_111 = arith.constant 0 : index
    %c0_112 = arith.constant 0 : index
    %241 = vector.load %arg12[%c0_110, %c0_111, %c0_112] : memref<4x24x8xbf16, #tpu.memory_space<vmem>>, vector<1x24x8xbf16>
    %242 = vector.shape_cast %241 : vector<1x24x8xbf16> to vector<24x8xbf16>
    %243 = vector.shape_cast %240 : vector<24x8xbf16> to vector<1x24x8xbf16>
    tpu.vector_store %arg12[%c0_110, %c0_111, %c0_112], %243 {strides = array<i32>} : memref<4x24x8xbf16, #tpu.memory_space<vmem>>, vector<1x24x8xbf16>,
    %244 = vector.extract_strided_slice %239 {offsets = [0, 32], sizes = [24, 8], strides = [1, 1]} : vector<24x96xbf16> to vector<24x8xbf16>
    %c0_113 = arith.constant 0 : index
    %c0_114 = arith.constant 0 : index
    %c0_115 = arith.constant 0 : index
    %245 = vector.load %arg13[%c0_113, %c0_114, %c0_115] : memref<4x24x8xbf16, #tpu.memory_space<vmem>>, vector<1x24x8xbf16>
    %246 = vector.shape_cast %245 : vector<1x24x8xbf16> to vector<24x8xbf16>
    %247 = vector.shape_cast %244 : vector<24x8xbf16> to vector<1x24x8xbf16>
    tpu.vector_store %arg13[%c0_113, %c0_114, %c0_115], %247 {strides = array<i32>} : memref<4x24x8xbf16, #tpu.memory_space<vmem>>, vector<1x24x8xbf16>,
    %248 = vector.extract_strided_slice %239 {offsets = [0, 64], sizes = [24, 8], strides = [1, 1]} : vector<24x96xbf16> to vector<24x8xbf16>
    %c0_116 = arith.constant 0 : index
    %c0_117 = arith.constant 0 : index
    %c0_118 = arith.constant 0 : index
    %249 = vector.load %arg14[%c0_116, %c0_117, %c0_118] : memref<4x24x8xbf16, #tpu.memory_space<vmem>>, vector<1x24x8xbf16>
    %250 = vector.shape_cast %249 : vector<1x24x8xbf16> to vector<24x8xbf16>
    %251 = vector.shape_cast %248 : vector<24x8xbf16> to vector<1x24x8xbf16>
    tpu.vector_store %arg14[%c0_116, %c0_117, %c0_118], %251 {strides = array<i32>} : memref<4x24x8xbf16, #tpu.memory_space<vmem>>, vector<1x24x8xbf16>,
    %252 = vector.extract_strided_slice %239 {offsets = [0, 8], sizes = [24, 8], strides = [1, 1]} : vector<24x96xbf16> to vector<24x8xbf16>
    %c1_119 = arith.constant 1 : index
    %c0_120 = arith.constant 0 : index
    %c0_121 = arith.constant 0 : index
    %253 = vector.load %arg12[%c1_119, %c0_120, %c0_121] : memref<4x24x8xbf16, #tpu.memory_space<vmem>>, vector<1x24x8xbf16>
    %254 = vector.shape_cast %253 : vector<1x24x8xbf16> to vector<24x8xbf16>
    %255 = vector.shape_cast %252 : vector<24x8xbf16> to vector<1x24x8xbf16>
    tpu.vector_store %arg12[%c1_119, %c0_120, %c0_121], %255 {strides = array<i32>} : memref<4x24x8xbf16, #tpu.memory_space<vmem>>, vector<1x24x8xbf16>,
    %256 = vector.extract_strided_slice %239 {offsets = [0, 40], sizes = [24, 8], strides = [1, 1]} : vector<24x96xbf16> to vector<24x8xbf16>
    %c1_122 = arith.constant 1 : index
    %c0_123 = arith.constant 0 : index
    %c0_124 = arith.constant 0 : index
    %257 = vector.load %arg13[%c1_122, %c0_123, %c0_124] : memref<4x24x8xbf16, #tpu.memory_space<vmem>>, vector<1x24x8xbf16>
    %258 = vector.shape_cast %257 : vector<1x24x8xbf16> to vector<24x8xbf16>
    %259 = vector.shape_cast %256 : vector<24x8xbf16> to vector<1x24x8xbf16>
    tpu.vector_store %arg13[%c1_122, %c0_123, %c0_124], %259 {strides = array<i32>} : memref<4x24x8xbf16, #tpu.memory_space<vmem>>, vector<1x24x8xbf16>,
    %260 = vector.extract_strided_slice %239 {offsets = [0, 72], sizes = [24, 8], strides = [1, 1]} : vector<24x96xbf16> to vector<24x8xbf16>
    %c1_125 = arith.constant 1 : index
    %c0_126 = arith.constant 0 : index
    %c0_127 = arith.constant 0 : index
    %261 = vector.load %arg14[%c1_125, %c0_126, %c0_127] : memref<4x24x8xbf16, #tpu.memory_space<vmem>>, vector<1x24x8xbf16>
    %262 = vector.shape_cast %261 : vector<1x24x8xbf16> to vector<24x8xbf16>
    %263 = vector.shape_cast %260 : vector<24x8xbf16> to vector<1x24x8xbf16>
    tpu.vector_store %arg14[%c1_125, %c0_126, %c0_127], %263 {strides = array<i32>} : memref<4x24x8xbf16, #tpu.memory_space<vmem>>, vector<1x24x8xbf16>,
    %264 = vector.extract_strided_slice %239 {offsets = [0, 16], sizes = [24, 8], strides = [1, 1]} : vector<24x96xbf16> to vector<24x8xbf16>
    %c2_128 = arith.constant 2 : index
    %c0_129 = arith.constant 0 : index
    %c0_130 = arith.constant 0 : index
    %265 = vector.load %arg12[%c2_128, %c0_129, %c0_130] : memref<4x24x8xbf16, #tpu.memory_space<vmem>>, vector<1x24x8xbf16>
    %266 = vector.shape_cast %265 : vector<1x24x8xbf16> to vector<24x8xbf16>
    %267 = vector.shape_cast %264 : vector<24x8xbf16> to vector<1x24x8xbf16>
    tpu.vector_store %arg12[%c2_128, %c0_129, %c0_130], %267 {strides = array<i32>} : memref<4x24x8xbf16, #tpu.memory_space<vmem>>, vector<1x24x8xbf16>,
    %268 = vector.extract_strided_slice %239 {offsets = [0, 48], sizes = [24, 8], strides = [1, 1]} : vector<24x96xbf16> to vector<24x8xbf16>
    %c2_131 = arith.constant 2 : index
    %c0_132 = arith.constant 0 : index
    %c0_133 = arith.constant 0 : index
    %269 = vector.load %arg13[%c2_131, %c0_132, %c0_133] : memref<4x24x8xbf16, #tpu.memory_space<vmem>>, vector<1x24x8xbf16>
    %270 = vector.shape_cast %269 : vector<1x24x8xbf16> to vector<24x8xbf16>
    %271 = vector.shape_cast %268 : vector<24x8xbf16> to vector<1x24x8xbf16>
    tpu.vector_store %arg13[%c2_131, %c0_132, %c0_133], %271 {strides = array<i32>} : memref<4x24x8xbf16, #tpu.memory_space<vmem>>, vector<1x24x8xbf16>,
    %272 = vector.extract_strided_slice %239 {offsets = [0, 80], sizes = [24, 8], strides = [1, 1]} : vector<24x96xbf16> to vector<24x8xbf16>
    %c2_134 = arith.constant 2 : index
    %c0_135 = arith.constant 0 : index
    %c0_136 = arith.constant 0 : index
    %273 = vector.load %arg14[%c2_134, %c0_135, %c0_136] : memref<4x24x8xbf16, #tpu.memory_space<vmem>>, vector<1x24x8xbf16>
    %274 = vector.shape_cast %273 : vector<1x24x8xbf16> to vector<24x8xbf16>
    %275 = vector.shape_cast %272 : vector<24x8xbf16> to vector<1x24x8xbf16>
    tpu.vector_store %arg14[%c2_134, %c0_135, %c0_136], %275 {strides = array<i32>} : memref<4x24x8xbf16, #tpu.memory_space<vmem>>, vector<1x24x8xbf16>,
    %276 = vector.extract_strided_slice %239 {offsets = [0, 24], sizes = [24, 8], strides = [1, 1]} : vector<24x96xbf16> to vector<24x8xbf16>
    %c3_137 = arith.constant 3 : index
    %c0_138 = arith.constant 0 : index
    %c0_139 = arith.constant 0 : index
    %277 = vector.load %arg12[%c3_137, %c0_138, %c0_139] : memref<4x24x8xbf16, #tpu.memory_space<vmem>>, vector<1x24x8xbf16>
    %278 = vector.shape_cast %277 : vector<1x24x8xbf16> to vector<24x8xbf16>
    %279 = vector.shape_cast %276 : vector<24x8xbf16> to vector<1x24x8xbf16>
    tpu.vector_store %arg12[%c3_137, %c0_138, %c0_139], %279 {strides = array<i32>} : memref<4x24x8xbf16, #tpu.memory_space<vmem>>, vector<1x24x8xbf16>,
    %280 = vector.extract_strided_slice %239 {offsets = [0, 56], sizes = [24, 8], strides = [1, 1]} : vector<24x96xbf16> to vector<24x8xbf16>
    %c3_140 = arith.constant 3 : index
    %c0_141 = arith.constant 0 : index
    %c0_142 = arith.constant 0 : index
    %281 = vector.load %arg13[%c3_140, %c0_141, %c0_142] : memref<4x24x8xbf16, #tpu.memory_space<vmem>>, vector<1x24x8xbf16>
    %282 = vector.shape_cast %281 : vector<1x24x8xbf16> to vector<24x8xbf16>
    %283 = vector.shape_cast %280 : vector<24x8xbf16> to vector<1x24x8xbf16>
    tpu.vector_store %arg13[%c3_140, %c0_141, %c0_142], %283 {strides = array<i32>} : memref<4x24x8xbf16, #tpu.memory_space<vmem>>, vector<1x24x8xbf16>,
    %284 = vector.extract_strided_slice %239 {offsets = [0, 88], sizes = [24, 8], strides = [1, 1]} : vector<24x96xbf16> to vector<24x8xbf16>
    %c3_143 = arith.constant 3 : index
    %c0_144 = arith.constant 0 : index
    %c0_145 = arith.constant 0 : index
    %285 = vector.load %arg14[%c3_143, %c0_144, %c0_145] : memref<4x24x8xbf16, #tpu.memory_space<vmem>>, vector<1x24x8xbf16>
    %286 = vector.shape_cast %285 : vector<1x24x8xbf16> to vector<24x8xbf16>
    %287 = vector.shape_cast %284 : vector<24x8xbf16> to vector<1x24x8xbf16>
    tpu.vector_store %arg14[%c3_143, %c0_144, %c0_145], %287 {strides = array<i32>} : memref<4x24x8xbf16, #tpu.memory_space<vmem>>, vector<1x24x8xbf16>,
    %c0_146 = arith.constant 0 : index
    %c0_147 = arith.constant 0 : index
    %c0_148 = arith.constant 0 : index
    %288 = vector.load %arg12[%c0_146, %c0_147, %c0_148] : memref<4x24x8xbf16, #tpu.memory_space<vmem>>, vector<4x24x8xbf16>
    %c0_149 = arith.constant 0 : index
    %c0_150 = arith.constant 0 : index
    %c0_151 = arith.constant 0 : index
    %289 = vector.load %arg13[%c0_149, %c0_150, %c0_151] : memref<4x24x8xbf16, #tpu.memory_space<vmem>>, vector<4x24x8xbf16>
    %cst_152 = arith.constant dense<0.000000e+00> : vector<4x24x24xf32>
    %290 = tpu.matmul %288, %289, %cst_152 {dimension_numbers = #tpu.dot_dimension_numbers<[2], [2], [1], [1], [0, 0, 0, 1, 1, 1], [0], [0]>} : vector<4x24x8xbf16>, vector<4x24x8xbf16>, vector<4x24x24xf32> -> vector<4x24x24xf32>
    %291 = vector.broadcast %36 : vector<1x24x24xf32> to vector<4x24x24xf32>
    %292 = arith.addf %290, %291 : vector<4x24x24xf32>
    %cst_153 = arith.constant dense<0xFF800000> : vector<4x24xf32>
    %293 = vector.multi_reduction <maximumf>, %292, %cst_153 [2] : vector<4x24x24xf32> to vector<4x24xf32>
    %294 = vector.shape_cast %293 : vector<4x24xf32> to vector<4x24x1xf32>
    %295 = vector.broadcast %294 : vector<4x24x1xf32> to vector<4x24x24xf32>
    %296 = arith.subf %292, %295 : vector<4x24x24xf32>
    %297 = math.exp %296 : vector<4x24x24xf32>
    %cst_154 = arith.constant dense<0.000000e+00> : vector<4x24xf32>
    %298 = vector.multi_reduction <add>, %297, %cst_154 [2] : vector<4x24x24xf32> to vector<4x24xf32>
    %299 = vector.shape_cast %298 : vector<4x24xf32> to vector<4x24x1xf32>
    %300 = tpu.reciprocal %299 {approx = true} : vector<4x24x1xf32> -> vector<4x24x1xf32>
    %301 = vector.broadcast %300 : vector<4x24x1xf32> to vector<4x24x24xf32>
    %302 = arith.mulf %297, %301 : vector<4x24x24xf32>
    %303 = arith.truncf %302 : vector<4x24x24xf32> to vector<4x24x24xbf16>
    %c0_155 = arith.constant 0 : index
    %c0_156 = arith.constant 0 : index
    %c0_157 = arith.constant 0 : index
    %304 = vector.load %arg14[%c0_155, %c0_156, %c0_157] : memref<4x24x8xbf16, #tpu.memory_space<vmem>>, vector<4x24x8xbf16>
    %cst_158 = arith.constant dense<0.000000e+00> : vector<4x24x8xf32>
    %305 = tpu.matmul %303, %304, %cst_158 {dimension_numbers = #tpu.dot_dimension_numbers<[2], [1], [1], [2], [0, 0, 0, 1, 1, 2], [0], [0]>} : vector<4x24x24xbf16>, vector<4x24x8xbf16>, vector<4x24x8xf32> -> vector<4x24x8xf32>
    %306 = vector.extract_strided_slice %305 {offsets = [0, 0, 0], sizes = [1, 24, 8], strides = [1, 1, 1]} : vector<4x24x8xf32> to vector<1x24x8xf32>
    %307 = vector.shape_cast %306 : vector<1x24x8xf32> to vector<24x8xf32>
    %308 = arith.truncf %307 : vector<24x8xf32> to vector<24x8xbf16>
    %c0_159 = arith.constant 0 : index
    %c0_160 = arith.constant 0 : index
    %309 = vector.load %arg15[%c0_159, %c0_160] : memref<24x32xbf16, #tpu.memory_space<vmem>>, vector<24x8xbf16>
    tpu.vector_store %arg15[%c0_159, %c0_160], %308 {strides = array<i32>} : memref<24x32xbf16, #tpu.memory_space<vmem>>, vector<24x8xbf16>,
    %310 = vector.extract_strided_slice %305 {offsets = [1, 0, 0], sizes = [1, 24, 8], strides = [1, 1, 1]} : vector<4x24x8xf32> to vector<1x24x8xf32>
    %311 = vector.shape_cast %310 : vector<1x24x8xf32> to vector<24x8xf32>
    %312 = arith.truncf %311 : vector<24x8xf32> to vector<24x8xbf16>
    %c0_161 = arith.constant 0 : index
    %c8_162 = arith.constant 8 : index
    %313 = vector.load %arg15[%c0_161, %c8_162] : memref<24x32xbf16, #tpu.memory_space<vmem>>, vector<24x8xbf16>
    tpu.vector_store %arg15[%c0_161, %c8_162], %312 {strides = array<i32>} : memref<24x32xbf16, #tpu.memory_space<vmem>>, vector<24x8xbf16>,
    %314 = vector.extract_strided_slice %305 {offsets = [2, 0, 0], sizes = [1, 24, 8], strides = [1, 1, 1]} : vector<4x24x8xf32> to vector<1x24x8xf32>
    %315 = vector.shape_cast %314 : vector<1x24x8xf32> to vector<24x8xf32>
    %316 = arith.truncf %315 : vector<24x8xf32> to vector<24x8xbf16>
    %c0_163 = arith.constant 0 : index
    %c16_164 = arith.constant 16 : index
    %317 = vector.load %arg15[%c0_163, %c16_164] : memref<24x32xbf16, #tpu.memory_space<vmem>>, vector<24x8xbf16>
    tpu.vector_store %arg15[%c0_163, %c16_164], %316 {strides = array<i32>} : memref<24x32xbf16, #tpu.memory_space<vmem>>, vector<24x8xbf16>,
    %318 = vector.extract_strided_slice %305 {offsets = [3, 0, 0], sizes = [1, 24, 8], strides = [1, 1, 1]} : vector<4x24x8xf32> to vector<1x24x8xf32>
    %319 = vector.shape_cast %318 : vector<1x24x8xf32> to vector<24x8xf32>
    %320 = arith.truncf %319 : vector<24x8xf32> to vector<24x8xbf16>
    %c0_165 = arith.constant 0 : index
    %c24_166 = arith.constant 24 : index
    %321 = vector.load %arg15[%c0_165, %c24_166] : memref<24x32xbf16, #tpu.memory_space<vmem>>, vector<24x8xbf16>
    tpu.vector_store %arg15[%c0_165, %c24_166], %320 {strides = array<i32>} : memref<24x32xbf16, #tpu.memory_space<vmem>>, vector<24x8xbf16>,
    %c0_167 = arith.constant 0 : index
    %c0_168 = arith.constant 0 : index
    %322 = vector.load %arg15[%c0_167, %c0_168] : memref<24x32xbf16, #tpu.memory_space<vmem>>, vector<24x32xbf16>
    %c1_169 = arith.constant 1 : index
    %c0_170 = arith.constant 0 : index
    %c0_171 = arith.constant 0 : index
    %323 = vector.load %arg7[%c1_169, %c0_170, %c0_171] : memref<2x32x32xbf16, #tpu.memory_space<vmem>>, vector<1x32x32xbf16>
    %324 = vector.shape_cast %323 : vector<1x32x32xbf16> to vector<32x32xbf16>
    %cst_172 = arith.constant dense<0.000000e+00> : vector<24x32xf32>
    %325 = tpu.matmul %322, %324, %cst_172 {dimension_numbers = #tpu.dot_dimension_numbers<[1], [0], [0], [1], [0, 0, 1, 1], [], []>} : vector<24x32xbf16>, vector<32x32xbf16>, vector<24x32xf32> -> vector<24x32xf32>
    %326 = arith.addf %202, %325 : vector<24x32xf32>
    %327 = vector.broadcast %210 : vector<1x32xf32> to vector<24x32xf32>
    %328 = arith.addf %326, %327 : vector<24x32xf32>
    %cst_173 = arith.constant dense<0.000000e+00> : vector<24xf32>
    %329 = vector.multi_reduction <add>, %328, %cst_173 [1] : vector<24x32xf32> to vector<24xf32>
    %330 = vector.shape_cast %329 : vector<24xf32> to vector<24x1xf32>
    %cst_174 = arith.constant 3.200000e+01 : f32
    %331 = vector.broadcast %cst_174 : f32 to vector<24x1xf32>
    %332 = arith.divf %330, %331 : vector<24x1xf32>
    %333 = vector.broadcast %332 : vector<24x1xf32> to vector<24x32xf32>
    %334 = arith.subf %328, %333 : vector<24x32xf32>
    %335 = arith.mulf %334, %334 : vector<24x32xf32>
    %cst_175 = arith.constant dense<0.000000e+00> : vector<24xf32>
    %336 = vector.multi_reduction <add>, %335, %cst_175 [1] : vector<24x32xf32> to vector<24xf32>
    %337 = vector.shape_cast %336 : vector<24xf32> to vector<24x1xf32>
    %cst_176 = arith.constant 3.200000e+01 : f32
    %338 = vector.broadcast %cst_176 : f32 to vector<24x1xf32>
    %339 = arith.divf %337, %338 : vector<24x1xf32>
    %cst_177 = arith.constant 9.99999974E-6 : f32
    %340 = vector.broadcast %cst_177 : f32 to vector<24x1xf32>
    %341 = arith.addf %339, %340 : vector<24x1xf32>
    %342 = math.rsqrt %341 : vector<24x1xf32>
    %343 = vector.broadcast %342 : vector<24x1xf32> to vector<24x32xf32>
    %344 = arith.mulf %334, %343 : vector<24x32xf32>
    %345 = vector.broadcast %207 : vector<1x32xf32> to vector<24x32xf32>
    %346 = arith.mulf %344, %345 : vector<24x32xf32>
    %347 = vector.broadcast %208 : vector<1x32xf32> to vector<24x32xf32>
    %348 = arith.addf %346, %347 : vector<24x32xf32>
    %349 = arith.truncf %348 : vector<24x32xf32> to vector<24x32xbf16>
    %c1_178 = arith.constant 1 : index
    %c0_179 = arith.constant 0 : index
    %c0_180 = arith.constant 0 : index
    %350 = vector.load %arg8[%c1_178, %c0_179, %c0_180] : memref<2x32x128xbf16, #tpu.memory_space<vmem>>, vector<1x32x128xbf16>
    %351 = vector.shape_cast %350 : vector<1x32x128xbf16> to vector<32x128xbf16>
    %cst_181 = arith.constant dense<0.000000e+00> : vector<24x128xf32>
    %352 = tpu.matmul %349, %351, %cst_181 {dimension_numbers = #tpu.dot_dimension_numbers<[1], [0], [0], [1], [0, 0, 1, 1], [], []>} : vector<24x32xbf16>, vector<32x128xbf16>, vector<24x128xf32> -> vector<24x128xf32>
    %353 = vector.broadcast %211 : vector<1x128xf32> to vector<24x128xf32>
    %354 = arith.addf %352, %353 : vector<24x128xf32>
    %cst_182 = arith.constant -1.702000e+00 : f32
    %355 = vector.broadcast %cst_182 : f32 to vector<24x128xf32>
    %356 = arith.mulf %355, %354 : vector<24x128xf32>
    %357 = math.exp %356 : vector<24x128xf32>
    %cst_183 = arith.constant 1.000000e+00 : f32
    %358 = vector.broadcast %cst_183 : f32 to vector<24x128xf32>
    %359 = arith.addf %358, %357 : vector<24x128xf32>
    %360 = tpu.reciprocal %359 {approx = true} : vector<24x128xf32> -> vector<24x128xf32>
    %361 = arith.mulf %354, %360 : vector<24x128xf32>
    %362 = arith.truncf %361 : vector<24x128xf32> to vector<24x128xbf16>
    %c1_184 = arith.constant 1 : index
    %c0_185 = arith.constant 0 : index
    %c0_186 = arith.constant 0 : index
    %363 = vector.load %arg9[%c1_184, %c0_185, %c0_186] : memref<2x128x32xbf16, #tpu.memory_space<vmem>>, vector<1x128x32xbf16>
    %364 = vector.shape_cast %363 : vector<1x128x32xbf16> to vector<128x32xbf16>
    %cst_187 = arith.constant dense<0.000000e+00> : vector<24x32xf32>
    %365 = tpu.matmul %362, %364, %cst_187 {dimension_numbers = #tpu.dot_dimension_numbers<[1], [0], [0], [1], [0, 0, 1, 1], [], []>} : vector<24x128xbf16>, vector<128x32xbf16>, vector<24x32xf32> -> vector<24x32xf32>
    %366 = vector.broadcast %212 : vector<1x32xf32> to vector<24x32xf32>
    %367 = arith.addf %365, %366 : vector<24x32xf32>
    %368 = arith.addf %328, %367 : vector<24x32xf32>
    %369 = vector.extract_strided_slice %368 {offsets = [0, 0], sizes = [1, 32], strides = [1, 1]} : vector<24x32xf32> to vector<1x32xf32>
    %cst_188 = arith.constant dense<0.000000e+00> : vector<1xf32>
    %370 = vector.multi_reduction <add>, %369, %cst_188 [1] : vector<1x32xf32> to vector<1xf32>
    %371 = vector.shape_cast %370 : vector<1xf32> to vector<1x1xf32>
    %cst_189 = arith.constant 3.200000e+01 : f32
    %372 = vector.broadcast %cst_189 : f32 to vector<1x1xf32>
    %373 = arith.divf %371, %372 : vector<1x1xf32>
    %374 = vector.broadcast %373 : vector<1x1xf32> to vector<1x32xf32>
    %375 = arith.subf %369, %374 : vector<1x32xf32>
    %376 = arith.mulf %375, %375 : vector<1x32xf32>
    %cst_190 = arith.constant dense<0.000000e+00> : vector<1xf32>
    %377 = vector.multi_reduction <add>, %376, %cst_190 [1] : vector<1x32xf32> to vector<1xf32>
    %378 = vector.shape_cast %377 : vector<1xf32> to vector<1x1xf32>
    %cst_191 = arith.constant 3.200000e+01 : f32
    %379 = vector.broadcast %cst_191 : f32 to vector<1x1xf32>
    %380 = arith.divf %378, %379 : vector<1x1xf32>
    %cst_192 = arith.constant 9.99999974E-6 : f32
    %381 = vector.broadcast %cst_192 : f32 to vector<1x1xf32>
    %382 = arith.addf %380, %381 : vector<1x1xf32>
    %383 = math.rsqrt %382 : vector<1x1xf32>
    %384 = vector.broadcast %383 : vector<1x1xf32> to vector<1x32xf32>
    %385 = arith.mulf %375, %384 : vector<1x32xf32>
    %386 = arith.mulf %385, %3 : vector<1x32xf32>
    %387 = arith.addf %386, %4 : vector<1x32xf32>
    %388 = arith.truncf %387 : vector<1x32xf32> to vector<1x32xbf16>
    %c0_193 = arith.constant 0 : index
    %c0_194 = arith.constant 0 : index
    %389 = vector.load %arg10[%c0_193, %c0_194] : memref<32x128xbf16, #tpu.memory_space<vmem>>, vector<32x128xbf16>
    %cst_195 = arith.constant dense<0.000000e+00> : vector<1x128xf32>
    %390 = tpu.matmul %388, %389, %cst_195 {dimension_numbers = #tpu.dot_dimension_numbers<[1], [0], [0], [1], [0, 0, 1, 1], [], []>} : vector<1x32xbf16>, vector<32x128xbf16>, vector<1x128xf32> -> vector<1x128xf32>
    %391 = arith.addf %390, %5 : vector<1x128xf32>
    %c0_196 = arith.constant 0 : index
    %c0_197 = arith.constant 0 : index
    %c0_198 = arith.constant 0 : index
    %392 = vector.load %arg11[%c0_196, %c0_197, %c0_198] : memref<1x1x128xf32, #tpu.memory_space<vmem>>, vector<1x1x128xf32>
    %393 = vector.shape_cast %392 : vector<1x1x128xf32> to vector<1x128xf32>
    %394 = vector.shape_cast %391 : vector<1x128xf32> to vector<1x1x128xf32>
    tpu.vector_store %arg11[%c0_196, %c0_197, %c0_198], %394 {strides = array<i32>} : memref<1x1x128xf32, #tpu.memory_space<vmem>>, vector<1x1x128xf32>,
    return
  }
  func.func @transform_0(%arg0: i32) -> (i32, i32) {
    %c0_i32 = arith.constant 0 : i32
    %c0_i32_0 = arith.constant 0 : i32
    return %arg0, %c0_i32 : i32, i32
  }
  func.func @transform_1(%arg0: i32) -> (i32, i32) {
    %c0_i32 = arith.constant 0 : i32
    %c0_i32_0 = arith.constant 0 : i32
    %c0_i32_1 = arith.constant 0 : i32
    return %c0_i32, %c0_i32_0 : i32, i32
  }
  func.func @transform_2(%arg0: i32) -> (i32, i32) {
    %c0_i32 = arith.constant 0 : i32
    %c0_i32_0 = arith.constant 0 : i32
    %c0_i32_1 = arith.constant 0 : i32
    return %c0_i32, %c0_i32_0 : i32, i32
  }
  func.func @transform_3(%arg0: i32) -> (i32, i32, i32) {
    %c0_i32 = arith.constant 0 : i32
    %c0_i32_0 = arith.constant 0 : i32
    %c0_i32_1 = arith.constant 0 : i32
    %c0_i32_2 = arith.constant 0 : i32
    return %c0_i32, %c0_i32_0, %c0_i32_1 : i32, i32, i32
  }
  func.func @transform_4(%arg0: i32) -> (i32, i32) {
    %c0_i32 = arith.constant 0 : i32
    %c0_i32_0 = arith.constant 0 : i32
    %c0_i32_1 = arith.constant 0 : i32
    return %c0_i32, %c0_i32_0 : i32, i32
  }
  func.func @transform_5(%arg0: i32) -> (i32, i32, i32) {
    %c0_i32 = arith.constant 0 : i32
    %c0_i32_0 = arith.constant 0 : i32
    %c0_i32_1 = arith.constant 0 : i32
    %c0_i32_2 = arith.constant 0 : i32
    return %c0_i32, %c0_i32_0, %c0_i32_1 : i32, i32, i32
  }
  func.func @transform_6(%arg0: i32) -> (i32, i32, i32) {
    %c0_i32 = arith.constant 0 : i32
    %c0_i32_0 = arith.constant 0 : i32
    %c0_i32_1 = arith.constant 0 : i32
    %c0_i32_2 = arith.constant 0 : i32
    return %c0_i32, %c0_i32_0, %c0_i32_1 : i32, i32, i32
  }
  func.func @transform_7(%arg0: i32) -> (i32, i32, i32) {
    %c0_i32 = arith.constant 0 : i32
    %c0_i32_0 = arith.constant 0 : i32
    %c0_i32_1 = arith.constant 0 : i32
    %c0_i32_2 = arith.constant 0 : i32
    return %c0_i32, %c0_i32_0, %c0_i32_1 : i32, i32, i32
  }
  func.func @transform_8(%arg0: i32) -> (i32, i32, i32) {
    %c0_i32 = arith.constant 0 : i32
    %c0_i32_0 = arith.constant 0 : i32
    %c0_i32_1 = arith.constant 0 : i32
    %c0_i32_2 = arith.constant 0 : i32
    return %c0_i32, %c0_i32_0, %c0_i32_1 : i32, i32, i32
  }
  func.func @transform_9(%arg0: i32) -> (i32, i32) {
    %c0_i32 = arith.constant 0 : i32
    %c0_i32_0 = arith.constant 0 : i32
    %c0_i32_1 = arith.constant 0 : i32
    return %c0_i32, %c0_i32_0 : i32, i32
  }
  func.func @transform_10(%arg0: i32) -> (i32, i32, i32) {
    %c0_i32 = arith.constant 0 : i32
    %c0_i32_0 = arith.constant 0 : i32
    %c0_i32_1 = arith.constant 0 : i32
    return %arg0, %c0_i32, %c0_i32_0 : i32, i32, i32
  }
}

</mosaic_0001>

<llo_original>
// kernel: forward.1
$region0: #{forward.1}
  #allocation0 [shape = 'u32[]', space=smem, size = 0x4, offset = 0x4, fixed_abs, tag = 'smem constant byte address 0x4 - core index']
  #allocation1 [shape = 'u32[144,128]{1,0:T(1,128)}', space=vmem, size = 0x12000, scoped, tag = 'internal scratch']
  #allocation2 [shape = 'bf16[4,24,8]{2,1,0:T(8,128)(2,1)}', space=vmem, size = 0x6000, scoped, tag = 'scratch operand']
  #allocation3 [shape = 'bf16[4,24,8]{2,1,0:T(8,128)(2,1)}', space=vmem, size = 0x6000, scoped, tag = 'scratch operand']
  #allocation4 [shape = 'bf16[4,24,8]{2,1,0:T(8,128)(2,1)}', space=vmem, size = 0x6000, scoped, tag = 'scratch operand']
  #allocation5 [shape = 'bf16[24,32]{1,0:T(8,128)(2,1)}', space=vmem, size = 0x1800, scoped, tag = 'scratch operand']
  %s0 = inlined_call_operand.vmem [shape: bf16[48,56], index: 0, kind: input, shape index: {}]
  %s1 = inlined_call_operand.vmem [shape: f32[24,32], index: 1, kind: input, shape index: {}]
  %s2 = inlined_call_operand.vmem [shape: f32[8,128], index: 2, kind: input, shape index: {}]
  %s3 = inlined_call_operand.vmem [shape: f32[2,8,128], index: 3, kind: input, shape index: {}]
  %s4 = inlined_call_operand.vmem [shape: bf16[56,32], index: 4, kind: input, shape index: {}]
  %s5 = inlined_call_operand.vmem [shape: bf16[2,32,96], index: 5, kind: input, shape index: {}]
  %s6 = inlined_call_operand.vmem [shape: bf16[2,32,32], index: 6, kind: input, shape index: {}]
  %s7 = inlined_call_operand.vmem [shape: bf16[2,32,128], index: 7, kind: input, shape index: {}]
  %s8 = inlined_call_operand.vmem [shape: bf16[2,128,32], index: 8, kind: input, shape index: {}]
  %s9 = inlined_call_operand.vmem [shape: bf16[32,128], index: 9, kind: input, shape index: {}]
  %s10 = inlined_call_operand.vmem [shape: f32[2,1,128], index: 10, kind: output, shape index: {}]
  %s11 = sld [smem:[#allocation0]]
  $region73: #{forward.1} parent=0
    _
  %s13 = ssub.s32 1, %s11
  %s14 = scalar_select 0, %s13, %s11
  loop: start=0, step=1, limit=4
  $region2: #{forward.1} parent=0 // loop_pre_header
    _
  $region3: #{forward.1} parent=0 // loop_header
    %s16 = sphi 0, %s20
    %p17 = scmp.ge.s32.totalorder %s16, 4
    %s26 = sphi 0, %s28
    %s29 = sphi 0, %s26
    %s30 = sphi 0, %s29
    %s46 = sphi 0, %s30
    %s50 = sphi 0, %s50
    %s52 = sphi 0, %s50
    %s53 = sphi 0, %s52
    %s67 = sphi 0, %s53
    %s71 = sphi 0, %s71
    %s73 = sphi 0, %s71
    %s74 = sphi 0, %s73
    %s88 = sphi 0, %s74
    %s92 = sphi 0, %s92
    %s94 = sphi 0, %s92
    %s95 = sphi 0, %s94
    %s109 = sphi 0, %s95
    %s113 = sphi 0, %s113
    %s115 = sphi 0, %s113
    %s116 = sphi 0, %s115
    %s130 = sphi 0, %s116
    %s134 = sphi 0, %s134
    %s136 = sphi 0, %s134
    %s137 = sphi 0, %s136
    %s151 = sphi 0, %s137
    %s155 = sphi 0, %s155
    %s157 = sphi 0, %s155
    %s158 = sphi 0, %s157
    %s172 = sphi 0, %s158
    %s176 = sphi 0, %s176
    %s178 = sphi 0, %s176
    %s179 = sphi 0, %s178
    %s193 = sphi 0, %s179
    %s197 = sphi 0, %s197
    %s199 = sphi 0, %s197
    %s200 = sphi 0, %s199
    %s214 = sphi 0, %s200
    %s218 = sphi 0, %s218
    %s220 = sphi 0, %s218
    %s221 = sphi 0, %s220
    %s235 = sphi 0, %s221
    %s241 = sphi 0, %s243
    %s244 = sphi 0, %s241
    %s245 = sphi 0, %s244
    %s261 = sphi 0, %s245
  $region4: #{forward.1} parent=0 // loop_header_branch
    %19 = sbr.rel (%p17) target = $region8
  $region5: #{forward.1} parent=0 // loop_body
    %s21 = ssub.s32 %s16, 1
    %s22 = ssub.s32 %s16, 2
    %s23 = sadd.s32 %s16, 1
    %s24 = ssub.s32 %s16, %s23
    %p25 = scmp.eq.s32.totalorder %s24, 0
    %s27 = sadd.s32 %s26, 1
    %s28 = scalar_select %p25, %s26, %s27
    %p31 = pneg %p25
    %p32 = scmp.eq.s32.totalorder %s16, 1
    %p33 = por %p31, %p32
    %p34 = scmp.ne.s32.totalorder %s26, %s29
    %p35 = scmp.eq.s32.totalorder %s16, 0
    %p36 = por %p34, %p35
    %p37 = scmp.ne.s32.totalorder %s26, %s29
    %p38 = scmp.eq.s32.totalorder %s21, 1
    %p39 = por %p37, %p38
    %p40 = scmp.ne.s32.totalorder %s29, %s30
    %p41 = scmp.eq.s32.totalorder %s21, 0
    %p42 = por %p40, %p41
    %p43 = scmp.ne.s32.totalorder %s29, %s30
    %p44 = scmp.eq.s32.totalorder %s22, 1
    %p45 = por %p43, %p44
    %p47 = scmp.ne.s32.totalorder %s30, %s46
    %p48 = scmp.eq.s32.totalorder %s22, 0
    %p49 = por %p47, %p48
    %s51 = sadd.s32 %s50, 1
    %p54 = scmp.eq.s32.totalorder %s16, 1
    %p55 = scmp.ne.s32.totalorder %s50, %s52
    %p56 = scmp.eq.s32.totalorder %s16, 0
    %p57 = por %p55, %p56
    %p58 = scmp.ne.s32.totalorder %s50, %s52
    %p59 = scmp.eq.s32.totalorder %s21, 1
    %p60 = por %p58, %p59
    %p61 = scmp.ne.s32.totalorder %s52, %s53
    %p62 = scmp.eq.s32.totalorder %s21, 0
    %p63 = por %p61, %p62
    %p64 = scmp.ne.s32.totalorder %s52, %s53
    %p65 = scmp.eq.s32.totalorder %s22, 1
    %p66 = por %p64, %p65
    %p68 = scmp.ne.s32.totalorder %s53, %s67
    %p69 = scmp.eq.s32.totalorder %s22, 0
    %p70 = por %p68, %p69
    %s72 = sadd.s32 %s71, 1
    %p75 = scmp.eq.s32.totalorder %s16, 1
    %p76 = scmp.ne.s32.totalorder %s71, %s73
    %p77 = scmp.eq.s32.totalorder %s16, 0
    %p78 = por %p76, %p77
    %p79 = scmp.ne.s32.totalorder %s71, %s73
    %p80 = scmp.eq.s32.totalorder %s21, 1
    %p81 = por %p79, %p80
    %p82 = scmp.ne.s32.totalorder %s73, %s74
    %p83 = scmp.eq.s32.totalorder %s21, 0
    %p84 = por %p82, %p83
    %p85 = scmp.ne.s32.totalorder %s73, %s74
    %p86 = scmp.eq.s32.totalorder %s22, 1
    %p87 = por %p85, %p86
    %p89 = scmp.ne.s32.totalorder %s74, %s88
    %p90 = scmp.eq.s32.totalorder %s22, 0
    %p91 = por %p89, %p90
    %s93 = sadd.s32 %s92, 1
    %p96 = scmp.eq.s32.totalorder %s16, 1
    %p97 = scmp.ne.s32.totalorder %s92, %s94
    %p98 = scmp.eq.s32.totalorder %s16, 0
    %p99 = por %p97, %p98
    %p100 = scmp.ne.s32.totalorder %s92, %s94
    %p101 = scmp.eq.s32.totalorder %s21, 1
    %p102 = por %p100, %p101
    %p103 = scmp.ne.s32.totalorder %s94, %s95
    %p104 = scmp.eq.s32.totalorder %s21, 0
    %p105 = por %p103, %p104
    %p106 = scmp.ne.s32.totalorder %s94, %s95
    %p107 = scmp.eq.s32.totalorder %s22, 1
    %p108 = por %p106, %p107
    %p110 = scmp.ne.s32.totalorder %s95, %s109
    %p111 = scmp.eq.s32.totalorder %s22, 0
    %p112 = por %p110, %p111
    %s114 = sadd.s32 %s113, 1
    %p117 = scmp.eq.s32.totalorder %s16, 1
    %p118 = scmp.ne.s32.totalorder %s113, %s115
    %p119 = scmp.eq.s32.totalorder %s16, 0
    %p120 = por %p118, %p119
    %p121 = scmp.ne.s32.totalorder %s113, %s115
    %p122 = scmp.eq.s32.totalorder %s21, 1
    %p123 = por %p121, %p122
    %p124 = scmp.ne.s32.totalorder %s115, %s116
    %p125 = scmp.eq.s32.totalorder %s21, 0
    %p126 = por %p124, %p125
    %p127 = scmp.ne.s32.totalorder %s115, %s116
    %p128 = scmp.eq.s32.totalorder %s22, 1
    %p129 = por %p127, %p128
    %p131 = scmp.ne.s32.totalorder %s116, %s130
    %p132 = scmp.eq.s32.totalorder %s22, 0
    %p133 = por %p131, %p132
    %s135 = sadd.s32 %s134, 1
    %p138 = scmp.eq.s32.totalorder %s16, 1
    %p139 = scmp.ne.s32.totalorder %s134, %s136
    %p140 = scmp.eq.s32.totalorder %s16, 0
    %p141 = por %p139, %p140
    %p142 = scmp.ne.s32.totalorder %s134, %s136
    %p143 = scmp.eq.s32.totalorder %s21, 1
    %p144 = por %p142, %p143
    %p145 = scmp.ne.s32.totalorder %s136, %s137
    %p146 = scmp.eq.s32.totalorder %s21, 0
    %p147 = por %p145, %p146
    %p148 = scmp.ne.s32.totalorder %s136, %s137
    %p149 = scmp.eq.s32.totalorder %s22, 1
    %p150 = por %p148, %p149
    %p152 = scmp.ne.s32.totalorder %s137, %s151
    %p153 = scmp.eq.s32.totalorder %s22, 0
    %p154 = por %p152, %p153
    %s156 = sadd.s32 %s155, 1
    %p159 = scmp.eq.s32.totalorder %s16, 1
    %p160 = scmp.ne.s32.totalorder %s155, %s157
    %p161 = scmp.eq.s32.totalorder %s16, 0
    %p162 = por %p160, %p161
    %p163 = scmp.ne.s32.totalorder %s155, %s157
    %p164 = scmp.eq.s32.totalorder %s21, 1
    %p165 = por %p163, %p164
    %p166 = scmp.ne.s32.totalorder %s157, %s158
    %p167 = scmp.eq.s32.totalorder %s21, 0
    %p168 = por %p166, %p167
    %p169 = scmp.ne.s32.totalorder %s157, %s158
    %p170 = scmp.eq.s32.totalorder %s22, 1
    %p171 = por %p169, %p170
    %p173 = scmp.ne.s32.totalorder %s158, %s172
    %p174 = scmp.eq.s32.totalorder %s22, 0
    %p175 = por %p173, %p174
    %s177 = sadd.s32 %s176, 1
    %p180 = scmp.eq.s32.totalorder %s16, 1
    %p181 = scmp.ne.s32.totalorder %s176, %s178
    %p182 = scmp.eq.s32.totalorder %s16, 0
    %p183 = por %p181, %p182
    %p184 = scmp.ne.s32.totalorder %s176, %s178
    %p185 = scmp.eq.s32.totalorder %s21, 1
    %p186 = por %p184, %p185
    %p187 = scmp.ne.s32.totalorder %s178, %s179
    %p188 = scmp.eq.s32.totalorder %s21, 0
    %p189 = por %p187, %p188
    %p190 = scmp.ne.s32.totalorder %s178, %s179
    %p191 = scmp.eq.s32.totalorder %s22, 1
    %p192 = por %p190, %p191
    %p194 = scmp.ne.s32.totalorder %s179, %s193
    %p195 = scmp.eq.s32.totalorder %s22, 0
    %p196 = por %p194, %p195
    %s198 = sadd.s32 %s197, 1
    %p201 = scmp.eq.s32.totalorder %s16, 1
    %p202 = scmp.ne.s32.totalorder %s197, %s199
    %p203 = scmp.eq.s32.totalorder %s16, 0
    %p204 = por %p202, %p203
    %p205 = scmp.ne.s32.totalorder %s197, %s199
    %p206 = scmp.eq.s32.totalorder %s21, 1
    %p207 = por %p205, %p206
    %p208 = scmp.ne.s32.totalorder %s199, %s200
    %p209 = scmp.eq.s32.totalorder %s21, 0
    %p210 = por %p208, %p209
    %p211 = scmp.ne.s32.totalorder %s199, %s200
    %p212 = scmp.eq.s32.totalorder %s22, 1
    %p213 = por %p211, %p212
    %p215 = scmp.ne.s32.totalorder %s200, %s214
    %p216 = scmp.eq.s32.totalorder %s22, 0
    %p217 = por %p215, %p216
    %s219 = sadd.s32 %s218, 1
    %p222 = scmp.eq.s32.totalorder %s16, 1
    %p223 = scmp.ne.s32.totalorder %s218, %s220
    %p224 = scmp.eq.s32.totalorder %s16, 0
    %p225 = por %p223, %p224
    %p226 = scmp.ne.s32.totalorder %s218, %s220
    %p227 = scmp.eq.s32.totalorder %s21, 1
    %p228 = por %p226, %p227
    %p229 = scmp.ne.s32.totalorder %s220, %s221
    %p230 = scmp.eq.s32.totalorder %s21, 0
    %p231 = por %p229, %p230
    %p232 = scmp.ne.s32.totalorder %s220, %s221
    %p233 = scmp.eq.s32.totalorder %s22, 1
    %p234 = por %p232, %p233
    %p236 = scmp.ne.s32.totalorder %s221, %s235
    %p237 = scmp.eq.s32.totalorder %s22, 0
    %p238 = por %p236, %p237
    %s239 = ssub.s32 %s16, %s23
    %p240 = scmp.eq.s32.totalorder %s239, 0
    %s242 = sadd.s32 %s241, 1
    %s243 = scalar_select %p240, %s241, %s242
    %p246 = pneg %p240
    %p247 = scmp.eq.s32.totalorder %s16, 1
    %p248 = por %p246, %p247
    %p249 = scmp.ne.s32.totalorder %s241, %s244
    %p250 = scmp.eq.s32.totalorder %s16, 0
    %p251 = por %p249, %p250
    %p252 = scmp.ne.s32.totalorder %s241, %s244
    %p253 = scmp.eq.s32.totalorder %s21, 1
    %p254 = por %p252, %p253
    %p255 = scmp.ne.s32.totalorder %s244, %s245
    %p256 = scmp.eq.s32.totalorder %s21, 0
    %p257 = por %p255, %p256
    %p258 = scmp.ne.s32.totalorder %s244, %s245
    %p259 = scmp.eq.s32.totalorder %s22, 1
    %p260 = por %p258, %p259
    %p262 = scmp.ne.s32.totalorder %s245, %s261
    %p263 = scmp.eq.s32.totalorder %s22, 0
    %p264 = por %p262, %p263
    %p265 = scmp.le.s32.totalorder 1, %s16
    %p266 = scmp.lt.s32.totalorder %s16, 3
    %p267 = pnand %p265, %p266
    %p268 = pneg %p267
    // Predicated region
    $region9: #{forward.1} parent=5 // pred_check
      _
    $region10: #{forward.1} parent=5 // pred_check_branch
      %270 = sbr.rel (%p267) target = $region12
    $region11: #{forward.1} parent=5 // pred_region
      %s271 = ssub.s32 %s16, 1
      // Predicated region
      $region13: #{forward.1} parent=11 // pred_check
        %p272 = pneg %p63
      $region14: #{forward.1} parent=11 // pred_check_branch
        %274 = sbr.rel (%p272) target = $region16
      $region15: #{forward.1} parent=11 // pred_region
        _
      $region16: #{forward.1} parent=11 // pred_fallthru
        _
      // Predicated region
      $region17: #{forward.1} parent=11 // pred_check
        %p275 = pneg %p84
      $region18: #{forward.1} parent=11 // pred_check_branch
        %277 = sbr.rel (%p275) target = $region20
      $region19: #{forward.1} parent=11 // pred_region
        _
      $region20: #{forward.1} parent=11 // pred_fallthru
        _
      // Predicated region
      $region21: #{forward.1} parent=11 // pred_check
        %p278 = pneg %p105
      $region22: #{forward.1} parent=11 // pred_check_branch
        %280 = sbr.rel (%p278) target = $region24
      $region23: #{forward.1} parent=11 // pred_region
        _
      $region24: #{forward.1} parent=11 // pred_fallthru
        _
      // Predicated region
      $region25: #{forward.1} parent=11 // pred_check
        %p281 = pneg %p126
      $region26: #{forward.1} parent=11 // pred_check_branch
        %283 = sbr.rel (%p281) target = $region28
      $region27: #{forward.1} parent=11 // pred_region
        _
      $region28: #{forward.1} parent=11 // pred_fallthru
        _
      // Predicated region
      $region29: #{forward.1} parent=11 // pred_check
        %p284 = pneg %p147
      $region30: #{forward.1} parent=11 // pred_check_branch
        %286 = sbr.rel (%p284) target = $region32
      $region31: #{forward.1} parent=11 // pred_region
        _
      $region32: #{forward.1} parent=11 // pred_fallthru
        _
      // Predicated region
      $region33: #{forward.1} parent=11 // pred_check
        %p287 = pneg %p168
      $region34: #{forward.1} parent=11 // pred_check_branch
        %289 = sbr.rel (%p287) target = $region36
      $region35: #{forward.1} parent=11 // pred_region
        _
      $region36: #{forward.1} parent=11 // pred_fallthru
        _
      // Predicated region
      $region37: #{forward.1} parent=11 // pred_check
        %p290 = pneg %p189
      $region38: #{forward.1} parent=11 // pred_check_branch
        %292 = sbr.rel (%p290) target = $region40
      $region39: #{forward.1} parent=11 // pred_region
        _
      $region40: #{forward.1} parent=11 // pred_fallthru
        _
      // Predicated region
      $region41: #{forward.1} parent=11 // pred_check
        %p293 = pneg %p210
      $region42: #{forward.1} parent=11 // pred_check_branch
        %295 = sbr.rel (%p293) target = $region44
      $region43: #{forward.1} parent=11 // pred_region
        _
      $region44: #{forward.1} parent=11 // pred_fallthru
        _
      // Predicated region
      $region45: #{forward.1} parent=11 // pred_check
        %p296 = pneg %p231
      $region46: #{forward.1} parent=11 // pred_check_branch
        %298 = sbr.rel (%p296) target = $region48
      $region47: #{forward.1} parent=11 // pred_region
        _
      $region48: #{forward.1} parent=11 // pred_fallthru
        _
    $region12: #{forward.1} parent=5 // pred_fallthru
      _
    %p299 = scmp.lt.s32.totalorder %s16, 2
    // Predicated region
    $region49: #{forward.1} parent=5 // pred_check
      %p300 = pneg %p299
    $region50: #{forward.1} parent=5 // pred_check_branch
      %302 = sbr.rel (%p300) target = $region52
    $region51: #{forward.1} parent=5 // pred_region
      // Predicated region
      $region53: #{forward.1} parent=51 // pred_check
        %p303 = pneg %p36
      $region54: #{forward.1} parent=51 // pred_check_branch
        %305 = sbr.rel (%p303) target = $region56
      $region55: #{forward.1} parent=51 // pred_region
        %s306 = smul.u32 3, %s16
        %p307 = scmp.lt.s32.totalorder %s306, 5
        %s308 = scalar_select %p307, %s306, 5
        %s309 = smul.addr %s308, 4
        %s310 = scalar_lea.vmem %s0, %s309
        %s311 = smul.u32 3, %s16
      $region56: #{forward.1} parent=51 // pred_fallthru
        _
    $region52: #{forward.1} parent=5 // pred_fallthru
      _
    %p312 = scmp.le.s32.totalorder 1, %s16
    %p313 = scmp.lt.s32.totalorder %s16, 3
    %p314 = pnand %p312, %p313
    %p315 = pneg %p314
    // Predicated region
    $region57: #{forward.1} parent=5 // pred_check
      _
    $region58: #{forward.1} parent=5 // pred_check_branch
      %317 = sbr.rel (%p314) target = $region60
    $region59: #{forward.1} parent=5 // pred_region
      %s318 = ssub.s32 %s16, 1
      %s319 = smul.u32 3, %s21
      %p320 = scmp.lt.s32.totalorder %s319, 5
      %s321 = scalar_select %p320, %s319, 5
      %s322 = smul.addr %s321, 4
      %s323 = scalar_lea.vmem %s0, %s322
      %p324 = pneg %p42
      %p325 = pneg %p39
      %p326 = pneg %p63
      %p327 = pneg %p60
      %p328 = pneg %p84
      %p329 = pneg %p81
      %p330 = pneg %p105
      %p331 = pneg %p102
      %p332 = pneg %p126
      %p333 = pneg %p123
      %p334 = pneg %p147
      %p335 = pneg %p144
      %p336 = pneg %p168
      %p337 = pneg %p165
      %p338 = pneg %p189
      %p339 = pneg %p186
      %p340 = pneg %p210
      %p341 = pneg %p207
      %p342 = pneg %p231
      %p343 = pneg %p228
      %p344 = pneg %p257
      %p345 = pneg %p254
      %p346 = scmp.lt.s32.totalorder %s21, 1
      %s347 = scalar_select %p346, %s21, 1
      %s348 = scalar_lea.vmem %s10, %s347
      %s349 = smul.u32 3, %s21
      %p350 = scmp.lt.s32.totalorder %s349, 5
      %s351 = scalar_select %p350, %s349, 5
      %s352 = smul.addr %s351, 4
      %s353 = scalar_lea.vmem %s0, %s352
      %s354 = smul.u32 3, %s21
      %p355 = scmp.lt.s32.totalorder %s21, 1
      %s356 = scalar_select %p355, %s21, 1
      %s357 = scalar_lea.vmem %s10, %s356
      %v359 = vld [vmem:[%s2] sm:$0xff]
      %v360 = vld [vmem:[%s353] sm:$0xf]
      %v361 = vld [vmem:[%s353 + $0x4] sm:$0xf]
      %v362 = vld [vmem:[%s353 + $0x8] sm:$0xf]
      %v363 = vld [vmem:[%s4] sm:$0xf]
      %v364 = vld [vmem:[%s4 + $0x4] sm:$0xf]
      %v365 = vld [vmem:[%s4 + $0x8] sm:$0xf]
      %v366 = vld [vmem:[%s4 + $0xc] sm:$0xf]
      %v367 = vld [vmem:[%s4 + $0x10] sm:$0xf]
      %v368 = vld [vmem:[%s4 + $0x14] sm:$0xf]
      %v369 = vld [vmem:[%s4 + $0x18] sm:$0xf]
      %v370 = vld [vmem:[%s1] sm:$0xff]
      %v371 = vld [vmem:[%s1 + $0x8] sm:$0xff]
      %v372 = vld [vmem:[%s1 + $0x10] sm:$0xff]
      %v376 = vunpack.c.l.b16 %v360
      %v377 = vunpack.c.l.b16 %v361
      %v378 = vunpack.c.l.b16 %v362
      %v379 = vpack.c.b16 %v377, %v376
      %v380 = vpack.c.b16 %v378, %v378
      %v388 = vunpack.c.l.b16 %v363
      %v389 = vunpack.c.l.b16 %v364
      %v390 = vunpack.c.l.b16 %v365
      %v391 = vunpack.c.l.b16 %v366
      %v392 = vunpack.c.l.b16 %v367
      %v393 = vunpack.c.l.b16 %v368
      %v394 = vunpack.c.l.b16 %v369
      %v395 = vpack.c.b16 %v389, %v388
      %v396 = vpack.c.b16 %v391, %v390
      %v397 = vpack.c.b16 %v393, %v392
      %v398 = vpack.c.b16 %v394, %v394
      %vm402 = vcmask 457728
      %v404 = vsel %vm402, %v379, 0
      %v407 = vsel %vm402, %v380, 0
      %vm409 = vcmask 1043456
      %v411 = vsel %vm409, %v398, 0
      %413 = vmatprep.subr.bf16.mxu0 0
      %414 = vmatpush1.bf16.msra.mxu0 0
      %415 = vmatprep.subr.bf16.mxu0 0
      %416 = vmatpush1.bf16.msra.mxu0 0
      %417 = vmatprep.subr.bf16.mxu0 0
      %418 = vmatpush1.bf16.msra.mxu0 0
      %419 = vmatprep.subr.bf16.mxu0 0
      %420 = vmatpush1.bf16.msra.mxu0 0
      %421 = vmatprep.subr.bf16.mxu0 0
      %422 = vmatpush1.bf16.msra.mxu0 %v411
      %423 = vmatprep.subr.bf16.mxu0 0
      %424 = vmatpush1.bf16.msra.mxu0 %v397
      %425 = vmatprep.subr.bf16.mxu0 0
      %426 = vmatpush1.bf16.msra.mxu0 %v396
      %427 = vmatprep.subr.bf16.mxu0 0
      %428 = vmatpush1.bf16.msra.mxu0 %v395
      %429 = vmatprep.subr.bf16.mxu0 0
      %430 = vmatpush2.bf16.msra.mxu0 0
      %431 = vmatprep.subr.bf16.mxu0 0
      %432 = vmatpush2.bf16.msra.mxu0 0
      %433 = vmatprep.subr.bf16.mxu0 0
      %434 = vmatpush2.bf16.msra.mxu0 0
      %435 = vmatprep.subr.bf16.mxu0 0
      %436 = vmatpush2.bf16.msra.mxu0 0
      %437 = vmatprep.subr.bf16.mxu0 0
      %438 = vmatpush2.bf16.msra.mxu0 0
      %439 = vmatprep.subr.bf16.mxu0 0
      %440 = vmatpush2.bf16.msra.mxu0 0
      %441 = vmatprep.subr.bf16.mxu0 0
      %442 = vmatpush2.bf16.msra.mxu0 0
      %443 = vmatprep.subr.bf16.mxu0 0
      %444 = vmatpush2.bf16.msra.mxu0 0
      %445 = vmatprep.mubr.bf16.mxu0 0
      %446 = vmatmul.mubr.bf16.gmra.mxu0 %v404
      %v447 = vpop.f32.mrf.mxu0
      %v448 = vadd.f32 %v370, %v447
      %v449 = vpop.f32.mrf.mxu0
      %v450 = vpop.f32.mrf.mxu0
      %v451 = vadd.f32 %v371, %v450
      %v452 = vpop.f32.mrf.mxu0
      %453 = vmatprep.mubr.bf16.mxu0 0
      %454 = vmatmul.mubr.bf16.gmra.mxu0 %v407
      %v455 = vpop.f32.mrf.mxu0
      %v456 = vadd.f32 %v372, %v455
      %v457 = vpop.f32.mrf.mxu0
      %v458 = vpop.f32.mrf.mxu0
      %v459 = vpop.f32.mrf.mxu0
      %460 = vdwg.mxu0
      %vm461 = vcmask 261120
      %v462 = vsel %vm461, %v448, 0.0
      %463 = vadd.xlane.f32.xlu0 %v462
      %v464 = vpop.xlane.xlu0 %463
      %v465 = vsel %vm461, %v451, 0.0
      %466 = vadd.xlane.f32.xlu0 %v465
      %v467 = vpop.xlane.xlu0 %466
      %v468 = vsel %vm461, %v456, 0.0
      %469 = vadd.xlane.f32.xlu0 %v468
      %v470 = vpop.xlane.xlu0 %469
      %v471 = vrcp.pop 32.0
      %v472 = vmul.f32 %v464, %v471
      %v473 = vmul.f32 %v467, %v471
      %v474 = vmul.f32 %v470, %v471
      %v475 = vsub.f32 %v448, %v472
      %v476 = vsub.f32 %v451, %v473
      %v477 = vsub.f32 %v456, %v474
      %v478 = vmul.f32 %v475, %v475
      %v479 = vmul.f32 %v476, %v476
      %v480 = vmul.f32 %v477, %v477
      %v481 = vsel %vm461, %v478, 0.0
      %482 = vadd.xlane.f32.xlu0 %v481
      %v483 = vpop.xlane.xlu0 %482
      %v484 = vsel %vm461, %v479, 0.0
      %485 = vadd.xlane.f32.xlu0 %v484
      %v486 = vpop.xlane.xlu0 %485
      %v487 = vsel %vm461, %v480, 0.0
      %488 = vadd.xlane.f32.xlu0 %v487
      %v489 = vpop.xlane.xlu0 %488
      %v490 = vmul.f32 %v483, %v471
      %v491 = vmul.f32 %v486, %v471
      %v492 = vmul.f32 %v489, %v471
      %v493 = vadd.f32 %v490, 1e-05
      %v494 = vadd.f32 %v491, 1e-05
      %v495 = vadd.f32 %v492, 1e-05
      %v496 = vrsqrt.pop %v493
      %v497 = vrsqrt.pop %v494
      %v498 = vrsqrt.pop %v495
      %v499 = vmul.f32 %v475, %v496
      %v500 = vmul.f32 %v476, %v497
      %v501 = vmul.f32 %v477, %v498
      %v502 = vlaneseq
      %v503 = vshrl.u32 %v502, 7
      %v504 = vsub.s32 0, %v503
      %v505 = vrot.slane %v359, %v504
      %v506 = vmul.f32 %v499, %v505
      %v507 = vmul.f32 %v500, %v505
      %v508 = vmul.f32 %v501, %v505
      %v509 = vlaneseq
      %v510 = vshrl.u32 %v509, 7
      %v511 = vsub.s32 1, %v510
      %v512 = vrot.slane %v359, %v511
      %v513 = vadd.f32 %v506, %v512
      %v514 = vadd.f32 %v507, %v512
      %v515 = vadd.f32 %v508, %v512
      %v516 = vlaneseq
      %v517 = vand.u32 %v516, 127
      %vm518 = vcmp.lt.s32.totalorder %v517, 17
      %v519 = vsel %vm518, 0.0, -1e+30
      %v520 = vld [vmem:[%s3] sm:$0xff]
      %v521 = vsel %vm461, %v513, 0.0
      %522 = vadd.xlane.f32.xlu0 %v521
      %v523 = vpop.xlane.xlu0 %522
      %v524 = vsel %vm461, %v514, 0.0
      %525 = vadd.xlane.f32.xlu0 %v524
      %v526 = vpop.xlane.xlu0 %525
      %v527 = vsel %vm461, %v515, 0.0
      %528 = vadd.xlane.f32.xlu0 %v527
      %v529 = vpop.xlane.xlu0 %528
      %v530 = vmul.f32 %v523, %v471
      %v531 = vmul.f32 %v526, %v471
      %v532 = vmul.f32 %v529, %v471
      %v533 = vsub.f32 %v513, %v530
      %v534 = vsub.f32 %v514, %v531
      %v535 = vsub.f32 %v515, %v532
      %v536 = vmul.f32 %v533, %v533
      %v537 = vmul.f32 %v534, %v534
      %v538 = vmul.f32 %v535, %v535
      %v539 = vsel %vm461, %v536, 0.0
      %540 = vadd.xlane.f32.xlu0 %v539
      %v541 = vpop.xlane.xlu0 %540
      %v542 = vsel %vm461, %v537, 0.0
      %543 = vadd.xlane.f32.xlu0 %v542
      %v544 = vpop.xlane.xlu0 %543
      %v545 = vsel %vm461, %v538, 0.0
      %546 = vadd.xlane.f32.xlu0 %v545
      %v547 = vpop.xlane.xlu0 %546
      %v548 = vmul.f32 %v541, %v471
      %v549 = vmul.f32 %v544, %v471
      %v550 = vmul.f32 %v547, %v471
      %v551 = vadd.f32 %v548, 1e-05
      %v552 = vadd.f32 %v549, 1e-05
      %v553 = vadd.f32 %v550, 1e-05
      %v554 = vrsqrt.pop %v551
      %v555 = vrsqrt.pop %v552
      %v556 = vrsqrt.pop %v553
      %v557 = vmul.f32 %v533, %v554
      %v558 = vmul.f32 %v534, %v555
      %v559 = vmul.f32 %v535, %v556
      %v560 = vlaneseq
      %v561 = vshrl.u32 %v560, 7
      %v562 = vsub.s32 0, %v561
      %v563 = vrot.slane %v520, %v562
      %v564 = vmul.f32 %v557, %v563
      %v565 = vmul.f32 %v558, %v563
      %v566 = vmul.f32 %v559, %v563
      %v567 = vlaneseq
      %v568 = vshrl.u32 %v567, 7
      %v569 = vsub.s32 1, %v568
      %v570 = vrot.slane %v520, %v569
      %v571 = vadd.f32 %v564, %v570
      %v572 = vadd.f32 %v565, %v570
      %v573 = vadd.f32 %v566, %v570
      %v574 = vpack.c.bf16 %v572, %v571
      %v575 = vpack.c.bf16 %v573, %v573
      %v576 = vld [vmem:[%s5] sm:$0xf]
      %v577 = vld [vmem:[%s5 + $0x4] sm:$0xf]
      %v578 = vld [vmem:[%s5 + $0x8] sm:$0xf]
      %v579 = vld [vmem:[%s5 + $0xc] sm:$0xf]
      %v580 = vlaneseq
      %v581 = vshrl.u32 %v580, 7
      %v582 = vsub.s32 4, %v581
      %v583 = vrot.slane %v520, %v582
      %v588 = vunpack.c.l.b16 %v576
      %v589 = vunpack.c.l.b16 %v577
      %v590 = vunpack.c.l.b16 %v578
      %v591 = vunpack.c.l.b16 %v579
      %v592 = vpack.c.b16 %v589, %v588
      %v593 = vpack.c.b16 %v591, %v590
      %v597 = vsel %vm461, %v574, 0
      %v600 = vsel %vm461, %v575, 0
      %602 = vmatprep.subr.bf16.mxu0 0
      %603 = vmatpush1.bf16.msra.mxu0 0
      %604 = vmatprep.subr.bf16.mxu0 0
      %605 = vmatpush1.bf16.msra.mxu0 0
      %606 = vmatprep.subr.bf16.mxu0 0
      %607 = vmatpush1.bf16.msra.mxu0 0
      %608 = vmatprep.subr.bf16.mxu0 0
      %609 = vmatpush1.bf16.msra.mxu0 0
      %610 = vmatprep.subr.bf16.mxu0 0
      %611 = vmatpush1.bf16.msra.mxu0 0
      %612 = vmatprep.subr.bf16.mxu0 0
      %613 = vmatpush1.bf16.msra.mxu0 0
      %614 = vmatprep.subr.bf16.mxu0 0
      %615 = vmatpush1.bf16.msra.mxu0 %v593
      %616 = vmatprep.subr.bf16.mxu0 0
      %617 = vmatpush1.bf16.msra.mxu0 %v592
      %618 = vmatprep.subr.bf16.mxu0 0
      %619 = vmatpush2.bf16.msra.mxu0 0
      %620 = vmatprep.subr.bf16.mxu0 0
      %621 = vmatpush2.bf16.msra.mxu0 0
      %622 = vmatprep.subr.bf16.mxu0 0
      %623 = vmatpush2.bf16.msra.mxu0 0
      %624 = vmatprep.subr.bf16.mxu0 0
      %625 = vmatpush2.bf16.msra.mxu0 0
      %626 = vmatprep.subr.bf16.mxu0 0
      %627 = vmatpush2.bf16.msra.mxu0 0
      %628 = vmatprep.subr.bf16.mxu0 0
      %629 = vmatpush2.bf16.msra.mxu0 0
      %630 = vmatprep.subr.bf16.mxu0 0
      %631 = vmatpush2.bf16.msra.mxu0 0
      %632 = vmatprep.subr.bf16.mxu0 0
      %633 = vmatpush2.bf16.msra.mxu0 0
      %634 = vmatprep.mubr.bf16.mxu0 0
      %635 = vmatmul.mubr.bf16.gmra.mxu0 %v597
      %v636 = vpop.f32.mrf.mxu0
      %v637 = vadd.f32 %v583, %v636
      %v638 = vpop.f32.mrf.mxu0
      %v639 = vpop.f32.mrf.mxu0
      %v640 = vadd.f32 %v583, %v639
      %v641 = vpop.f32.mrf.mxu0
      %642 = vmatprep.mubr.bf16.mxu0 0
      %643 = vmatmul.mubr.bf16.gmra.mxu0 %v600
      %v644 = vpop.f32.mrf.mxu0
      %v645 = vadd.f32 %v583, %v644
      %v646 = vpop.f32.mrf.mxu0
      %v647 = vpop.f32.mrf.mxu0
      %v648 = vpop.f32.mrf.mxu0
      %649 = vdwg.mxu0
      %v650 = vpack.c.bf16 %v640, %v637
      %v651 = vpack.c.bf16 %v645, %v645
      %v654 = vunpack.c.l.b16 %v650
      %v655 = vunpack.c.h.b16 %v650
      %v656 = vunpack.c.l.b16 %v651
      %v657 = vpack.c.b16 %v654, %v654
      %v658 = vpack.c.b16 %v655, %v655
      %v659 = vpack.c.b16 %v656, %v656
      %vm663 = vcmask 60416
      %664 = vst.msk [vmem:[#allocation2] sm:$0xf] %vm663, %v657
      %665 = vst.msk [vmem:[#allocation2 + $0x4] sm:$0xf] %vm663, %v658
      %666 = vst.msk [vmem:[#allocation2 + $0x8] sm:$0xf] %vm663, %v659
      %667 = vrot.lane.b32.xlu0 %v657, 96
      %v668 = vpop.permute.xlu0 %667
      %669 = vrot.lane.b32.xlu0 %v658, 96
      %v670 = vpop.permute.xlu0 %669
      %671 = vrot.lane.b32.xlu0 %v659, 96
      %v672 = vpop.permute.xlu0 %671
      %676 = vst.msk [vmem:[#allocation3] sm:$0xf] %vm663, %v668
      %677 = vst.msk [vmem:[#allocation3 + $0x4] sm:$0xf] %vm663, %v670
      %678 = vst.msk [vmem:[#allocation3 + $0x8] sm:$0xf] %vm663, %v672
      %679 = vrot.lane.b32.xlu0 %v657, 64
      %v680 = vpop.permute.xlu0 %679
      %681 = vrot.lane.b32.xlu0 %v658, 64
      %v682 = vpop.permute.xlu0 %681
      %683 = vrot.lane.b32.xlu0 %v659, 64
      %v684 = vpop.permute.xlu0 %683
      %688 = vst.msk [vmem:[#allocation4] sm:$0xf] %vm663, %v680
      %689 = vst.msk [vmem:[#allocation4 + $0x4] sm:$0xf] %vm663, %v682
      %690 = vst.msk [vmem:[#allocation4 + $0x8] sm:$0xf] %vm663, %v684
      %691 = vrot.lane.b32.xlu0 %v657, 120
      %v692 = vpop.permute.xlu0 %691
      %693 = vrot.lane.b32.xlu0 %v658, 120
      %v694 = vpop.permute.xlu0 %693
      %695 = vrot.lane.b32.xlu0 %v659, 120
      %v696 = vpop.permute.xlu0 %695
      %s700 = scalar_lea.vmem [#allocation2], 12
      %701 = vst.msk [vmem:[%s700] sm:$0xf] %vm663, %v692
      %702 = vst.msk [vmem:[%s700 + $0x4] sm:$0xf] %vm663, %v694
      %703 = vst.msk [vmem:[%s700 + $0x8] sm:$0xf] %vm663, %v696
      %704 = vrot.lane.b32.xlu0 %v657, 88
      %v705 = vpop.permute.xlu0 %704
      %706 = vrot.lane.b32.xlu0 %v658, 88
      %v707 = vpop.permute.xlu0 %706
      %708 = vrot.lane.b32.xlu0 %v659, 88
      %v709 = vpop.permute.xlu0 %708
      %s713 = scalar_lea.vmem [#allocation3], 12
      %714 = vst.msk [vmem:[%s713] sm:$0xf] %vm663, %v705
      %715 = vst.msk [vmem:[%s713 + $0x4] sm:$0xf] %vm663, %v707
      %716 = vst.msk [vmem:[%s713 + $0x8] sm:$0xf] %vm663, %v709
      %717 = vrot.lane.b32.xlu0 %v657, 56
      %v718 = vpop.permute.xlu0 %717
      %719 = vrot.lane.b32.xlu0 %v658, 56
      %v720 = vpop.permute.xlu0 %719
      %721 = vrot.lane.b32.xlu0 %v659, 56
      %v722 = vpop.permute.xlu0 %721
      %s726 = scalar_lea.vmem [#allocation4], 12
      %727 = vst.msk [vmem:[%s726] sm:$0xf] %vm663, %v718
      %728 = vst.msk [vmem:[%s726 + $0x4] sm:$0xf] %vm663, %v720
      %729 = vst.msk [vmem:[%s726 + $0x8] sm:$0xf] %vm663, %v722
      %730 = vrot.lane.b32.xlu0 %v657, 112
      %v731 = vpop.permute.xlu0 %730
      %732 = vrot.lane.b32.xlu0 %v658, 112
      %v733 = vpop.permute.xlu0 %732
      %734 = vrot.lane.b32.xlu0 %v659, 112
      %v735 = vpop.permute.xlu0 %734
      %s739 = scalar_lea.vmem [#allocation2], 24
      %740 = vst.msk [vmem:[%s739] sm:$0xf] %vm663, %v731
      %741 = vst.msk [vmem:[%s739 + $0x4] sm:$0xf] %vm663, %v733
      %742 = vst.msk [vmem:[%s739 + $0x8] sm:$0xf] %vm663, %v735
      %743 = vrot.lane.b32.xlu0 %v657, 80
      %v744 = vpop.permute.xlu0 %743
      %745 = vrot.lane.b32.xlu0 %v658, 80
      %v746 = vpop.permute.xlu0 %745
      %747 = vrot.lane.b32.xlu0 %v659, 80
      %v748 = vpop.permute.xlu0 %747
      %s752 = scalar_lea.vmem [#allocation3], 24
      %753 = vst.msk [vmem:[%s752] sm:$0xf] %vm663, %v744
      %754 = vst.msk [vmem:[%s752 + $0x4] sm:$0xf] %vm663, %v746
      %755 = vst.msk [vmem:[%s752 + $0x8] sm:$0xf] %vm663, %v748
      %756 = vrot.lane.b32.xlu0 %v657, 48
      %v757 = vpop.permute.xlu0 %756
      %758 = vrot.lane.b32.xlu0 %v658, 48
      %v759 = vpop.permute.xlu0 %758
      %760 = vrot.lane.b32.xlu0 %v659, 48
      %v761 = vpop.permute.xlu0 %760
      %s765 = scalar_lea.vmem [#allocation4], 24
      %766 = vst.msk [vmem:[%s765] sm:$0xf] %vm663, %v757
      %767 = vst.msk [vmem:[%s765 + $0x4] sm:$0xf] %vm663, %v759
      %768 = vst.msk [vmem:[%s765 + $0x8] sm:$0xf] %vm663, %v761
      %769 = vrot.lane.b32.xlu0 %v657, 104
      %v770 = vpop.permute.xlu0 %769
      %771 = vrot.lane.b32.xlu0 %v658, 104
      %v772 = vpop.permute.xlu0 %771
      %773 = vrot.lane.b32.xlu0 %v659, 104
      %v774 = vpop.permute.xlu0 %773
      %s778 = scalar_lea.vmem [#allocation2], 36
      %779 = vst.msk [vmem:[%s778] sm:$0xf] %vm663, %v770
      %780 = vst.msk [vmem:[%s778 + $0x4] sm:$0xf] %vm663, %v772
      %781 = vst.msk [vmem:[%s778 + $0x8] sm:$0xf] %vm663, %v774
      %782 = vrot.lane.b32.xlu0 %v657, 72
      %v783 = vpop.permute.xlu0 %782
      %784 = vrot.lane.b32.xlu0 %v658, 72
      %v785 = vpop.permute.xlu0 %784
      %786 = vrot.lane.b32.xlu0 %v659, 72
      %v787 = vpop.permute.xlu0 %786
      %s791 = scalar_lea.vmem [#allocation3], 36
      %792 = vst.msk [vmem:[%s791] sm:$0xf] %vm663, %v783
      %793 = vst.msk [vmem:[%s791 + $0x4] sm:$0xf] %vm663, %v785
      %794 = vst.msk [vmem:[%s791 + $0x8] sm:$0xf] %vm663, %v787
      %795 = vrot.lane.b32.xlu0 %v657, 40
      %v796 = vpop.permute.xlu0 %795
      %797 = vrot.lane.b32.xlu0 %v658, 40
      %v798 = vpop.permute.xlu0 %797
      %799 = vrot.lane.b32.xlu0 %v659, 40
      %v800 = vpop.permute.xlu0 %799
      %s804 = scalar_lea.vmem [#allocation4], 36
      %805 = vst.msk [vmem:[%s804] sm:$0xf] %vm663, %v796
      %806 = vst.msk [vmem:[%s804 + $0x4] sm:$0xf] %vm663, %v798
      %807 = vst.msk [vmem:[%s804 + $0x8] sm:$0xf] %vm663, %v800
      %v808 = vld [vmem:[#allocation2] sm:$0xf]
      %v809 = vld [vmem:[#allocation2 + $0x4] sm:$0xf]
      %v810 = vld [vmem:[#allocation2 + $0x8] sm:$0xf]
      %v811 = vld [vmem:[#allocation2 + $0xc] sm:$0xf]
      %v812 = vld [vmem:[#allocation2 + $0x10] sm:$0xf]
      %v813 = vld [vmem:[#allocation2 + $0x14] sm:$0xf]
      %v814 = vld [vmem:[#allocation2 + $0x18] sm:$0xf]
      %v815 = vld [vmem:[#allocation2 + $0x1c] sm:$0xf]
      %v816 = vld [vmem:[#allocation2 + $0x20] sm:$0xf]
      %v817 = vld [vmem:[#allocation2 + $0x24] sm:$0xf]
      %v818 = vld [vmem:[#allocation2 + $0x28] sm:$0xf]
      %v819 = vld [vmem:[#allocation2 + $0x2c] sm:$0xf]
      %v820 = vld [vmem:[#allocation3] sm:$0xf]
      %v821 = vld [vmem:[#allocation3 + $0x4] sm:$0xf]
      %v822 = vld [vmem:[#allocation3 + $0x8] sm:$0xf]
      %v823 = vld [vmem:[#allocation3 + $0xc] sm:$0xf]
      %v824 = vld [vmem:[#allocation3 + $0x10] sm:$0xf]
      %v825 = vld [vmem:[#allocation3 + $0x14] sm:$0xf]
      %v826 = vld [vmem:[#allocation3 + $0x18] sm:$0xf]
      %v827 = vld [vmem:[#allocation3 + $0x1c] sm:$0xf]
      %v828 = vld [vmem:[#allocation3 + $0x20] sm:$0xf]
      %v829 = vld [vmem:[#allocation3 + $0x24] sm:$0xf]
      %v830 = vld [vmem:[#allocation3 + $0x28] sm:$0xf]
      %v831 = vld [vmem:[#allocation3 + $0x2c] sm:$0xf]
      %v835 = vunpack.c.l.b16 %v808
      %v836 = vunpack.c.l.b16 %v809
      %v837 = vunpack.c.l.b16 %v810
      %v838 = vpack.c.b16 %v836, %v835
      %v839 = vpack.c.b16 %v837, %v837
      %v843 = vunpack.c.l.b16 %v820
      %v844 = vunpack.c.l.b16 %v821
      %v845 = vunpack.c.l.b16 %v822
      %v846 = vpack.c.b16 %v844, %v843
      %v847 = vpack.c.b16 %v845, %v845
      %vm848 = vcmask 64512
      %v850 = vsel %vm848, %v838, 0
      %v853 = vsel %vm848, %v839, 0
      %v856 = vsel %vm848, %v846, 0
      %v859 = vsel %vm848, %v847, 0
      %861 = vmatprep.subr.bf16.mxu0 0
      %862 = vmatpush1.bf16.xpose.msra.mxu0 0
      %863 = vmatprep.subr.bf16.mxu0 0
      %864 = vmatpush1.bf16.xpose.msra.mxu0 0
      %865 = vmatprep.subr.bf16.mxu0 0
      %866 = vmatpush1.bf16.xpose.msra.mxu0 0
      %867 = vmatprep.subr.bf16.mxu0 0
      %868 = vmatpush1.bf16.xpose.msra.mxu0 0
      %869 = vmatprep.subr.bf16.mxu0 0
      %870 = vmatpush1.bf16.xpose.msra.mxu0 0
      %871 = vmatprep.subr.bf16.mxu0 0
      %872 = vmatpush1.bf16.xpose.msra.mxu0 0
      %873 = vmatprep.subr.bf16.mxu0 0
      %874 = vmatpush1.bf16.xpose.msra.mxu0 %v859
      %875 = vmatprep.subr.bf16.mxu0 0
      %876 = vmatpush1.bf16.xpose.msra.mxu0 %v856
      %877 = vmatprep.subr.bf16.mxu0 0
      %878 = vmatpush2.bf16.xpose.msra.mxu0 0
      %879 = vmatprep.subr.bf16.mxu0 0
      %880 = vmatpush2.bf16.xpose.msra.mxu0 0
      %881 = vmatprep.subr.bf16.mxu0 0
      %882 = vmatpush2.bf16.xpose.msra.mxu0 0
      %883 = vmatprep.subr.bf16.mxu0 0
      %884 = vmatpush2.bf16.xpose.msra.mxu0 0
      %885 = vmatprep.subr.bf16.mxu0 0
      %886 = vmatpush2.bf16.xpose.msra.mxu0 0
      %887 = vmatprep.subr.bf16.mxu0 0
      %888 = vmatpush2.bf16.xpose.msra.mxu0 0
      %889 = vmatprep.subr.bf16.mxu0 0
      %890 = vmatpush2.bf16.xpose.msra.mxu0 0
      %891 = vmatprep.subr.bf16.mxu0 0
      %892 = vmatpush2.bf16.xpose.msra.mxu0 0
      %893 = vmatprep.mubr.bf16.mxu0 0
      %894 = vmatmul.mubr.bf16.gmra.mxu0 %v850
      %v895 = vpop.f32.mrf.mxu0
      %v896 = vadd.f32 %v519, %v895
      %v897 = vpop.f32.mrf.mxu0
      %v898 = vpop.f32.mrf.mxu0
      %v899 = vadd.f32 %v519, %v898
      %v900 = vpop.f32.mrf.mxu0
      %901 = vmatprep.mubr.bf16.mxu0 0
      %902 = vmatmul.mubr.bf16.gmra.mxu0 %v853
      %v903 = vpop.f32.mrf.mxu0
      %v904 = vadd.f32 %v519, %v903
      %v905 = vpop.f32.mrf.mxu0
      %v906 = vpop.f32.mrf.mxu0
      %v907 = vpop.f32.mrf.mxu0
      %908 = vdwg.mxu0
      %v912 = vunpack.c.l.b16 %v811
      %v913 = vunpack.c.l.b16 %v812
      %v914 = vunpack.c.l.b16 %v813
      %v915 = vpack.c.b16 %v913, %v912
      %v916 = vpack.c.b16 %v914, %v914
      %v920 = vunpack.c.l.b16 %v823
      %v921 = vunpack.c.l.b16 %v824
      %v922 = vunpack.c.l.b16 %v825
      %v923 = vpack.c.b16 %v921, %v920
      %v924 = vpack.c.b16 %v922, %v922
      %v926 = vsel %vm848, %v915, 0
      %v929 = vsel %vm848, %v916, 0
      %v932 = vsel %vm848, %v923, 0
      %v935 = vsel %vm848, %v924, 0
      %937 = vmatprep.subr.bf16.mxu0 0
      %938 = vmatpush1.bf16.xpose.msra.mxu0 0
      %939 = vmatprep.subr.bf16.mxu0 0
      %940 = vmatpush1.bf16.xpose.msra.mxu0 0
      %941 = vmatprep.subr.bf16.mxu0 0
      %942 = vmatpush1.bf16.xpose.msra.mxu0 0
      %943 = vmatprep.subr.bf16.mxu0 0
      %944 = vmatpush1.bf16.xpose.msra.mxu0 0
      %945 = vmatprep.subr.bf16.mxu0 0
      %946 = vmatpush1.bf16.xpose.msra.mxu0 0
      %947 = vmatprep.subr.bf16.mxu0 0
      %948 = vmatpush1.bf16.xpose.msra.mxu0 0
      %949 = vmatprep.subr.bf16.mxu0 0
      %950 = vmatpush1.bf16.xpose.msra.mxu0 %v935
      %951 = vmatprep.subr.bf16.mxu0 0
      %952 = vmatpush1.bf16.xpose.msra.mxu0 %v932
      %953 = vmatprep.subr.bf16.mxu0 0
      %954 = vmatpush2.bf16.xpose.msra.mxu0 0
      %955 = vmatprep.subr.bf16.mxu0 0
      %956 = vmatpush2.bf16.xpose.msra.mxu0 0
      %957 = vmatprep.subr.bf16.mxu0 0
      %958 = vmatpush2.bf16.xpose.msra.mxu0 0
      %959 = vmatprep.subr.bf16.mxu0 0
      %960 = vmatpush2.bf16.xpose.msra.mxu0 0
      %961 = vmatprep.subr.bf16.mxu0 0
      %962 = vmatpush2.bf16.xpose.msra.mxu0 0
      %963 = vmatprep.subr.bf16.mxu0 0
      %964 = vmatpush2.bf16.xpose.msra.mxu0 0
      %965 = vmatprep.subr.bf16.mxu0 0
      %966 = vmatpush2.bf16.xpose.msra.mxu0 0
      %967 = vmatprep.subr.bf16.mxu0 0
      %968 = vmatpush2.bf16.xpose.msra.mxu0 0
      %969 = vmatprep.mubr.bf16.mxu0 0
      %970 = vmatmul.mubr.bf16.gmra.mxu0 %v926
      %v971 = vpop.f32.mrf.mxu0
      %v972 = vadd.f32 %v519, %v971
      %v973 = vpop.f32.mrf.mxu0
      %v974 = vpop.f32.mrf.mxu0
      %v975 = vadd.f32 %v519, %v974
      %v976 = vpop.f32.mrf.mxu0
      %977 = vmatprep.mubr.bf16.mxu0 0
      %978 = vmatmul.mubr.bf16.gmra.mxu0 %v929
      %v979 = vpop.f32.mrf.mxu0
      %v980 = vadd.f32 %v519, %v979
      %v981 = vpop.f32.mrf.mxu0
      %v982 = vpop.f32.mrf.mxu0
      %v983 = vpop.f32.mrf.mxu0
      %984 = vdwg.mxu0
      %v988 = vunpack.c.l.b16 %v814
      %v989 = vunpack.c.l.b16 %v815
      %v990 = vunpack.c.l.b16 %v816
      %v991 = vpack.c.b16 %v989, %v988
      %v992 = vpack.c.b16 %v990, %v990
      %v996 = vunpack.c.l.b16 %v826
      %v997 = vunpack.c.l.b16 %v827
      %v998 = vunpack.c.l.b16 %v828
      %v999 = vpack.c.b16 %v997, %v996
      %v1000 = vpack.c.b16 %v998, %v998
      %v1002 = vsel %vm848, %v991, 0
      %v1005 = vsel %vm848, %v992, 0
      %v1008 = vsel %vm848, %v999, 0
      %v1011 = vsel %vm848, %v1000, 0
      %1013 = vmatprep.subr.bf16.mxu0 0
      %1014 = vmatpush1.bf16.xpose.msra.mxu0 0
      %1015 = vmatprep.subr.bf16.mxu0 0
      %1016 = vmatpush1.bf16.xpose.msra.mxu0 0
      %1017 = vmatprep.subr.bf16.mxu0 0
      %1018 = vmatpush1.bf16.xpose.msra.mxu0 0
      %1019 = vmatprep.subr.bf16.mxu0 0
      %1020 = vmatpush1.bf16.xpose.msra.mxu0 0
      %1021 = vmatprep.subr.bf16.mxu0 0
      %1022 = vmatpush1.bf16.xpose.msra.mxu0 0
      %1023 = vmatprep.subr.bf16.mxu0 0
      %1024 = vmatpush1.bf16.xpose.msra.mxu0 0
      %1025 = vmatprep.subr.bf16.mxu0 0
      %1026 = vmatpush1.bf16.xpose.msra.mxu0 %v1011
      %1027 = vmatprep.subr.bf16.mxu0 0
      %1028 = vmatpush1.bf16.xpose.msra.mxu0 %v1008
      %1029 = vmatprep.subr.bf16.mxu0 0
      %1030 = vmatpush2.bf16.xpose.msra.mxu0 0
      %1031 = vmatprep.subr.bf16.mxu0 0
      %1032 = vmatpush2.bf16.xpose.msra.mxu0 0
      %1033 = vmatprep.subr.bf16.mxu0 0
      %1034 = vmatpush2.bf16.xpose.msra.mxu0 0
      %1035 = vmatprep.subr.bf16.mxu0 0
      %1036 = vmatpush2.bf16.xpose.msra.mxu0 0
      %1037 = vmatprep.subr.bf16.mxu0 0
      %1038 = vmatpush2.bf16.xpose.msra.mxu0 0
      %1039 = vmatprep.subr.bf16.mxu0 0
      %1040 = vmatpush2.bf16.xpose.msra.mxu0 0
      %1041 = vmatprep.subr.bf16.mxu0 0
      %1042 = vmatpush2.bf16.xpose.msra.mxu0 0
      %1043 = vmatprep.subr.bf16.mxu0 0
      %1044 = vmatpush2.bf16.xpose.msra.mxu0 0
      %1045 = vmatprep.mubr.bf16.mxu0 0
      %1046 = vmatmul.mubr.bf16.gmra.mxu0 %v1002
      %v1047 = vpop.f32.mrf.mxu0
      %v1048 = vadd.f32 %v519, %v1047
      %v1049 = vpop.f32.mrf.mxu0
      %v1050 = vpop.f32.mrf.mxu0
      %v1051 = vadd.f32 %v519, %v1050
      %v1052 = vpop.f32.mrf.mxu0
      %1053 = vmatprep.mubr.bf16.mxu0 0
      %1054 = vmatmul.mubr.bf16.gmra.mxu0 %v1005
      %v1055 = vpop.f32.mrf.mxu0
      %v1056 = vadd.f32 %v519, %v1055
      %v1057 = vpop.f32.mrf.mxu0
      %v1058 = vpop.f32.mrf.mxu0
      %v1059 = vpop.f32.mrf.mxu0
      %1060 = vdwg.mxu0
      %v1064 = vunpack.c.l.b16 %v817
      %v1065 = vunpack.c.l.b16 %v818
      %v1066 = vunpack.c.l.b16 %v819
      %v1067 = vpack.c.b16 %v1065, %v1064
      %v1068 = vpack.c.b16 %v1066, %v1066
      %v1072 = vunpack.c.l.b16 %v829
      %v1073 = vunpack.c.l.b16 %v830
      %v1074 = vunpack.c.l.b16 %v831
      %v1075 = vpack.c.b16 %v1073, %v1072
      %v1076 = vpack.c.b16 %v1074, %v1074
      %v1078 = vsel %vm848, %v1067, 0
      %v1081 = vsel %vm848, %v1068, 0
      %v1084 = vsel %vm848, %v1075, 0
      %v1087 = vsel %vm848, %v1076, 0
      %1089 = vmatprep.subr.bf16.mxu0 0
      %1090 = vmatpush1.bf16.xpose.msra.mxu0 0
      %1091 = vmatprep.subr.bf16.mxu0 0
      %1092 = vmatpush1.bf16.xpose.msra.mxu0 0
      %1093 = vmatprep.subr.bf16.mxu0 0
      %1094 = vmatpush1.bf16.xpose.msra.mxu0 0
      %1095 = vmatprep.subr.bf16.mxu0 0
      %1096 = vmatpush1.bf16.xpose.msra.mxu0 0
      %1097 = vmatprep.subr.bf16.mxu0 0
      %1098 = vmatpush1.bf16.xpose.msra.mxu0 0
      %1099 = vmatprep.subr.bf16.mxu0 0
      %1100 = vmatpush1.bf16.xpose.msra.mxu0 0
      %1101 = vmatprep.subr.bf16.mxu0 0
      %1102 = vmatpush1.bf16.xpose.msra.mxu0 %v1087
      %1103 = vmatprep.subr.bf16.mxu0 0
      %1104 = vmatpush1.bf16.xpose.msra.mxu0 %v1084
      %1105 = vmatprep.subr.bf16.mxu0 0
      %1106 = vmatpush2.bf16.xpose.msra.mxu0 0
      %1107 = vmatprep.subr.bf16.mxu0 0
      %1108 = vmatpush2.bf16.xpose.msra.mxu0 0
      %1109 = vmatprep.subr.bf16.mxu0 0
      %1110 = vmatpush2.bf16.xpose.msra.mxu0 0
      %1111 = vmatprep.subr.bf16.mxu0 0
      %1112 = vmatpush2.bf16.xpose.msra.mxu0 0
      %1113 = vmatprep.subr.bf16.mxu0 0
      %1114 = vmatpush2.bf16.xpose.msra.mxu0 0
      %1115 = vmatprep.subr.bf16.mxu0 0
      %1116 = vmatpush2.bf16.xpose.msra.mxu0 0
      %1117 = vmatprep.subr.bf16.mxu0 0
      %1118 = vmatpush2.bf16.xpose.msra.mxu0 0
      %1119 = vmatprep.subr.bf16.mxu0 0
      %1120 = vmatpush2.bf16.xpose.msra.mxu0 0
      %1121 = vmatprep.mubr.bf16.mxu0 0
      %1122 = vmatmul.mubr.bf16.gmra.mxu0 %v1078
      %v1123 = vpop.f32.mrf.mxu0
      %v1124 = vadd.f32 %v519, %v1123
      %v1125 = vpop.f32.mrf.mxu0
      %v1126 = vpop.f32.mrf.mxu0
      %v1127 = vadd.f32 %v519, %v1126
      %v1128 = vpop.f32.mrf.mxu0
      %1129 = vmatprep.mubr.bf16.mxu0 0
      %1130 = vmatmul.mubr.bf16.gmra.mxu0 %v1081
      %v1131 = vpop.f32.mrf.mxu0
      %v1132 = vadd.f32 %v519, %v1131
      %v1133 = vpop.f32.mrf.mxu0
      %v1134 = vpop.f32.mrf.mxu0
      %v1135 = vpop.f32.mrf.mxu0
      %1136 = vdwg.mxu0
      %vm1137 = vcmask 195584
      %v1138 = vsel %vm1137, %v896, -inf
      %1139 = vmax.xlane.f32.xlu0 %v1138
      %v1140 = vpop.xlane.xlu0 %1139
      %v1141 = vsel %vm1137, %v899, -inf
      %1142 = vmax.xlane.f32.xlu0 %v1141
      %v1143 = vpop.xlane.xlu0 %1142
      %v1144 = vsel %vm1137, %v904, -inf
      %1145 = vmax.xlane.f32.xlu0 %v1144
      %v1146 = vpop.xlane.xlu0 %1145
      %v1147 = vsel %vm1137, %v972, -inf
      %1148 = vmax.xlane.f32.xlu0 %v1147
      %v1149 = vpop.xlane.xlu0 %1148
      %v1150 = vsel %vm1137, %v975, -inf
      %1151 = vmax.xlane.f32.xlu0 %v1150
      %v1152 = vpop.xlane.xlu0 %1151
      %v1153 = vsel %vm1137, %v980, -inf
      %1154 = vmax.xlane.f32.xlu0 %v1153
      %v1155 = vpop.xlane.xlu0 %1154
      %v1156 = vsel %vm1137, %v1048, -inf
      %1157 = vmax.xlane.f32.xlu0 %v1156
      %v1158 = vpop.xlane.xlu0 %1157
      %v1159 = vsel %vm1137, %v1051, -inf
      %1160 = vmax.xlane.f32.xlu0 %v1159
      %v1161 = vpop.xlane.xlu0 %1160
      %v1162 = vsel %vm1137, %v1056, -inf
      %1163 = vmax.xlane.f32.xlu0 %v1162
      %v1164 = vpop.xlane.xlu0 %1163
      %v1165 = vsel %vm1137, %v1124, -inf
      %1166 = vmax.xlane.f32.xlu0 %v1165
      %v1167 = vpop.xlane.xlu0 %1166
      %v1168 = vsel %vm1137, %v1127, -inf
      %1169 = vmax.xlane.f32.xlu0 %v1168
      %v1170 = vpop.xlane.xlu0 %1169
      %v1171 = vsel %vm1137, %v1132, -inf
      %1172 = vmax.xlane.f32.xlu0 %v1171
      %v1173 = vpop.xlane.xlu0 %1172
      %v1174 = vsub.f32 %v896, %v1140
      %v1175 = vsub.f32 %v899, %v1143
      %v1176 = vsub.f32 %v904, %v1146
      %v1177 = vsub.f32 %v972, %v1149
      %v1178 = vsub.f32 %v975, %v1152
      %v1179 = vsub.f32 %v980, %v1155
      %v1180 = vsub.f32 %v1048, %v1158
      %v1181 = vsub.f32 %v1051, %v1161
      %v1182 = vsub.f32 %v1056, %v1164
      %v1183 = vsub.f32 %v1124, %v1167
      %v1184 = vsub.f32 %v1127, %v1170
      %v1185 = vsub.f32 %v1132, %v1173
      %v1186 = vmul.f32 %v1174, 1.442695
      %v1187 = vpow.pop %v1186
      %v1188 = vmul.f32 %v1175, 1.442695
      %v1189 = vpow.pop %v1188
      %v1190 = vmul.f32 %v1176, 1.442695
      %v1191 = vpow.pop %v1190
      %v1192 = vmul.f32 %v1177, 1.442695
      %v1193 = vpow.pop %v1192
      %v1194 = vmul.f32 %v1178, 1.442695
      %v1195 = vpow.pop %v1194
      %v1196 = vmul.f32 %v1179, 1.442695
      %v1197 = vpow.pop %v1196
      %v1198 = vmul.f32 %v1180, 1.442695
      %v1199 = vpow.pop %v1198
      %v1200 = vmul.f32 %v1181, 1.442695
      %v1201 = vpow.pop %v1200
      %v1202 = vmul.f32 %v1182, 1.442695
      %v1203 = vpow.pop %v1202
      %v1204 = vmul.f32 %v1183, 1.442695
      %v1205 = vpow.pop %v1204
      %v1206 = vmul.f32 %v1184, 1.442695
      %v1207 = vpow.pop %v1206
      %v1208 = vmul.f32 %v1185, 1.442695
      %v1209 = vpow.pop %v1208
      %v1210 = vsel %vm1137, %v1187, 0.0
      %1211 = vadd.xlane.f32.xlu0 %v1210
      %v1212 = vpop.xlane.xlu0 %1211
      %v1213 = vsel %vm1137, %v1189, 0.0
      %1214 = vadd.xlane.f32.xlu0 %v1213
      %v1215 = vpop.xlane.xlu0 %1214
      %v1216 = vsel %vm1137, %v1191, 0.0
      %1217 = vadd.xlane.f32.xlu0 %v1216
      %v1218 = vpop.xlane.xlu0 %1217
      %v1219 = vsel %vm1137, %v1193, 0.0
      %1220 = vadd.xlane.f32.xlu0 %v1219
      %v1221 = vpop.xlane.xlu0 %1220
      %v1222 = vsel %vm1137, %v1195, 0.0
      %1223 = vadd.xlane.f32.xlu0 %v1222
      %v1224 = vpop.xlane.xlu0 %1223
      %v1225 = vsel %vm1137, %v1197, 0.0
      %1226 = vadd.xlane.f32.xlu0 %v1225
      %v1227 = vpop.xlane.xlu0 %1226
      %v1228 = vsel %vm1137, %v1199, 0.0
      %1229 = vadd.xlane.f32.xlu0 %v1228
      %v1230 = vpop.xlane.xlu0 %1229
      %v1231 = vsel %vm1137, %v1201, 0.0
      %1232 = vadd.xlane.f32.xlu0 %v1231
      %v1233 = vpop.xlane.xlu0 %1232
      %v1234 = vsel %vm1137, %v1203, 0.0
      %1235 = vadd.xlane.f32.xlu0 %v1234
      %v1236 = vpop.xlane.xlu0 %1235
      %v1237 = vsel %vm1137, %v1205, 0.0
      %1238 = vadd.xlane.f32.xlu0 %v1237
      %v1239 = vpop.xlane.xlu0 %1238
      %v1240 = vsel %vm1137, %v1207, 0.0
      %1241 = vadd.xlane.f32.xlu0 %v1240
      %v1242 = vpop.xlane.xlu0 %1241
      %v1243 = vsel %vm1137, %v1209, 0.0
      %1244 = vadd.xlane.f32.xlu0 %v1243
      %v1245 = vpop.xlane.xlu0 %1244
      %v1246 = vrcp.pop %v1212
      %v1247 = vrcp.pop %v1215
      %v1248 = vrcp.pop %v1218
      %v1249 = vrcp.pop %v1221
      %v1250 = vrcp.pop %v1224
      %v1251 = vrcp.pop %v1227
      %v1252 = vrcp.pop %v1230
      %v1253 = vrcp.pop %v1233
      %v1254 = vrcp.pop %v1236
      %v1255 = vrcp.pop %v1239
      %v1256 = vrcp.pop %v1242
      %v1257 = vrcp.pop %v1245
      %v1258 = vmul.f32 %v1187, %v1246
      %v1259 = vmul.f32 %v1189, %v1247
      %v1260 = vmul.f32 %v1191, %v1248
      %v1261 = vmul.f32 %v1193, %v1249
      %v1262 = vmul.f32 %v1195, %v1250
      %v1263 = vmul.f32 %v1197, %v1251
      %v1264 = vmul.f32 %v1199, %v1252
      %v1265 = vmul.f32 %v1201, %v1253
      %v1266 = vmul.f32 %v1203, %v1254
      %v1267 = vmul.f32 %v1205, %v1255
      %v1268 = vmul.f32 %v1207, %v1256
      %v1269 = vmul.f32 %v1209, %v1257
      %v1270 = vpack.c.bf16 %v1259, %v1258
      %v1271 = vpack.c.bf16 %v1260, %v1260
      %v1272 = vpack.c.bf16 %v1262, %v1261
      %v1273 = vpack.c.bf16 %v1263, %v1263
      %v1274 = vpack.c.bf16 %v1265, %v1264
      %v1275 = vpack.c.bf16 %v1266, %v1266
      %v1276 = vpack.c.bf16 %v1268, %v1267
      %v1277 = vpack.c.bf16 %v1269, %v1269
      %v1278 = vld [vmem:[#allocation4] sm:$0xf]
      %v1279 = vld [vmem:[#allocation4 + $0x4] sm:$0xf]
      %v1280 = vld [vmem:[#allocation4 + $0x8] sm:$0xf]
      %v1281 = vld [vmem:[#allocation4 + $0xc] sm:$0xf]
      %v1282 = vld [vmem:[#allocation4 + $0x10] sm:$0xf]
      %v1283 = vld [vmem:[#allocation4 + $0x14] sm:$0xf]
      %v1284 = vld [vmem:[#allocation4 + $0x18] sm:$0xf]
      %v1285 = vld [vmem:[#allocation4 + $0x1c] sm:$0xf]
      %v1286 = vld [vmem:[#allocation4 + $0x20] sm:$0xf]
      %v1287 = vld [vmem:[#allocation4 + $0x24] sm:$0xf]
      %v1288 = vld [vmem:[#allocation4 + $0x28] sm:$0xf]
      %v1289 = vld [vmem:[#allocation4 + $0x2c] sm:$0xf]
      %v1293 = vunpack.c.l.b16 %v1278
      %v1294 = vunpack.c.l.b16 %v1279
      %v1295 = vunpack.c.l.b16 %v1280
      %v1296 = vpack.c.b16 %v1294, %v1293
      %v1297 = vpack.c.b16 %v1295, %v1295
      %v1300 = vsel %vm1137, %v1270, 0
      %v1303 = vsel %vm1137, %v1271, 0
      %v1306 = vsel %vm409, %v1297, 0
      %1308 = vmatprep.subr.bf16.mxu0 0
      %1309 = vmatpush1.bf16.msra.mxu0 0
      %1310 = vmatprep.subr.bf16.mxu0 0
      %1311 = vmatpush1.bf16.msra.mxu0 0
      %1312 = vmatprep.subr.bf16.mxu0 0
      %1313 = vmatpush1.bf16.msra.mxu0 0
      %1314 = vmatprep.subr.bf16.mxu0 0
      %1315 = vmatpush1.bf16.msra.mxu0 0
      %1316 = vmatprep.subr.bf16.mxu0 0
      %1317 = vmatpush1.bf16.msra.mxu0 0
      %1318 = vmatprep.subr.bf16.mxu0 0
      %1319 = vmatpush1.bf16.msra.mxu0 0
      %1320 = vmatprep.subr.bf16.mxu0 0
      %1321 = vmatpush1.bf16.msra.mxu0 %v1306
      %1322 = vmatprep.subr.bf16.mxu0 0
      %1323 = vmatpush1.bf16.msra.mxu0 %v1296
      %1324 = vmatprep.subr.bf16.mxu0 0
      %1325 = vmatpush2.bf16.msra.mxu0 0
      %1326 = vmatprep.subr.bf16.mxu0 0
      %1327 = vmatpush2.bf16.msra.mxu0 0
      %1328 = vmatprep.subr.bf16.mxu0 0
      %1329 = vmatpush2.bf16.msra.mxu0 0
      %1330 = vmatprep.subr.bf16.mxu0 0
      %1331 = vmatpush2.bf16.msra.mxu0 0
      %1332 = vmatprep.subr.bf16.mxu0 0
      %1333 = vmatpush2.bf16.msra.mxu0 0
      %1334 = vmatprep.subr.bf16.mxu0 0
      %1335 = vmatpush2.bf16.msra.mxu0 0
      %1336 = vmatprep.subr.bf16.mxu0 0
      %1337 = vmatpush2.bf16.msra.mxu0 0
      %1338 = vmatprep.subr.bf16.mxu0 0
      %1339 = vmatpush2.bf16.msra.mxu0 0
      %1340 = vmatprep.mubr.bf16.mxu0 0
      %1341 = vmatmul.mubr.bf16.gmra.mxu0 %v1300
      %v1342 = vpop.f32.mrf.mxu0
      %v1343 = vadd.f32 0.0, %v1342
      %v1344 = vpop.f32.mrf.mxu0
      %v1345 = vpop.f32.mrf.mxu0
      %v1346 = vadd.f32 0.0, %v1345
      %v1347 = vpop.f32.mrf.mxu0
      %1348 = vmatprep.mubr.bf16.mxu0 0
      %1349 = vmatmul.mubr.bf16.gmra.mxu0 %v1303
      %v1350 = vpop.f32.mrf.mxu0
      %v1351 = vadd.f32 0.0, %v1350
      %v1352 = vpop.f32.mrf.mxu0
      %v1353 = vpop.f32.mrf.mxu0
      %v1354 = vpop.f32.mrf.mxu0
      %1355 = vdwg.mxu0
      %v1359 = vunpack.c.l.b16 %v1281
      %v1360 = vunpack.c.l.b16 %v1282
      %v1361 = vunpack.c.l.b16 %v1283
      %v1362 = vpack.c.b16 %v1360, %v1359
      %v1363 = vpack.c.b16 %v1361, %v1361
      %v1366 = vsel %vm1137, %v1272, 0
      %v1369 = vsel %vm1137, %v1273, 0
      %v1372 = vsel %vm409, %v1363, 0
      %1374 = vmatprep.subr.bf16.mxu0 0
      %1375 = vmatpush1.bf16.msra.mxu0 0
      %1376 = vmatprep.subr.bf16.mxu0 0
      %1377 = vmatpush1.bf16.msra.mxu0 0
      %1378 = vmatprep.subr.bf16.mxu0 0
      %1379 = vmatpush1.bf16.msra.mxu0 0
      %1380 = vmatprep.subr.bf16.mxu0 0
      %1381 = vmatpush1.bf16.msra.mxu0 0
      %1382 = vmatprep.subr.bf16.mxu0 0
      %1383 = vmatpush1.bf16.msra.mxu0 0
      %1384 = vmatprep.subr.bf16.mxu0 0
      %1385 = vmatpush1.bf16.msra.mxu0 0
      %1386 = vmatprep.subr.bf16.mxu0 0
      %1387 = vmatpush1.bf16.msra.mxu0 %v1372
      %1388 = vmatprep.subr.bf16.mxu0 0
      %1389 = vmatpush1.bf16.msra.mxu0 %v1362
      %1390 = vmatprep.subr.bf16.mxu0 0
      %1391 = vmatpush2.bf16.msra.mxu0 0
      %1392 = vmatprep.subr.bf16.mxu0 0
      %1393 = vmatpush2.bf16.msra.mxu0 0
      %1394 = vmatprep.subr.bf16.mxu0 0
      %1395 = vmatpush2.bf16.msra.mxu0 0
      %1396 = vmatprep.subr.bf16.mxu0 0
      %1397 = vmatpush2.bf16.msra.mxu0 0
      %1398 = vmatprep.subr.bf16.mxu0 0
      %1399 = vmatpush2.bf16.msra.mxu0 0
      %1400 = vmatprep.subr.bf16.mxu0 0
      %1401 = vmatpush2.bf16.msra.mxu0 0
      %1402 = vmatprep.subr.bf16.mxu0 0
      %1403 = vmatpush2.bf16.msra.mxu0 0
      %1404 = vmatprep.subr.bf16.mxu0 0
      %1405 = vmatpush2.bf16.msra.mxu0 0
      %1406 = vmatprep.mubr.bf16.mxu0 0
      %1407 = vmatmul.mubr.bf16.gmra.mxu0 %v1366
      %v1408 = vpop.f32.mrf.mxu0
      %v1409 = vadd.f32 0.0, %v1408
      %v1410 = vpop.f32.mrf.mxu0
      %v1411 = vpop.f32.mrf.mxu0
      %v1412 = vadd.f32 0.0, %v1411
      %v1413 = vpop.f32.mrf.mxu0
      %1414 = vmatprep.mubr.bf16.mxu0 0
      %1415 = vmatmul.mubr.bf16.gmra.mxu0 %v1369
      %v1416 = vpop.f32.mrf.mxu0
      %v1417 = vadd.f32 0.0, %v1416
      %v1418 = vpop.f32.mrf.mxu0
      %v1419 = vpop.f32.mrf.mxu0
      %v1420 = vpop.f32.mrf.mxu0
      %1421 = vdwg.mxu0
      %v1425 = vunpack.c.l.b16 %v1284
      %v1426 = vunpack.c.l.b16 %v1285
      %v1427 = vunpack.c.l.b16 %v1286
      %v1428 = vpack.c.b16 %v1426, %v1425
      %v1429 = vpack.c.b16 %v1427, %v1427
      %v1432 = vsel %vm1137, %v1274, 0
      %v1435 = vsel %vm1137, %v1275, 0
      %v1438 = vsel %vm409, %v1429, 0
      %1440 = vmatprep.subr.bf16.mxu0 0
      %1441 = vmatpush1.bf16.msra.mxu0 0
      %1442 = vmatprep.subr.bf16.mxu0 0
      %1443 = vmatpush1.bf16.msra.mxu0 0
      %1444 = vmatprep.subr.bf16.mxu0 0
      %1445 = vmatpush1.bf16.msra.mxu0 0
      %1446 = vmatprep.subr.bf16.mxu0 0
      %1447 = vmatpush1.bf16.msra.mxu0 0
      %1448 = vmatprep.subr.bf16.mxu0 0
      %1449 = vmatpush1.bf16.msra.mxu0 0
      %1450 = vmatprep.subr.bf16.mxu0 0
      %1451 = vmatpush1.bf16.msra.mxu0 0
      %1452 = vmatprep.subr.bf16.mxu0 0
      %1453 = vmatpush1.bf16.msra.mxu0 %v1438
      %1454 = vmatprep.subr.bf16.mxu0 0
      %1455 = vmatpush1.bf16.msra.mxu0 %v1428
      %1456 = vmatprep.subr.bf16.mxu0 0
      %1457 = vmatpush2.bf16.msra.mxu0 0
      %1458 = vmatprep.subr.bf16.mxu0 0
      %1459 = vmatpush2.bf16.msra.mxu0 0
      %1460 = vmatprep.subr.bf16.mxu0 0
      %1461 = vmatpush2.bf16.msra.mxu0 0
      %1462 = vmatprep.subr.bf16.mxu0 0
      %1463 = vmatpush2.bf16.msra.mxu0 0
      %1464 = vmatprep.subr.bf16.mxu0 0
      %1465 = vmatpush2.bf16.msra.mxu0 0
      %1466 = vmatprep.subr.bf16.mxu0 0
      %1467 = vmatpush2.bf16.msra.mxu0 0
      %1468 = vmatprep.subr.bf16.mxu0 0
      %1469 = vmatpush2.bf16.msra.mxu0 0
      %1470 = vmatprep.subr.bf16.mxu0 0
      %1471 = vmatpush2.bf16.msra.mxu0 0
      %1472 = vmatprep.mubr.bf16.mxu0 0
      %1473 = vmatmul.mubr.bf16.gmra.mxu0 %v1432
      %v1474 = vpop.f32.mrf.mxu0
      %v1475 = vadd.f32 0.0, %v1474
      %v1476 = vpop.f32.mrf.mxu0
      %v1477 = vpop.f32.mrf.mxu0
      %v1478 = vadd.f32 0.0, %v1477
      %v1479 = vpop.f32.mrf.mxu0
      %1480 = vmatprep.mubr.bf16.mxu0 0
      %1481 = vmatmul.mubr.bf16.gmra.mxu0 %v1435
      %v1482 = vpop.f32.mrf.mxu0
      %v1483 = vadd.f32 0.0, %v1482
      %v1484 = vpop.f32.mrf.mxu0
      %v1485 = vpop.f32.mrf.mxu0
      %v1486 = vpop.f32.mrf.mxu0
      %1487 = vdwg.mxu0
      %v1491 = vunpack.c.l.b16 %v1287
      %v1492 = vunpack.c.l.b16 %v1288
      %v1493 = vunpack.c.l.b16 %v1289
      %v1494 = vpack.c.b16 %v1492, %v1491
      %v1495 = vpack.c.b16 %v1493, %v1493
      %v1498 = vsel %vm1137, %v1276, 0
      %v1501 = vsel %vm1137, %v1277, 0
      %v1504 = vsel %vm409, %v1495, 0
      %1506 = vmatprep.subr.bf16.mxu0 0
      %1507 = vmatpush1.bf16.msra.mxu0 0
      %1508 = vmatprep.subr.bf16.mxu0 0
      %1509 = vmatpush1.bf16.msra.mxu0 0
      %1510 = vmatprep.subr.bf16.mxu0 0
      %1511 = vmatpush1.bf16.msra.mxu0 0
      %1512 = vmatprep.subr.bf16.mxu0 0
      %1513 = vmatpush1.bf16.msra.mxu0 0
      %1514 = vmatprep.subr.bf16.mxu0 0
      %1515 = vmatpush1.bf16.msra.mxu0 0
      %1516 = vmatprep.subr.bf16.mxu0 0
      %1517 = vmatpush1.bf16.msra.mxu0 0
      %1518 = vmatprep.subr.bf16.mxu0 0
      %1519 = vmatpush1.bf16.msra.mxu0 %v1504
      %1520 = vmatprep.subr.bf16.mxu0 0
      %1521 = vmatpush1.bf16.msra.mxu0 %v1494
      %1522 = vmatprep.subr.bf16.mxu0 0
      %1523 = vmatpush2.bf16.msra.mxu0 0
      %1524 = vmatprep.subr.bf16.mxu0 0
      %1525 = vmatpush2.bf16.msra.mxu0 0
      %1526 = vmatprep.subr.bf16.mxu0 0
      %1527 = vmatpush2.bf16.msra.mxu0 0
      %1528 = vmatprep.subr.bf16.mxu0 0
      %1529 = vmatpush2.bf16.msra.mxu0 0
      %1530 = vmatprep.subr.bf16.mxu0 0
      %1531 = vmatpush2.bf16.msra.mxu0 0
      %1532 = vmatprep.subr.bf16.mxu0 0
      %1533 = vmatpush2.bf16.msra.mxu0 0
      %1534 = vmatprep.subr.bf16.mxu0 0
      %1535 = vmatpush2.bf16.msra.mxu0 0
      %1536 = vmatprep.subr.bf16.mxu0 0
      %1537 = vmatpush2.bf16.msra.mxu0 0
      %1538 = vmatprep.mubr.bf16.mxu0 0
      %1539 = vmatmul.mubr.bf16.gmra.mxu0 %v1498
      %v1540 = vpop.f32.mrf.mxu0
      %v1541 = vadd.f32 0.0, %v1540
      %v1542 = vpop.f32.mrf.mxu0
      %v1543 = vpop.f32.mrf.mxu0
      %v1544 = vadd.f32 0.0, %v1543
      %v1545 = vpop.f32.mrf.mxu0
      %1546 = vmatprep.mubr.bf16.mxu0 0
      %1547 = vmatmul.mubr.bf16.gmra.mxu0 %v1501
      %v1548 = vpop.f32.mrf.mxu0
      %v1549 = vadd.f32 0.0, %v1548
      %v1550 = vpop.f32.mrf.mxu0
      %v1551 = vpop.f32.mrf.mxu0
      %v1552 = vpop.f32.mrf.mxu0
      %1553 = vdwg.mxu0
      %v1554 = vpack.c.bf16 %v1346, %v1343
      %v1555 = vpack.c.bf16 %v1351, %v1351
      %v1558 = vunpack.c.l.b16 %v1554
      %v1559 = vunpack.c.h.b16 %v1554
      %v1560 = vunpack.c.l.b16 %v1555
      %v1561 = vpack.c.b16 %v1558, %v1558
      %v1562 = vpack.c.b16 %v1559, %v1559
      %v1563 = vpack.c.b16 %v1560, %v1560
      %1567 = vst.msk [vmem:[#allocation5] sm:$0xf] %vm663, %v1561
      %1568 = vst.msk [vmem:[#allocation5 + $0x4] sm:$0xf] %vm663, %v1562
      %1569 = vst.msk [vmem:[#allocation5 + $0x8] sm:$0xf] %vm663, %v1563
      %v1570 = vpack.c.bf16 %v1412, %v1409
      %v1571 = vpack.c.bf16 %v1417, %v1417
      %v1574 = vunpack.c.l.b16 %v1570
      %v1575 = vunpack.c.h.b16 %v1570
      %v1576 = vunpack.c.l.b16 %v1571
      %v1577 = vpack.c.b16 %v1574, %v1574
      %v1578 = vpack.c.b16 %v1575, %v1575
      %v1579 = vpack.c.b16 %v1576, %v1576
      %1580 = vrot.lane.b32.xlu0 %v1577, 8
      %v1581 = vpop.permute.xlu0 %1580
      %1582 = vrot.lane.b32.xlu0 %v1578, 8
      %v1583 = vpop.permute.xlu0 %1582
      %1584 = vrot.lane.b32.xlu0 %v1579, 8
      %v1585 = vpop.permute.xlu0 %1584
      %vm1589 = vcmask 126016
      %1590 = vst.msk [vmem:[#allocation5] sm:$0xf] %vm1589, %v1581
      %1591 = vst.msk [vmem:[#allocation5 + $0x4] sm:$0xf] %vm1589, %v1583
      %1592 = vst.msk [vmem:[#allocation5 + $0x8] sm:$0xf] %vm1589, %v1585
      %v1593 = vpack.c.bf16 %v1478, %v1475
      %v1594 = vpack.c.bf16 %v1483, %v1483
      %v1597 = vunpack.c.l.b16 %v1593
      %v1598 = vunpack.c.h.b16 %v1593
      %v1599 = vunpack.c.l.b16 %v1594
      %v1600 = vpack.c.b16 %v1597, %v1597
      %v1601 = vpack.c.b16 %v1598, %v1598
      %v1602 = vpack.c.b16 %v1599, %v1599
      %1603 = vrot.lane.b32.xlu0 %v1600, 16
      %v1604 = vpop.permute.xlu0 %1603
      %1605 = vrot.lane.b32.xlu0 %v1601, 16
      %v1606 = vpop.permute.xlu0 %1605
      %1607 = vrot.lane.b32.xlu0 %v1602, 16
      %v1608 = vpop.permute.xlu0 %1607
      %vm1612 = vcmask 191616
      %1613 = vst.msk [vmem:[#allocation5] sm:$0xf] %vm1612, %v1604
      %1614 = vst.msk [vmem:[#allocation5 + $0x4] sm:$0xf] %vm1612, %v1606
      %1615 = vst.msk [vmem:[#allocation5 + $0x8] sm:$0xf] %vm1612, %v1608
      %v1616 = vpack.c.bf16 %v1544, %v1541
      %v1617 = vpack.c.bf16 %v1549, %v1549
      %v1620 = vunpack.c.l.b16 %v1616
      %v1621 = vunpack.c.h.b16 %v1616
      %v1622 = vunpack.c.l.b16 %v1617
      %v1623 = vpack.c.b16 %v1620, %v1620
      %v1624 = vpack.c.b16 %v1621, %v1621
      %v1625 = vpack.c.b16 %v1622, %v1622
      %1626 = vrot.lane.b32.xlu0 %v1623, 24
      %v1627 = vpop.permute.xlu0 %1626
      %1628 = vrot.lane.b32.xlu0 %v1624, 24
      %v1629 = vpop.permute.xlu0 %1628
      %1630 = vrot.lane.b32.xlu0 %v1625, 24
      %v1631 = vpop.permute.xlu0 %1630
      %vm1635 = vcmask 257216
      %1636 = vst.msk [vmem:[#allocation5] sm:$0xf] %vm1635, %v1627
      %1637 = vst.msk [vmem:[#allocation5 + $0x4] sm:$0xf] %vm1635, %v1629
      %1638 = vst.msk [vmem:[#allocation5 + $0x8] sm:$0xf] %vm1635, %v1631
      %v1639 = vld [vmem:[#allocation5] sm:$0xf]
      %v1640 = vld [vmem:[#allocation5 + $0x4] sm:$0xf]
      %v1641 = vld [vmem:[#allocation5 + $0x8] sm:$0xf]
      %v1642 = vld [vmem:[%s6] sm:$0xf]
      %v1643 = vld [vmem:[%s6 + $0x4] sm:$0xf]
      %v1644 = vld [vmem:[%s6 + $0x8] sm:$0xf]
      %v1645 = vld [vmem:[%s6 + $0xc] sm:$0xf]
      %v1649 = vunpack.c.l.b16 %v1639
      %v1650 = vunpack.c.l.b16 %v1640
      %v1651 = vunpack.c.l.b16 %v1641
      %v1652 = vpack.c.b16 %v1650, %v1649
      %v1653 = vpack.c.b16 %v1651, %v1651
      %v1658 = vunpack.c.l.b16 %v1642
      %v1659 = vunpack.c.l.b16 %v1643
      %v1660 = vunpack.c.l.b16 %v1644
      %v1661 = vunpack.c.l.b16 %v1645
      %v1662 = vpack.c.b16 %v1659, %v1658
      %v1663 = vpack.c.b16 %v1661, %v1660
      %v1667 = vsel %vm461, %v1652, 0
      %v1670 = vsel %vm461, %v1653, 0
      %1672 = vmatprep.subr.bf16.mxu0 0
      %1673 = vmatpush1.bf16.msra.mxu0 0
      %1674 = vmatprep.subr.bf16.mxu0 0
      %1675 = vmatpush1.bf16.msra.mxu0 0
      %1676 = vmatprep.subr.bf16.mxu0 0
      %1677 = vmatpush1.bf16.msra.mxu0 0
      %1678 = vmatprep.subr.bf16.mxu0 0
      %1679 = vmatpush1.bf16.msra.mxu0 0
      %1680 = vmatprep.subr.bf16.mxu0 0
      %1681 = vmatpush1.bf16.msra.mxu0 0
      %1682 = vmatprep.subr.bf16.mxu0 0
      %1683 = vmatpush1.bf16.msra.mxu0 0
      %1684 = vmatprep.subr.bf16.mxu0 0
      %1685 = vmatpush1.bf16.msra.mxu0 %v1663
      %1686 = vmatprep.subr.bf16.mxu0 0
      %1687 = vmatpush1.bf16.msra.mxu0 %v1662
      %1688 = vmatprep.subr.bf16.mxu0 0
      %1689 = vmatpush2.bf16.msra.mxu0 0
      %1690 = vmatprep.subr.bf16.mxu0 0
      %1691 = vmatpush2.bf16.msra.mxu0 0
      %1692 = vmatprep.subr.bf16.mxu0 0
      %1693 = vmatpush2.bf16.msra.mxu0 0
      %1694 = vmatprep.subr.bf16.mxu0 0
      %1695 = vmatpush2.bf16.msra.mxu0 0
      %1696 = vmatprep.subr.bf16.mxu0 0
      %1697 = vmatpush2.bf16.msra.mxu0 0
      %1698 = vmatprep.subr.bf16.mxu0 0
      %1699 = vmatpush2.bf16.msra.mxu0 0
      %1700 = vmatprep.subr.bf16.mxu0 0
      %1701 = vmatpush2.bf16.msra.mxu0 0
      %1702 = vmatprep.subr.bf16.mxu0 0
      %1703 = vmatpush2.bf16.msra.mxu0 0
      %1704 = vmatprep.mubr.bf16.mxu0 0
      %1705 = vmatmul.mubr.bf16.gmra.mxu0 %v1667
      %v1706 = vpop.f32.mrf.mxu0
      %v1707 = vadd.f32 0.0, %v1706
      %v1708 = vpop.f32.mrf.mxu0
      %v1709 = vpop.f32.mrf.mxu0
      %v1710 = vadd.f32 0.0, %v1709
      %v1711 = vpop.f32.mrf.mxu0
      %1712 = vmatprep.mubr.bf16.mxu0 0
      %1713 = vmatmul.mubr.bf16.gmra.mxu0 %v1670
      %v1714 = vpop.f32.mrf.mxu0
      %v1715 = vadd.f32 0.0, %v1714
      %v1716 = vpop.f32.mrf.mxu0
      %v1717 = vpop.f32.mrf.mxu0
      %v1718 = vpop.f32.mrf.mxu0
      %1719 = vdwg.mxu0
      %v1720 = vadd.f32 %v513, %v1707
      %v1721 = vadd.f32 %v514, %v1710
      %v1722 = vadd.f32 %v515, %v1715
      %v1723 = vlaneseq
      %v1724 = vshrl.u32 %v1723, 7
      %v1725 = vsub.s32 5, %v1724
      %v1726 = vrot.slane %v520, %v1725
      %v1727 = vadd.f32 %v1720, %v1726
      %v1728 = vadd.f32 %v1721, %v1726
      %v1729 = vadd.f32 %v1722, %v1726
      %v1730 = vsel %vm461, %v1727, 0.0
      %1731 = vadd.xlane.f32.xlu0 %v1730
      %v1732 = vpop.xlane.xlu0 %1731
      %v1733 = vsel %vm461, %v1728, 0.0
      %1734 = vadd.xlane.f32.xlu0 %v1733
      %v1735 = vpop.xlane.xlu0 %1734
      %v1736 = vsel %vm461, %v1729, 0.0
      %1737 = vadd.xlane.f32.xlu0 %v1736
      %v1738 = vpop.xlane.xlu0 %1737
      %v1739 = vmul.f32 %v1732, %v471
      %v1740 = vmul.f32 %v1735, %v471
      %v1741 = vmul.f32 %v1738, %v471
      %v1742 = vsub.f32 %v1727, %v1739
      %v1743 = vsub.f32 %v1728, %v1740
      %v1744 = vsub.f32 %v1729, %v1741
      %v1745 = vmul.f32 %v1742, %v1742
      %v1746 = vmul.f32 %v1743, %v1743
      %v1747 = vmul.f32 %v1744, %v1744
      %v1748 = vsel %vm461, %v1745, 0.0
      %1749 = vadd.xlane.f32.xlu0 %v1748
      %v1750 = vpop.xlane.xlu0 %1749
      %v1751 = vsel %vm461, %v1746, 0.0
      %1752 = vadd.xlane.f32.xlu0 %v1751
      %v1753 = vpop.xlane.xlu0 %1752
      %v1754 = vsel %vm461, %v1747, 0.0
      %1755 = vadd.xlane.f32.xlu0 %v1754
      %v1756 = vpop.xlane.xlu0 %1755
      %v1757 = vmul.f32 %v1750, %v471
      %v1758 = vmul.f32 %v1753, %v471
      %v1759 = vmul.f32 %v1756, %v471
      %v1760 = vadd.f32 %v1757, 1e-05
      %v1761 = vadd.f32 %v1758, 1e-05
      %v1762 = vadd.f32 %v1759, 1e-05
      %v1763 = vrsqrt.pop %v1760
      %v1764 = vrsqrt.pop %v1761
      %v1765 = vrsqrt.pop %v1762
      %v1766 = vmul.f32 %v1742, %v1763
      %v1767 = vmul.f32 %v1743, %v1764
      %v1768 = vmul.f32 %v1744, %v1765
      %v1769 = vlaneseq
      %v1770 = vshrl.u32 %v1769, 7
      %v1771 = vsub.s32 2, %v1770
      %v1772 = vrot.slane %v520, %v1771
      %v1773 = vmul.f32 %v1766, %v1772
      %v1774 = vmul.f32 %v1767, %v1772
      %v1775 = vmul.f32 %v1768, %v1772
      %v1776 = vlaneseq
      %v1777 = vshrl.u32 %v1776, 7
      %v1778 = vsub.s32 3, %v1777
      %v1779 = vrot.slane %v520, %v1778
      %v1780 = vadd.f32 %v1773, %v1779
      %v1781 = vadd.f32 %v1774, %v1779
      %v1782 = vadd.f32 %v1775, %v1779
      %v1783 = vpack.c.bf16 %v1781, %v1780
      %v1784 = vpack.c.bf16 %v1782, %v1782
      %v1785 = vld [vmem:[%s7] sm:$0xf]
      %v1786 = vld [vmem:[%s7 + $0x4] sm:$0xf]
      %v1787 = vld [vmem:[%s7 + $0x8] sm:$0xf]
      %v1788 = vld [vmem:[%s7 + $0xc] sm:$0xf]
      %v1789 = vlaneseq
      %v1790 = vshrl.u32 %v1789, 7
      %v1791 = vsub.s32 6, %v1790
      %v1792 = vrot.slane %v520, %v1791
      %v1797 = vunpack.c.l.b16 %v1785
      %v1798 = vunpack.c.l.b16 %v1786
      %v1799 = vunpack.c.l.b16 %v1787
      %v1800 = vunpack.c.l.b16 %v1788
      %v1801 = vpack.c.b16 %v1798, %v1797
      %v1802 = vpack.c.b16 %v1800, %v1799
      %v1806 = vsel %vm461, %v1783, 0
      %v1809 = vsel %vm461, %v1784, 0
      %1811 = vmatprep.subr.bf16.mxu0 0
      %1812 = vmatpush1.bf16.msra.mxu0 0
      %1813 = vmatprep.subr.bf16.mxu0 0
      %1814 = vmatpush1.bf16.msra.mxu0 0
      %1815 = vmatprep.subr.bf16.mxu0 0
      %1816 = vmatpush1.bf16.msra.mxu0 0
      %1817 = vmatprep.subr.bf16.mxu0 0
      %1818 = vmatpush1.bf16.msra.mxu0 0
      %1819 = vmatprep.subr.bf16.mxu0 0
      %1820 = vmatpush1.bf16.msra.mxu0 0
      %1821 = vmatprep.subr.bf16.mxu0 0
      %1822 = vmatpush1.bf16.msra.mxu0 0
      %1823 = vmatprep.subr.bf16.mxu0 0
      %1824 = vmatpush1.bf16.msra.mxu0 %v1802
      %1825 = vmatprep.subr.bf16.mxu0 0
      %1826 = vmatpush1.bf16.msra.mxu0 %v1801
      %1827 = vmatprep.subr.bf16.mxu0 0
      %1828 = vmatpush2.bf16.msra.mxu0 0
      %1829 = vmatprep.subr.bf16.mxu0 0
      %1830 = vmatpush2.bf16.msra.mxu0 0
      %1831 = vmatprep.subr.bf16.mxu0 0
      %1832 = vmatpush2.bf16.msra.mxu0 0
      %1833 = vmatprep.subr.bf16.mxu0 0
      %1834 = vmatpush2.bf16.msra.mxu0 0
      %1835 = vmatprep.subr.bf16.mxu0 0
      %1836 = vmatpush2.bf16.msra.mxu0 0
      %1837 = vmatprep.subr.bf16.mxu0 0
      %1838 = vmatpush2.bf16.msra.mxu0 0
      %1839 = vmatprep.subr.bf16.mxu0 0
      %1840 = vmatpush2.bf16.msra.mxu0 0
      %1841 = vmatprep.subr.bf16.mxu0 0
      %1842 = vmatpush2.bf16.msra.mxu0 0
      %1843 = vmatprep.mubr.bf16.mxu0 0
      %1844 = vmatmul.mubr.bf16.gmra.mxu0 %v1806
      %v1845 = vpop.f32.mrf.mxu0
      %v1846 = vadd.f32 %v1792, %v1845
      %v1847 = vpop.f32.mrf.mxu0
      %v1848 = vpop.f32.mrf.mxu0
      %v1849 = vadd.f32 %v1792, %v1848
      %v1850 = vpop.f32.mrf.mxu0
      %1851 = vmatprep.mubr.bf16.mxu0 0
      %1852 = vmatmul.mubr.bf16.gmra.mxu0 %v1809
      %v1853 = vpop.f32.mrf.mxu0
      %v1854 = vadd.f32 %v1792, %v1853
      %v1855 = vpop.f32.mrf.mxu0
      %v1856 = vpop.f32.mrf.mxu0
      %v1857 = vpop.f32.mrf.mxu0
      %1858 = vdwg.mxu0
      %v1859 = vmul.f32 %v1846, -1.702
      %v1860 = vmul.f32 %v1849, -1.702
      %v1861 = vmul.f32 %v1854, -1.702
      %v1862 = vmul.f32 %v1859, 1.442695
      %v1863 = vpow.pop %v1862
      %v1864 = vmul.f32 %v1860, 1.442695
      %v1865 = vpow.pop %v1864
      %v1866 = vmul.f32 %v1861, 1.442695
      %v1867 = vpow.pop %v1866
      %v1868 = vadd.f32 %v1863, 1.0
      %v1869 = vadd.f32 %v1865, 1.0
      %v1870 = vadd.f32 %v1867, 1.0
      %v1871 = vrcp.pop %v1868
      %v1872 = vrcp.pop %v1869
      %v1873 = vrcp.pop %v1870
      %v1874 = vmul.f32 %v1846, %v1871
      %v1875 = vmul.f32 %v1849, %v1872
      %v1876 = vmul.f32 %v1854, %v1873
      %v1877 = vpack.c.bf16 %v1875, %v1874
      %v1878 = vpack.c.bf16 %v1876, %v1876
      %v1879 = vld [vmem:[%s8] sm:$0xf]
      %v1880 = vld [vmem:[%s8 + $0x4] sm:$0xf]
      %v1881 = vld [vmem:[%s8 + $0x8] sm:$0xf]
      %v1882 = vld [vmem:[%s8 + $0xc] sm:$0xf]
      %v1883 = vld [vmem:[%s8 + $0x10] sm:$0xf]
      %v1884 = vld [vmem:[%s8 + $0x14] sm:$0xf]
      %v1885 = vld [vmem:[%s8 + $0x18] sm:$0xf]
      %v1886 = vld [vmem:[%s8 + $0x1c] sm:$0xf]
      %v1887 = vld [vmem:[%s8 + $0x20] sm:$0xf]
      %v1888 = vld [vmem:[%s8 + $0x24] sm:$0xf]
      %v1889 = vld [vmem:[%s8 + $0x28] sm:$0xf]
      %v1890 = vld [vmem:[%s8 + $0x2c] sm:$0xf]
      %v1891 = vld [vmem:[%s8 + $0x30] sm:$0xf]
      %v1892 = vld [vmem:[%s8 + $0x34] sm:$0xf]
      %v1893 = vld [vmem:[%s8 + $0x38] sm:$0xf]
      %v1894 = vld [vmem:[%s8 + $0x3c] sm:$0xf]
      %v1895 = vlaneseq
      %v1896 = vshrl.u32 %v1895, 7
      %v1897 = vsub.s32 7, %v1896
      %v1898 = vrot.slane %v520, %v1897
      %v1915 = vunpack.c.l.b16 %v1879
      %v1916 = vunpack.c.l.b16 %v1880
      %v1917 = vunpack.c.l.b16 %v1881
      %v1918 = vunpack.c.l.b16 %v1882
      %v1919 = vunpack.c.l.b16 %v1883
      %v1920 = vunpack.c.l.b16 %v1884
      %v1921 = vunpack.c.l.b16 %v1885
      %v1922 = vunpack.c.l.b16 %v1886
      %v1923 = vunpack.c.l.b16 %v1887
      %v1924 = vunpack.c.l.b16 %v1888
      %v1925 = vunpack.c.l.b16 %v1889
      %v1926 = vunpack.c.l.b16 %v1890
      %v1927 = vunpack.c.l.b16 %v1891
      %v1928 = vunpack.c.l.b16 %v1892
      %v1929 = vunpack.c.l.b16 %v1893
      %v1930 = vunpack.c.l.b16 %v1894
      %v1931 = vpack.c.b16 %v1916, %v1915
      %v1932 = vpack.c.b16 %v1918, %v1917
      %v1933 = vpack.c.b16 %v1920, %v1919
      %v1934 = vpack.c.b16 %v1922, %v1921
      %v1935 = vpack.c.b16 %v1924, %v1923
      %v1936 = vpack.c.b16 %v1926, %v1925
      %v1937 = vpack.c.b16 %v1928, %v1927
      %v1938 = vpack.c.b16 %v1930, %v1929
      %1947 = vmatprep.subr.bf16.mxu0 0
      %1948 = vmatpush1.bf16.msra.mxu0 %v1938
      %1949 = vmatprep.subr.bf16.mxu0 0
      %1950 = vmatpush1.bf16.msra.mxu0 %v1937
      %1951 = vmatprep.subr.bf16.mxu0 0
      %1952 = vmatpush1.bf16.msra.mxu0 %v1936
      %1953 = vmatprep.subr.bf16.mxu0 0
      %1954 = vmatpush1.bf16.msra.mxu0 %v1935
      %1955 = vmatprep.subr.bf16.mxu0 0
      %1956 = vmatpush1.bf16.msra.mxu0 %v1934
      %1957 = vmatprep.subr.bf16.mxu0 0
      %1958 = vmatpush1.bf16.msra.mxu0 %v1933
      %1959 = vmatprep.subr.bf16.mxu0 0
      %1960 = vmatpush1.bf16.msra.mxu0 %v1932
      %1961 = vmatprep.subr.bf16.mxu0 0
      %1962 = vmatpush1.bf16.msra.mxu0 %v1931
      %1963 = vmatprep.subr.bf16.mxu0 0
      %1964 = vmatpush2.bf16.msra.mxu0 0
      %1965 = vmatprep.subr.bf16.mxu0 0
      %1966 = vmatpush2.bf16.msra.mxu0 0
      %1967 = vmatprep.subr.bf16.mxu0 0
      %1968 = vmatpush2.bf16.msra.mxu0 0
      %1969 = vmatprep.subr.bf16.mxu0 0
      %1970 = vmatpush2.bf16.msra.mxu0 0
      %1971 = vmatprep.subr.bf16.mxu0 0
      %1972 = vmatpush2.bf16.msra.mxu0 0
      %1973 = vmatprep.subr.bf16.mxu0 0
      %1974 = vmatpush2.bf16.msra.mxu0 0
      %1975 = vmatprep.subr.bf16.mxu0 0
      %1976 = vmatpush2.bf16.msra.mxu0 0
      %1977 = vmatprep.subr.bf16.mxu0 0
      %1978 = vmatpush2.bf16.msra.mxu0 0
      %1979 = vmatprep.mubr.bf16.mxu0 0
      %1980 = vmatmul.mubr.bf16.gmra.mxu0 %v1877
      %v1981 = vpop.f32.mrf.mxu0
      %v1982 = vadd.f32 %v1898, %v1981
      %v1983 = vpop.f32.mrf.mxu0
      %v1984 = vpop.f32.mrf.mxu0
      %v1985 = vadd.f32 %v1898, %v1984
      %v1986 = vpop.f32.mrf.mxu0
      %1987 = vmatprep.mubr.bf16.mxu0 0
      %1988 = vmatmul.mubr.bf16.gmra.mxu0 %v1878
      %v1989 = vpop.f32.mrf.mxu0
      %v1990 = vadd.f32 %v1898, %v1989
      %v1991 = vpop.f32.mrf.mxu0
      %v1992 = vpop.f32.mrf.mxu0
      %v1993 = vpop.f32.mrf.mxu0
      %1994 = vdwg.mxu0
      %v1995 = vadd.f32 %v1727, %v1982
      %v1996 = vadd.f32 %v1728, %v1985
      %v1997 = vadd.f32 %v1729, %v1990
      %s1998 = scalar_lea.vmem %s3, 8
      %v1999 = vld [vmem:[%s1998] sm:$0xff]
      %v2000 = vsel %vm461, %v1995, 0.0
      %2001 = vadd.xlane.f32.xlu0 %v2000
      %v2002 = vpop.xlane.xlu0 %2001
      %v2003 = vsel %vm461, %v1996, 0.0
      %2004 = vadd.xlane.f32.xlu0 %v2003
      %v2005 = vpop.xlane.xlu0 %2004
      %v2006 = vsel %vm461, %v1997, 0.0
      %2007 = vadd.xlane.f32.xlu0 %v2006
      %v2008 = vpop.xlane.xlu0 %2007
      %v2009 = vmul.f32 %v2002, %v471
      %v2010 = vmul.f32 %v2005, %v471
      %v2011 = vmul.f32 %v2008, %v471
      %v2012 = vsub.f32 %v1995, %v2009
      %v2013 = vsub.f32 %v1996, %v2010
      %v2014 = vsub.f32 %v1997, %v2011
      %v2015 = vmul.f32 %v2012, %v2012
      %v2016 = vmul.f32 %v2013, %v2013
      %v2017 = vmul.f32 %v2014, %v2014
      %v2018 = vsel %vm461, %v2015, 0.0
      %2019 = vadd.xlane.f32.xlu0 %v2018
      %v2020 = vpop.xlane.xlu0 %2019
      %v2021 = vsel %vm461, %v2016, 0.0
      %2022 = vadd.xlane.f32.xlu0 %v2021
      %v2023 = vpop.xlane.xlu0 %2022
      %v2024 = vsel %vm461, %v2017, 0.0
      %2025 = vadd.xlane.f32.xlu0 %v2024
      %v2026 = vpop.xlane.xlu0 %2025
      %v2027 = vmul.f32 %v2020, %v471
      %v2028 = vmul.f32 %v2023, %v471
      %v2029 = vmul.f32 %v2026, %v471
      %v2030 = vadd.f32 %v2027, 1e-05
      %v2031 = vadd.f32 %v2028, 1e-05
      %v2032 = vadd.f32 %v2029, 1e-05
      %v2033 = vrsqrt.pop %v2030
      %v2034 = vrsqrt.pop %v2031
      %v2035 = vrsqrt.pop %v2032
      %v2036 = vmul.f32 %v2012, %v2033
      %v2037 = vmul.f32 %v2013, %v2034
      %v2038 = vmul.f32 %v2014, %v2035
      %v2039 = vlaneseq
      %v2040 = vshrl.u32 %v2039, 7
      %v2041 = vsub.s32 0, %v2040
      %v2042 = vrot.slane %v1999, %v2041
      %v2043 = vmul.f32 %v2036, %v2042
      %v2044 = vmul.f32 %v2037, %v2042
      %v2045 = vmul.f32 %v2038, %v2042
      %v2046 = vlaneseq
      %v2047 = vshrl.u32 %v2046, 7
      %v2048 = vsub.s32 1, %v2047
      %v2049 = vrot.slane %v1999, %v2048
      %v2050 = vadd.f32 %v2043, %v2049
      %v2051 = vadd.f32 %v2044, %v2049
      %v2052 = vadd.f32 %v2045, %v2049
      %v2053 = vpack.c.bf16 %v2051, %v2050
      %v2054 = vpack.c.bf16 %v2052, %v2052
      %s2055 = scalar_lea.vmem %s5, 16
      %v2056 = vld [vmem:[%s2055] sm:$0xf]
      %v2057 = vld [vmem:[%s2055 + $0x4] sm:$0xf]
      %v2058 = vld [vmem:[%s2055 + $0x8] sm:$0xf]
      %v2059 = vld [vmem:[%s2055 + $0xc] sm:$0xf]
      %v2060 = vlaneseq
      %v2061 = vshrl.u32 %v2060, 7
      %v2062 = vsub.s32 4, %v2061
      %v2063 = vrot.slane %v1999, %v2062
      %v2068 = vunpack.c.l.b16 %v2056
      %v2069 = vunpack.c.l.b16 %v2057
      %v2070 = vunpack.c.l.b16 %v2058
      %v2071 = vunpack.c.l.b16 %v2059
      %v2072 = vpack.c.b16 %v2069, %v2068
      %v2073 = vpack.c.b16 %v2071, %v2070
      %v2077 = vsel %vm461, %v2053, 0
      %v2080 = vsel %vm461, %v2054, 0
      %2082 = vmatprep.subr.bf16.mxu0 0
      %2083 = vmatpush1.bf16.msra.mxu0 0
      %2084 = vmatprep.subr.bf16.mxu0 0
      %2085 = vmatpush1.bf16.msra.mxu0 0
      %2086 = vmatprep.subr.bf16.mxu0 0
      %2087 = vmatpush1.bf16.msra.mxu0 0
      %2088 = vmatprep.subr.bf16.mxu0 0
      %2089 = vmatpush1.bf16.msra.mxu0 0
      %2090 = vmatprep.subr.bf16.mxu0 0
      %2091 = vmatpush1.bf16.msra.mxu0 0
      %2092 = vmatprep.subr.bf16.mxu0 0
      %2093 = vmatpush1.bf16.msra.mxu0 0
      %2094 = vmatprep.subr.bf16.mxu0 0
      %2095 = vmatpush1.bf16.msra.mxu0 %v2073
      %2096 = vmatprep.subr.bf16.mxu0 0
      %2097 = vmatpush1.bf16.msra.mxu0 %v2072
      %2098 = vmatprep.subr.bf16.mxu0 0
      %2099 = vmatpush2.bf16.msra.mxu0 0
      %2100 = vmatprep.subr.bf16.mxu0 0
      %2101 = vmatpush2.bf16.msra.mxu0 0
      %2102 = vmatprep.subr.bf16.mxu0 0
      %2103 = vmatpush2.bf16.msra.mxu0 0
      %2104 = vmatprep.subr.bf16.mxu0 0
      %2105 = vmatpush2.bf16.msra.mxu0 0
      %2106 = vmatprep.subr.bf16.mxu0 0
      %2107 = vmatpush2.bf16.msra.mxu0 0
      %2108 = vmatprep.subr.bf16.mxu0 0
      %2109 = vmatpush2.bf16.msra.mxu0 0
      %2110 = vmatprep.subr.bf16.mxu0 0
      %2111 = vmatpush2.bf16.msra.mxu0 0
      %2112 = vmatprep.subr.bf16.mxu0 0
      %2113 = vmatpush2.bf16.msra.mxu0 0
      %2114 = vmatprep.mubr.bf16.mxu0 0
      %2115 = vmatmul.mubr.bf16.gmra.mxu0 %v2077
      %v2116 = vpop.f32.mrf.mxu0
      %v2117 = vadd.f32 %v2063, %v2116
      %v2118 = vpop.f32.mrf.mxu0
      %v2119 = vpop.f32.mrf.mxu0
      %v2120 = vadd.f32 %v2063, %v2119
      %v2121 = vpop.f32.mrf.mxu0
      %2122 = vmatprep.mubr.bf16.mxu0 0
      %2123 = vmatmul.mubr.bf16.gmra.mxu0 %v2080
      %v2124 = vpop.f32.mrf.mxu0
      %v2125 = vadd.f32 %v2063, %v2124
      %v2126 = vpop.f32.mrf.mxu0
      %v2127 = vpop.f32.mrf.mxu0
      %v2128 = vpop.f32.mrf.mxu0
      %2129 = vdwg.mxu0
      %v2130 = vpack.c.bf16 %v2120, %v2117
      %v2131 = vpack.c.bf16 %v2125, %v2125
      %v2134 = vunpack.c.l.b16 %v2130
      %v2135 = vunpack.c.h.b16 %v2130
      %v2136 = vunpack.c.l.b16 %v2131
      %v2137 = vpack.c.b16 %v2134, %v2134
      %v2138 = vpack.c.b16 %v2135, %v2135
      %v2139 = vpack.c.b16 %v2136, %v2136
      %2143 = vst.msk [vmem:[#allocation2] sm:$0xf] %vm663, %v2137
      %2144 = vst.msk [vmem:[#allocation2 + $0x4] sm:$0xf] %vm663, %v2138
      %2145 = vst.msk [vmem:[#allocation2 + $0x8] sm:$0xf] %vm663, %v2139
      %2146 = vrot.lane.b32.xlu0 %v2137, 96
      %v2147 = vpop.permute.xlu0 %2146
      %2148 = vrot.lane.b32.xlu0 %v2138, 96
      %v2149 = vpop.permute.xlu0 %2148
      %2150 = vrot.lane.b32.xlu0 %v2139, 96
      %v2151 = vpop.permute.xlu0 %2150
      %2155 = vst.msk [vmem:[#allocation3] sm:$0xf] %vm663, %v2147
      %2156 = vst.msk [vmem:[#allocation3 + $0x4] sm:$0xf] %vm663, %v2149
      %2157 = vst.msk [vmem:[#allocation3 + $0x8] sm:$0xf] %vm663, %v2151
      %2158 = vrot.lane.b32.xlu0 %v2137, 64
      %v2159 = vpop.permute.xlu0 %2158
      %2160 = vrot.lane.b32.xlu0 %v2138, 64
      %v2161 = vpop.permute.xlu0 %2160
      %2162 = vrot.lane.b32.xlu0 %v2139, 64
      %v2163 = vpop.permute.xlu0 %2162
      %2167 = vst.msk [vmem:[#allocation4] sm:$0xf] %vm663, %v2159
      %2168 = vst.msk [vmem:[#allocation4 + $0x4] sm:$0xf] %vm663, %v2161
      %2169 = vst.msk [vmem:[#allocation4 + $0x8] sm:$0xf] %vm663, %v2163
      %2170 = vrot.lane.b32.xlu0 %v2137, 120
      %v2171 = vpop.permute.xlu0 %2170
      %2172 = vrot.lane.b32.xlu0 %v2138, 120
      %v2173 = vpop.permute.xlu0 %2172
      %2174 = vrot.lane.b32.xlu0 %v2139, 120
      %v2175 = vpop.permute.xlu0 %2174
      %2179 = vst.msk [vmem:[%s700] sm:$0xf] %vm663, %v2171
      %2180 = vst.msk [vmem:[%s700 + $0x4] sm:$0xf] %vm663, %v2173
      %2181 = vst.msk [vmem:[%s700 + $0x8] sm:$0xf] %vm663, %v2175
      %2182 = vrot.lane.b32.xlu0 %v2137, 88
      %v2183 = vpop.permute.xlu0 %2182
      %2184 = vrot.lane.b32.xlu0 %v2138, 88
      %v2185 = vpop.permute.xlu0 %2184
      %2186 = vrot.lane.b32.xlu0 %v2139, 88
      %v2187 = vpop.permute.xlu0 %2186
      %2191 = vst.msk [vmem:[%s713] sm:$0xf] %vm663, %v2183
      %2192 = vst.msk [vmem:[%s713 + $0x4] sm:$0xf] %vm663, %v2185
      %2193 = vst.msk [vmem:[%s713 + $0x8] sm:$0xf] %vm663, %v2187
      %2194 = vrot.lane.b32.xlu0 %v2137, 56
      %v2195 = vpop.permute.xlu0 %2194
      %2196 = vrot.lane.b32.xlu0 %v2138, 56
      %v2197 = vpop.permute.xlu0 %2196
      %2198 = vrot.lane.b32.xlu0 %v2139, 56
      %v2199 = vpop.permute.xlu0 %2198
      %2203 = vst.msk [vmem:[%s726] sm:$0xf] %vm663, %v2195
      %2204 = vst.msk [vmem:[%s726 + $0x4] sm:$0xf] %vm663, %v2197
      %2205 = vst.msk [vmem:[%s726 + $0x8] sm:$0xf] %vm663, %v2199
      %2206 = vrot.lane.b32.xlu0 %v2137, 112
      %v2207 = vpop.permute.xlu0 %2206
      %2208 = vrot.lane.b32.xlu0 %v2138, 112
      %v2209 = vpop.permute.xlu0 %2208
      %2210 = vrot.lane.b32.xlu0 %v2139, 112
      %v2211 = vpop.permute.xlu0 %2210
      %2215 = vst.msk [vmem:[%s739] sm:$0xf] %vm663, %v2207
      %2216 = vst.msk [vmem:[%s739 + $0x4] sm:$0xf] %vm663, %v2209
      %2217 = vst.msk [vmem:[%s739 + $0x8] sm:$0xf] %vm663, %v2211
      %2218 = vrot.lane.b32.xlu0 %v2137, 80
      %v2219 = vpop.permute.xlu0 %2218
      %2220 = vrot.lane.b32.xlu0 %v2138, 80
      %v2221 = vpop.permute.xlu0 %2220
      %2222 = vrot.lane.b32.xlu0 %v2139, 80
      %v2223 = vpop.permute.xlu0 %2222
      %2227 = vst.msk [vmem:[%s752] sm:$0xf] %vm663, %v2219
      %2228 = vst.msk [vmem:[%s752 + $0x4] sm:$0xf] %vm663, %v2221
      %2229 = vst.msk [vmem:[%s752 + $0x8] sm:$0xf] %vm663, %v2223
      %2230 = vrot.lane.b32.xlu0 %v2137, 48
      %v2231 = vpop.permute.xlu0 %2230
      %2232 = vrot.lane.b32.xlu0 %v2138, 48
      %v2233 = vpop.permute.xlu0 %2232
      %2234 = vrot.lane.b32.xlu0 %v2139, 48
      %v2235 = vpop.permute.xlu0 %2234
      %2239 = vst.msk [vmem:[%s765] sm:$0xf] %vm663, %v2231
      %2240 = vst.msk [vmem:[%s765 + $0x4] sm:$0xf] %vm663, %v2233
      %2241 = vst.msk [vmem:[%s765 + $0x8] sm:$0xf] %vm663, %v2235
      %2242 = vrot.lane.b32.xlu0 %v2137, 104
      %v2243 = vpop.permute.xlu0 %2242
      %2244 = vrot.lane.b32.xlu0 %v2138, 104
      %v2245 = vpop.permute.xlu0 %2244
      %2246 = vrot.lane.b32.xlu0 %v2139, 104
      %v2247 = vpop.permute.xlu0 %2246
      %2251 = vst.msk [vmem:[%s778] sm:$0xf] %vm663, %v2243
      %2252 = vst.msk [vmem:[%s778 + $0x4] sm:$0xf] %vm663, %v2245
      %2253 = vst.msk [vmem:[%s778 + $0x8] sm:$0xf] %vm663, %v2247
      %2254 = vrot.lane.b32.xlu0 %v2137, 72
      %v2255 = vpop.permute.xlu0 %2254
      %2256 = vrot.lane.b32.xlu0 %v2138, 72
      %v2257 = vpop.permute.xlu0 %2256
      %2258 = vrot.lane.b32.xlu0 %v2139, 72
      %v2259 = vpop.permute.xlu0 %2258
      %2263 = vst.msk [vmem:[%s791] sm:$0xf] %vm663, %v2255
      %2264 = vst.msk [vmem:[%s791 + $0x4] sm:$0xf] %vm663, %v2257
      %2265 = vst.msk [vmem:[%s791 + $0x8] sm:$0xf] %vm663, %v2259
      %2266 = vrot.lane.b32.xlu0 %v2137, 40
      %v2267 = vpop.permute.xlu0 %2266
      %2268 = vrot.lane.b32.xlu0 %v2138, 40
      %v2269 = vpop.permute.xlu0 %2268
      %2270 = vrot.lane.b32.xlu0 %v2139, 40
      %v2271 = vpop.permute.xlu0 %2270
      %2275 = vst.msk [vmem:[%s804] sm:$0xf] %vm663, %v2267
      %2276 = vst.msk [vmem:[%s804 + $0x4] sm:$0xf] %vm663, %v2269
      %2277 = vst.msk [vmem:[%s804 + $0x8] sm:$0xf] %vm663, %v2271
      %v2278 = vld [vmem:[#allocation2] sm:$0xf]
      %v2279 = vld [vmem:[#allocation2 + $0x4] sm:$0xf]
      %v2280 = vld [vmem:[#allocation2 + $0x8] sm:$0xf]
      %v2281 = vld [vmem:[#allocation2 + $0xc] sm:$0xf]
      %v2282 = vld [vmem:[#allocation2 + $0x10] sm:$0xf]
      %v2283 = vld [vmem:[#allocation2 + $0x14] sm:$0xf]
      %v2284 = vld [vmem:[#allocation2 + $0x18] sm:$0xf]
      %v2285 = vld [vmem:[#allocation2 + $0x1c] sm:$0xf]
      %v2286 = vld [vmem:[#allocation2 + $0x20] sm:$0xf]
      %v2287 = vld [vmem:[#allocation2 + $0x24] sm:$0xf]
      %v2288 = vld [vmem:[#allocation2 + $0x28] sm:$0xf]
      %v2289 = vld [vmem:[#allocation2 + $0x2c] sm:$0xf]
      %v2290 = vld [vmem:[#allocation3] sm:$0xf]
      %v2291 = vld [vmem:[#allocation3 + $0x4] sm:$0xf]
      %v2292 = vld [vmem:[#allocation3 + $0x8] sm:$0xf]
      %v2293 = vld [vmem:[#allocation3 + $0xc] sm:$0xf]
      %v2294 = vld [vmem:[#allocation3 + $0x10] sm:$0xf]
      %v2295 = vld [vmem:[#allocation3 + $0x14] sm:$0xf]
      %v2296 = vld [vmem:[#allocation3 + $0x18] sm:$0xf]
      %v2297 = vld [vmem:[#allocation3 + $0x1c] sm:$0xf]
      %v2298 = vld [vmem:[#allocation3 + $0x20] sm:$0xf]
      %v2299 = vld [vmem:[#allocation3 + $0x24] sm:$0xf]
      %v2300 = vld [vmem:[#allocation3 + $0x28] sm:$0xf]
      %v2301 = vld [vmem:[#allocation3 + $0x2c] sm:$0xf]
      %v2305 = vunpack.c.l.b16 %v2278
      %v2306 = vunpack.c.l.b16 %v2279
      %v2307 = vunpack.c.l.b16 %v2280
      %v2308 = vpack.c.b16 %v2306, %v2305
      %v2309 = vpack.c.b16 %v2307, %v2307
      %v2313 = vunpack.c.l.b16 %v2290
      %v2314 = vunpack.c.l.b16 %v2291
      %v2315 = vunpack.c.l.b16 %v2292
      %v2316 = vpack.c.b16 %v2314, %v2313
      %v2317 = vpack.c.b16 %v2315, %v2315
      %v2319 = vsel %vm848, %v2308, 0
      %v2322 = vsel %vm848, %v2309, 0
      %v2325 = vsel %vm848, %v2316, 0
      %v2328 = vsel %vm848, %v2317, 0
      %2330 = vmatprep.subr.bf16.mxu0 0
      %2331 = vmatpush1.bf16.xpose.msra.mxu0 0
      %2332 = vmatprep.subr.bf16.mxu0 0
      %2333 = vmatpush1.bf16.xpose.msra.mxu0 0
      %2334 = vmatprep.subr.bf16.mxu0 0
      %2335 = vmatpush1.bf16.xpose.msra.mxu0 0
      %2336 = vmatprep.subr.bf16.mxu0 0
      %2337 = vmatpush1.bf16.xpose.msra.mxu0 0
      %2338 = vmatprep.subr.bf16.mxu0 0
      %2339 = vmatpush1.bf16.xpose.msra.mxu0 0
      %2340 = vmatprep.subr.bf16.mxu0 0
      %2341 = vmatpush1.bf16.xpose.msra.mxu0 0
      %2342 = vmatprep.subr.bf16.mxu0 0
      %2343 = vmatpush1.bf16.xpose.msra.mxu0 %v2328
      %2344 = vmatprep.subr.bf16.mxu0 0
      %2345 = vmatpush1.bf16.xpose.msra.mxu0 %v2325
      %2346 = vmatprep.subr.bf16.mxu0 0
      %2347 = vmatpush2.bf16.xpose.msra.mxu0 0
      %2348 = vmatprep.subr.bf16.mxu0 0
      %2349 = vmatpush2.bf16.xpose.msra.mxu0 0
      %2350 = vmatprep.subr.bf16.mxu0 0
      %2351 = vmatpush2.bf16.xpose.msra.mxu0 0
      %2352 = vmatprep.subr.bf16.mxu0 0
      %2353 = vmatpush2.bf16.xpose.msra.mxu0 0
      %2354 = vmatprep.subr.bf16.mxu0 0
      %2355 = vmatpush2.bf16.xpose.msra.mxu0 0
      %2356 = vmatprep.subr.bf16.mxu0 0
      %2357 = vmatpush2.bf16.xpose.msra.mxu0 0
      %2358 = vmatprep.subr.bf16.mxu0 0
      %2359 = vmatpush2.bf16.xpose.msra.mxu0 0
      %2360 = vmatprep.subr.bf16.mxu0 0
      %2361 = vmatpush2.bf16.xpose.msra.mxu0 0
      %2362 = vmatprep.mubr.bf16.mxu0 0
      %2363 = vmatmul.mubr.bf16.gmra.mxu0 %v2319
      %v2364 = vpop.f32.mrf.mxu0
      %v2365 = vadd.f32 %v519, %v2364
      %v2366 = vpop.f32.mrf.mxu0
      %v2367 = vpop.f32.mrf.mxu0
      %v2368 = vadd.f32 %v519, %v2367
      %v2369 = vpop.f32.mrf.mxu0
      %2370 = vmatprep.mubr.bf16.mxu0 0
      %2371 = vmatmul.mubr.bf16.gmra.mxu0 %v2322
      %v2372 = vpop.f32.mrf.mxu0
      %v2373 = vadd.f32 %v519, %v2372
      %v2374 = vpop.f32.mrf.mxu0
      %v2375 = vpop.f32.mrf.mxu0
      %v2376 = vpop.f32.mrf.mxu0
      %2377 = vdwg.mxu0
      %v2381 = vunpack.c.l.b16 %v2281
      %v2382 = vunpack.c.l.b16 %v2282
      %v2383 = vunpack.c.l.b16 %v2283
      %v2384 = vpack.c.b16 %v2382, %v2381
      %v2385 = vpack.c.b16 %v2383, %v2383
      %v2389 = vunpack.c.l.b16 %v2293
      %v2390 = vunpack.c.l.b16 %v2294
      %v2391 = vunpack.c.l.b16 %v2295
      %v2392 = vpack.c.b16 %v2390, %v2389
      %v2393 = vpack.c.b16 %v2391, %v2391
      %v2395 = vsel %vm848, %v2384, 0
      %v2398 = vsel %vm848, %v2385, 0
      %v2401 = vsel %vm848, %v2392, 0
      %v2404 = vsel %vm848, %v2393, 0
      %2406 = vmatprep.subr.bf16.mxu0 0
      %2407 = vmatpush1.bf16.xpose.msra.mxu0 0
      %2408 = vmatprep.subr.bf16.mxu0 0
      %2409 = vmatpush1.bf16.xpose.msra.mxu0 0
      %2410 = vmatprep.subr.bf16.mxu0 0
      %2411 = vmatpush1.bf16.xpose.msra.mxu0 0
      %2412 = vmatprep.subr.bf16.mxu0 0
      %2413 = vmatpush1.bf16.xpose.msra.mxu0 0
      %2414 = vmatprep.subr.bf16.mxu0 0
      %2415 = vmatpush1.bf16.xpose.msra.mxu0 0
      %2416 = vmatprep.subr.bf16.mxu0 0
      %2417 = vmatpush1.bf16.xpose.msra.mxu0 0
      %2418 = vmatprep.subr.bf16.mxu0 0
      %2419 = vmatpush1.bf16.xpose.msra.mxu0 %v2404
      %2420 = vmatprep.subr.bf16.mxu0 0
      %2421 = vmatpush1.bf16.xpose.msra.mxu0 %v2401
      %2422 = vmatprep.subr.bf16.mxu0 0
      %2423 = vmatpush2.bf16.xpose.msra.mxu0 0
      %2424 = vmatprep.subr.bf16.mxu0 0
      %2425 = vmatpush2.bf16.xpose.msra.mxu0 0
      %2426 = vmatprep.subr.bf16.mxu0 0
      %2427 = vmatpush2.bf16.xpose.msra.mxu0 0
      %2428 = vmatprep.subr.bf16.mxu0 0
      %2429 = vmatpush2.bf16.xpose.msra.mxu0 0
      %2430 = vmatprep.subr.bf16.mxu0 0
      %2431 = vmatpush2.bf16.xpose.msra.mxu0 0
      %2432 = vmatprep.subr.bf16.mxu0 0
      %2433 = vmatpush2.bf16.xpose.msra.mxu0 0
      %2434 = vmatprep.subr.bf16.mxu0 0
      %2435 = vmatpush2.bf16.xpose.msra.mxu0 0
      %2436 = vmatprep.subr.bf16.mxu0 0
      %2437 = vmatpush2.bf16.xpose.msra.mxu0 0
      %2438 = vmatprep.mubr.bf16.mxu0 0
      %2439 = vmatmul.mubr.bf16.gmra.mxu0 %v2395
      %v2440 = vpop.f32.mrf.mxu0
      %v2441 = vadd.f32 %v519, %v2440
      %v2442 = vpop.f32.mrf.mxu0
      %v2443 = vpop.f32.mrf.mxu0
      %v2444 = vadd.f32 %v519, %v2443
      %v2445 = vpop.f32.mrf.mxu0
      %2446 = vmatprep.mubr.bf16.mxu0 0
      %2447 = vmatmul.mubr.bf16.gmra.mxu0 %v2398
      %v2448 = vpop.f32.mrf.mxu0
      %v2449 = vadd.f32 %v519, %v2448
      %v2450 = vpop.f32.mrf.mxu0
      %v2451 = vpop.f32.mrf.mxu0
      %v2452 = vpop.f32.mrf.mxu0
      %2453 = vdwg.mxu0
      %v2457 = vunpack.c.l.b16 %v2284
      %v2458 = vunpack.c.l.b16 %v2285
      %v2459 = vunpack.c.l.b16 %v2286
      %v2460 = vpack.c.b16 %v2458, %v2457
      %v2461 = vpack.c.b16 %v2459, %v2459
      %v2465 = vunpack.c.l.b16 %v2296
      %v2466 = vunpack.c.l.b16 %v2297
      %v2467 = vunpack.c.l.b16 %v2298
      %v2468 = vpack.c.b16 %v2466, %v2465
      %v2469 = vpack.c.b16 %v2467, %v2467
      %v2471 = vsel %vm848, %v2460, 0
      %v2474 = vsel %vm848, %v2461, 0
      %v2477 = vsel %vm848, %v2468, 0
      %v2480 = vsel %vm848, %v2469, 0
      %2482 = vmatprep.subr.bf16.mxu0 0
      %2483 = vmatpush1.bf16.xpose.msra.mxu0 0
      %2484 = vmatprep.subr.bf16.mxu0 0
      %2485 = vmatpush1.bf16.xpose.msra.mxu0 0
      %2486 = vmatprep.subr.bf16.mxu0 0
      %2487 = vmatpush1.bf16.xpose.msra.mxu0 0
      %2488 = vmatprep.subr.bf16.mxu0 0
      %2489 = vmatpush1.bf16.xpose.msra.mxu0 0
      %2490 = vmatprep.subr.bf16.mxu0 0
      %2491 = vmatpush1.bf16.xpose.msra.mxu0 0
      %2492 = vmatprep.subr.bf16.mxu0 0
      %2493 = vmatpush1.bf16.xpose.msra.mxu0 0
      %2494 = vmatprep.subr.bf16.mxu0 0
      %2495 = vmatpush1.bf16.xpose.msra.mxu0 %v2480
      %2496 = vmatprep.subr.bf16.mxu0 0
      %2497 = vmatpush1.bf16.xpose.msra.mxu0 %v2477
      %2498 = vmatprep.subr.bf16.mxu0 0
      %2499 = vmatpush2.bf16.xpose.msra.mxu0 0
      %2500 = vmatprep.subr.bf16.mxu0 0
      %2501 = vmatpush2.bf16.xpose.msra.mxu0 0
      %2502 = vmatprep.subr.bf16.mxu0 0
      %2503 = vmatpush2.bf16.xpose.msra.mxu0 0
      %2504 = vmatprep.subr.bf16.mxu0 0
      %2505 = vmatpush2.bf16.xpose.msra.mxu0 0
      %2506 = vmatprep.subr.bf16.mxu0 0
      %2507 = vmatpush2.bf16.xpose.msra.mxu0 0
      %2508 = vmatprep.subr.bf16.mxu0 0
      %2509 = vmatpush2.bf16.xpose.msra.mxu0 0
      %2510 = vmatprep.subr.bf16.mxu0 0
      %2511 = vmatpush2.bf16.xpose.msra.mxu0 0
      %2512 = vmatprep.subr.bf16.mxu0 0
      %2513 = vmatpush2.bf16.xpose.msra.mxu0 0
      %2514 = vmatprep.mubr.bf16.mxu0 0
      %2515 = vmatmul.mubr.bf16.gmra.mxu0 %v2471
      %v2516 = vpop.f32.mrf.mxu0
      %v2517 = vadd.f32 %v519, %v2516
      %v2518 = vpop.f32.mrf.mxu0
      %v2519 = vpop.f32.mrf.mxu0
      %v2520 = vadd.f32 %v519, %v2519
      %v2521 = vpop.f32.mrf.mxu0
      %2522 = vmatprep.mubr.bf16.mxu0 0
      %2523 = vmatmul.mubr.bf16.gmra.mxu0 %v2474
      %v2524 = vpop.f32.mrf.mxu0
      %v2525 = vadd.f32 %v519, %v2524
      %v2526 = vpop.f32.mrf.mxu0
      %v2527 = vpop.f32.mrf.mxu0
      %v2528 = vpop.f32.mrf.mxu0
      %2529 = vdwg.mxu0
      %v2533 = vunpack.c.l.b16 %v2287
      %v2534 = vunpack.c.l.b16 %v2288
      %v2535 = vunpack.c.l.b16 %v2289
      %v2536 = vpack.c.b16 %v2534, %v2533
      %v2537 = vpack.c.b16 %v2535, %v2535
      %v2541 = vunpack.c.l.b16 %v2299
      %v2542 = vunpack.c.l.b16 %v2300
      %v2543 = vunpack.c.l.b16 %v2301
      %v2544 = vpack.c.b16 %v2542, %v2541
      %v2545 = vpack.c.b16 %v2543, %v2543
      %v2547 = vsel %vm848, %v2536, 0
      %v2550 = vsel %vm848, %v2537, 0
      %v2553 = vsel %vm848, %v2544, 0
      %v2556 = vsel %vm848, %v2545, 0
      %2558 = vmatprep.subr.bf16.mxu0 0
      %2559 = vmatpush1.bf16.xpose.msra.mxu0 0
      %2560 = vmatprep.subr.bf16.mxu0 0
      %2561 = vmatpush1.bf16.xpose.msra.mxu0 0
      %2562 = vmatprep.subr.bf16.mxu0 0
      %2563 = vmatpush1.bf16.xpose.msra.mxu0 0
      %2564 = vmatprep.subr.bf16.mxu0 0
      %2565 = vmatpush1.bf16.xpose.msra.mxu0 0
      %2566 = vmatprep.subr.bf16.mxu0 0
      %2567 = vmatpush1.bf16.xpose.msra.mxu0 0
      %2568 = vmatprep.subr.bf16.mxu0 0
      %2569 = vmatpush1.bf16.xpose.msra.mxu0 0
      %2570 = vmatprep.subr.bf16.mxu0 0
      %2571 = vmatpush1.bf16.xpose.msra.mxu0 %v2556
      %2572 = vmatprep.subr.bf16.mxu0 0
      %2573 = vmatpush1.bf16.xpose.msra.mxu0 %v2553
      %2574 = vmatprep.subr.bf16.mxu0 0
      %2575 = vmatpush2.bf16.xpose.msra.mxu0 0
      %2576 = vmatprep.subr.bf16.mxu0 0
      %2577 = vmatpush2.bf16.xpose.msra.mxu0 0
      %2578 = vmatprep.subr.bf16.mxu0 0
      %2579 = vmatpush2.bf16.xpose.msra.mxu0 0
      %2580 = vmatprep.subr.bf16.mxu0 0
      %2581 = vmatpush2.bf16.xpose.msra.mxu0 0
      %2582 = vmatprep.subr.bf16.mxu0 0
      %2583 = vmatpush2.bf16.xpose.msra.mxu0 0
      %2584 = vmatprep.subr.bf16.mxu0 0
      %2585 = vmatpush2.bf16.xpose.msra.mxu0 0
      %2586 = vmatprep.subr.bf16.mxu0 0
      %2587 = vmatpush2.bf16.xpose.msra.mxu0 0
      %2588 = vmatprep.subr.bf16.mxu0 0
      %2589 = vmatpush2.bf16.xpose.msra.mxu0 0
      %2590 = vmatprep.mubr.bf16.mxu0 0
      %2591 = vmatmul.mubr.bf16.gmra.mxu0 %v2547
      %v2592 = vpop.f32.mrf.mxu0
      %v2593 = vadd.f32 %v519, %v2592
      %v2594 = vpop.f32.mrf.mxu0
      %v2595 = vpop.f32.mrf.mxu0
      %v2596 = vadd.f32 %v519, %v2595
      %v2597 = vpop.f32.mrf.mxu0
      %2598 = vmatprep.mubr.bf16.mxu0 0
      %2599 = vmatmul.mubr.bf16.gmra.mxu0 %v2550
      %v2600 = vpop.f32.mrf.mxu0
      %v2601 = vadd.f32 %v519, %v2600
      %v2602 = vpop.f32.mrf.mxu0
      %v2603 = vpop.f32.mrf.mxu0
      %v2604 = vpop.f32.mrf.mxu0
      %2605 = vdwg.mxu0
      %v2606 = vsel %vm1137, %v2365, -inf
      %2607 = vmax.xlane.f32.xlu0 %v2606
      %v2608 = vpop.xlane.xlu0 %2607
      %v2609 = vsel %vm1137, %v2368, -inf
      %2610 = vmax.xlane.f32.xlu0 %v2609
      %v2611 = vpop.xlane.xlu0 %2610
      %v2612 = vsel %vm1137, %v2373, -inf
      %2613 = vmax.xlane.f32.xlu0 %v2612
      %v2614 = vpop.xlane.xlu0 %2613
      %v2615 = vsel %vm1137, %v2441, -inf
      %2616 = vmax.xlane.f32.xlu0 %v2615
      %v2617 = vpop.xlane.xlu0 %2616
      %v2618 = vsel %vm1137, %v2444, -inf
      %2619 = vmax.xlane.f32.xlu0 %v2618
      %v2620 = vpop.xlane.xlu0 %2619
      %v2621 = vsel %vm1137, %v2449, -inf
      %2622 = vmax.xlane.f32.xlu0 %v2621
      %v2623 = vpop.xlane.xlu0 %2622
      %v2624 = vsel %vm1137, %v2517, -inf
      %2625 = vmax.xlane.f32.xlu0 %v2624
      %v2626 = vpop.xlane.xlu0 %2625
      %v2627 = vsel %vm1137, %v2520, -inf
      %2628 = vmax.xlane.f32.xlu0 %v2627
      %v2629 = vpop.xlane.xlu0 %2628
      %v2630 = vsel %vm1137, %v2525, -inf
      %2631 = vmax.xlane.f32.xlu0 %v2630
      %v2632 = vpop.xlane.xlu0 %2631
      %v2633 = vsel %vm1137, %v2593, -inf
      %2634 = vmax.xlane.f32.xlu0 %v2633
      %v2635 = vpop.xlane.xlu0 %2634
      %v2636 = vsel %vm1137, %v2596, -inf
      %2637 = vmax.xlane.f32.xlu0 %v2636
      %v2638 = vpop.xlane.xlu0 %2637
      %v2639 = vsel %vm1137, %v2601, -inf
      %2640 = vmax.xlane.f32.xlu0 %v2639
      %v2641 = vpop.xlane.xlu0 %2640
      %v2642 = vsub.f32 %v2365, %v2608
      %v2643 = vsub.f32 %v2368, %v2611
      %v2644 = vsub.f32 %v2373, %v2614
      %v2645 = vsub.f32 %v2441, %v2617
      %v2646 = vsub.f32 %v2444, %v2620
      %v2647 = vsub.f32 %v2449, %v2623
      %v2648 = vsub.f32 %v2517, %v2626
      %v2649 = vsub.f32 %v2520, %v2629
      %v2650 = vsub.f32 %v2525, %v2632
      %v2651 = vsub.f32 %v2593, %v2635
      %v2652 = vsub.f32 %v2596, %v2638
      %v2653 = vsub.f32 %v2601, %v2641
      %v2654 = vmul.f32 %v2642, 1.442695
      %v2655 = vpow.pop %v2654
      %v2656 = vmul.f32 %v2643, 1.442695
      %v2657 = vpow.pop %v2656
      %v2658 = vmul.f32 %v2644, 1.442695
      %v2659 = vpow.pop %v2658
      %v2660 = vmul.f32 %v2645, 1.442695
      %v2661 = vpow.pop %v2660
      %v2662 = vmul.f32 %v2646, 1.442695
      %v2663 = vpow.pop %v2662
      %v2664 = vmul.f32 %v2647, 1.442695
      %v2665 = vpow.pop %v2664
      %v2666 = vmul.f32 %v2648, 1.442695
      %v2667 = vpow.pop %v2666
      %v2668 = vmul.f32 %v2649, 1.442695
      %v2669 = vpow.pop %v2668
      %v2670 = vmul.f32 %v2650, 1.442695
      %v2671 = vpow.pop %v2670
      %v2672 = vmul.f32 %v2651, 1.442695
      %v2673 = vpow.pop %v2672
      %v2674 = vmul.f32 %v2652, 1.442695
      %v2675 = vpow.pop %v2674
      %v2676 = vmul.f32 %v2653, 1.442695
      %v2677 = vpow.pop %v2676
      %v2678 = vsel %vm1137, %v2655, 0.0
      %2679 = vadd.xlane.f32.xlu0 %v2678
      %v2680 = vpop.xlane.xlu0 %2679
      %v2681 = vsel %vm1137, %v2657, 0.0
      %2682 = vadd.xlane.f32.xlu0 %v2681
      %v2683 = vpop.xlane.xlu0 %2682
      %v2684 = vsel %vm1137, %v2659, 0.0
      %2685 = vadd.xlane.f32.xlu0 %v2684
      %v2686 = vpop.xlane.xlu0 %2685
      %v2687 = vsel %vm1137, %v2661, 0.0
      %2688 = vadd.xlane.f32.xlu0 %v2687
      %v2689 = vpop.xlane.xlu0 %2688
      %v2690 = vsel %vm1137, %v2663, 0.0
      %2691 = vadd.xlane.f32.xlu0 %v2690
      %v2692 = vpop.xlane.xlu0 %2691
      %v2693 = vsel %vm1137, %v2665, 0.0
      %2694 = vadd.xlane.f32.xlu0 %v2693
      %v2695 = vpop.xlane.xlu0 %2694
      %v2696 = vsel %vm1137, %v2667, 0.0
      %2697 = vadd.xlane.f32.xlu0 %v2696
      %v2698 = vpop.xlane.xlu0 %2697
      %v2699 = vsel %vm1137, %v2669, 0.0
      %2700 = vadd.xlane.f32.xlu0 %v2699
      %v2701 = vpop.xlane.xlu0 %2700
      %v2702 = vsel %vm1137, %v2671, 0.0
      %2703 = vadd.xlane.f32.xlu0 %v2702
      %v2704 = vpop.xlane.xlu0 %2703
      %v2705 = vsel %vm1137, %v2673, 0.0
      %2706 = vadd.xlane.f32.xlu0 %v2705
      %v2707 = vpop.xlane.xlu0 %2706
      %v2708 = vsel %vm1137, %v2675, 0.0
      %2709 = vadd.xlane.f32.xlu0 %v2708
      %v2710 = vpop.xlane.xlu0 %2709
      %v2711 = vsel %vm1137, %v2677, 0.0
      %2712 = vadd.xlane.f32.xlu0 %v2711
      %v2713 = vpop.xlane.xlu0 %2712
      %v2714 = vrcp.pop %v2680
      %v2715 = vrcp.pop %v2683
      %v2716 = vrcp.pop %v2686
      %v2717 = vrcp.pop %v2689
      %v2718 = vrcp.pop %v2692
      %v2719 = vrcp.pop %v2695
      %v2720 = vrcp.pop %v2698
      %v2721 = vrcp.pop %v2701
      %v2722 = vrcp.pop %v2704
      %v2723 = vrcp.pop %v2707
      %v2724 = vrcp.pop %v2710
      %v2725 = vrcp.pop %v2713
      %v2726 = vmul.f32 %v2655, %v2714
      %v2727 = vmul.f32 %v2657, %v2715
      %v2728 = vmul.f32 %v2659, %v2716
      %v2729 = vmul.f32 %v2661, %v2717
      %v2730 = vmul.f32 %v2663, %v2718
      %v2731 = vmul.f32 %v2665, %v2719
      %v2732 = vmul.f32 %v2667, %v2720
      %v2733 = vmul.f32 %v2669, %v2721
      %v2734 = vmul.f32 %v2671, %v2722
      %v2735 = vmul.f32 %v2673, %v2723
      %v2736 = vmul.f32 %v2675, %v2724
      %v2737 = vmul.f32 %v2677, %v2725
      %v2738 = vpack.c.bf16 %v2727, %v2726
      %v2739 = vpack.c.bf16 %v2728, %v2728
      %v2740 = vpack.c.bf16 %v2730, %v2729
      %v2741 = vpack.c.bf16 %v2731, %v2731
      %v2742 = vpack.c.bf16 %v2733, %v2732
      %v2743 = vpack.c.bf16 %v2734, %v2734
      %v2744 = vpack.c.bf16 %v2736, %v2735
      %v2745 = vpack.c.bf16 %v2737, %v2737
      %v2746 = vld [vmem:[#allocation4] sm:$0xf]
      %v2747 = vld [vmem:[#allocation4 + $0x4] sm:$0xf]
      %v2748 = vld [vmem:[#allocation4 + $0x8] sm:$0xf]
      %v2749 = vld [vmem:[#allocation4 + $0xc] sm:$0xf]
      %v2750 = vld [vmem:[#allocation4 + $0x10] sm:$0xf]
      %v2751 = vld [vmem:[#allocation4 + $0x14] sm:$0xf]
      %v2752 = vld [vmem:[#allocation4 + $0x18] sm:$0xf]
      %v2753 = vld [vmem:[#allocation4 + $0x1c] sm:$0xf]
      %v2754 = vld [vmem:[#allocation4 + $0x20] sm:$0xf]
      %v2755 = vld [vmem:[#allocation4 + $0x24] sm:$0xf]
      %v2756 = vld [vmem:[#allocation4 + $0x28] sm:$0xf]
      %v2757 = vld [vmem:[#allocation4 + $0x2c] sm:$0xf]
      %v2761 = vunpack.c.l.b16 %v2746
      %v2762 = vunpack.c.l.b16 %v2747
      %v2763 = vunpack.c.l.b16 %v2748
      %v2764 = vpack.c.b16 %v2762, %v2761
      %v2765 = vpack.c.b16 %v2763, %v2763
      %v2768 = vsel %vm1137, %v2738, 0
      %v2771 = vsel %vm1137, %v2739, 0
      %v2774 = vsel %vm409, %v2765, 0
      %2776 = vmatprep.subr.bf16.mxu0 0
      %2777 = vmatpush1.bf16.msra.mxu0 0
      %2778 = vmatprep.subr.bf16.mxu0 0
      %2779 = vmatpush1.bf16.msra.mxu0 0
      %2780 = vmatprep.subr.bf16.mxu0 0
      %2781 = vmatpush1.bf16.msra.mxu0 0
      %2782 = vmatprep.subr.bf16.mxu0 0
      %2783 = vmatpush1.bf16.msra.mxu0 0
      %2784 = vmatprep.subr.bf16.mxu0 0
      %2785 = vmatpush1.bf16.msra.mxu0 0
      %2786 = vmatprep.subr.bf16.mxu0 0
      %2787 = vmatpush1.bf16.msra.mxu0 0
      %2788 = vmatprep.subr.bf16.mxu0 0
      %2789 = vmatpush1.bf16.msra.mxu0 %v2774
      %2790 = vmatprep.subr.bf16.mxu0 0
      %2791 = vmatpush1.bf16.msra.mxu0 %v2764
      %2792 = vmatprep.subr.bf16.mxu0 0
      %2793 = vmatpush2.bf16.msra.mxu0 0
      %2794 = vmatprep.subr.bf16.mxu0 0
      %2795 = vmatpush2.bf16.msra.mxu0 0
      %2796 = vmatprep.subr.bf16.mxu0 0
      %2797 = vmatpush2.bf16.msra.mxu0 0
      %2798 = vmatprep.subr.bf16.mxu0 0
      %2799 = vmatpush2.bf16.msra.mxu0 0
      %2800 = vmatprep.subr.bf16.mxu0 0
      %2801 = vmatpush2.bf16.msra.mxu0 0
      %2802 = vmatprep.subr.bf16.mxu0 0
      %2803 = vmatpush2.bf16.msra.mxu0 0
      %2804 = vmatprep.subr.bf16.mxu0 0
      %2805 = vmatpush2.bf16.msra.mxu0 0
      %2806 = vmatprep.subr.bf16.mxu0 0
      %2807 = vmatpush2.bf16.msra.mxu0 0
      %2808 = vmatprep.mubr.bf16.mxu0 0
      %2809 = vmatmul.mubr.bf16.gmra.mxu0 %v2768
      %v2810 = vpop.f32.mrf.mxu0
      %v2811 = vadd.f32 0.0, %v2810
      %v2812 = vpop.f32.mrf.mxu0
      %v2813 = vpop.f32.mrf.mxu0
      %v2814 = vadd.f32 0.0, %v2813
      %v2815 = vpop.f32.mrf.mxu0
      %2816 = vmatprep.mubr.bf16.mxu0 0
      %2817 = vmatmul.mubr.bf16.gmra.mxu0 %v2771
      %v2818 = vpop.f32.mrf.mxu0
      %v2819 = vadd.f32 0.0, %v2818
      %v2820 = vpop.f32.mrf.mxu0
      %v2821 = vpop.f32.mrf.mxu0
      %v2822 = vpop.f32.mrf.mxu0
      %2823 = vdwg.mxu0
      %v2827 = vunpack.c.l.b16 %v2749
      %v2828 = vunpack.c.l.b16 %v2750
      %v2829 = vunpack.c.l.b16 %v2751
      %v2830 = vpack.c.b16 %v2828, %v2827
      %v2831 = vpack.c.b16 %v2829, %v2829
      %v2834 = vsel %vm1137, %v2740, 0
      %v2837 = vsel %vm1137, %v2741, 0
      %v2840 = vsel %vm409, %v2831, 0
      %2842 = vmatprep.subr.bf16.mxu0 0
      %2843 = vmatpush1.bf16.msra.mxu0 0
      %2844 = vmatprep.subr.bf16.mxu0 0
      %2845 = vmatpush1.bf16.msra.mxu0 0
      %2846 = vmatprep.subr.bf16.mxu0 0
      %2847 = vmatpush1.bf16.msra.mxu0 0
      %2848 = vmatprep.subr.bf16.mxu0 0
      %2849 = vmatpush1.bf16.msra.mxu0 0
      %2850 = vmatprep.subr.bf16.mxu0 0
      %2851 = vmatpush1.bf16.msra.mxu0 0
      %2852 = vmatprep.subr.bf16.mxu0 0
      %2853 = vmatpush1.bf16.msra.mxu0 0
      %2854 = vmatprep.subr.bf16.mxu0 0
      %2855 = vmatpush1.bf16.msra.mxu0 %v2840
      %2856 = vmatprep.subr.bf16.mxu0 0
      %2857 = vmatpush1.bf16.msra.mxu0 %v2830
      %2858 = vmatprep.subr.bf16.mxu0 0
      %2859 = vmatpush2.bf16.msra.mxu0 0
      %2860 = vmatprep.subr.bf16.mxu0 0
      %2861 = vmatpush2.bf16.msra.mxu0 0
      %2862 = vmatprep.subr.bf16.mxu0 0
      %2863 = vmatpush2.bf16.msra.mxu0 0
      %2864 = vmatprep.subr.bf16.mxu0 0
      %2865 = vmatpush2.bf16.msra.mxu0 0
      %2866 = vmatprep.subr.bf16.mxu0 0
      %2867 = vmatpush2.bf16.msra.mxu0 0
      %2868 = vmatprep.subr.bf16.mxu0 0
      %2869 = vmatpush2.bf16.msra.mxu0 0
      %2870 = vmatprep.subr.bf16.mxu0 0
      %2871 = vmatpush2.bf16.msra.mxu0 0
      %2872 = vmatprep.subr.bf16.mxu0 0
      %2873 = vmatpush2.bf16.msra.mxu0 0
      %2874 = vmatprep.mubr.bf16.mxu0 0
      %2875 = vmatmul.mubr.bf16.gmra.mxu0 %v2834
      %v2876 = vpop.f32.mrf.mxu0
      %v2877 = vadd.f32 0.0, %v2876
      %v2878 = vpop.f32.mrf.mxu0
      %v2879 = vpop.f32.mrf.mxu0
      %v2880 = vadd.f32 0.0, %v2879
      %v2881 = vpop.f32.mrf.mxu0
      %2882 = vmatprep.mubr.bf16.mxu0 0
      %2883 = vmatmul.mubr.bf16.gmra.mxu0 %v2837
      %v2884 = vpop.f32.mrf.mxu0
      %v2885 = vadd.f32 0.0, %v2884
      %v2886 = vpop.f32.mrf.mxu0
      %v2887 = vpop.f32.mrf.mxu0
      %v2888 = vpop.f32.mrf.mxu0
      %2889 = vdwg.mxu0
      %v2893 = vunpack.c.l.b16 %v2752
      %v2894 = vunpack.c.l.b16 %v2753
      %v2895 = vunpack.c.l.b16 %v2754
      %v2896 = vpack.c.b16 %v2894, %v2893
      %v2897 = vpack.c.b16 %v2895, %v2895
      %v2900 = vsel %vm1137, %v2742, 0
      %v2903 = vsel %vm1137, %v2743, 0
      %v2906 = vsel %vm409, %v2897, 0
      %2908 = vmatprep.subr.bf16.mxu0 0
      %2909 = vmatpush1.bf16.msra.mxu0 0
      %2910 = vmatprep.subr.bf16.mxu0 0
      %2911 = vmatpush1.bf16.msra.mxu0 0
      %2912 = vmatprep.subr.bf16.mxu0 0
      %2913 = vmatpush1.bf16.msra.mxu0 0
      %2914 = vmatprep.subr.bf16.mxu0 0
      %2915 = vmatpush1.bf16.msra.mxu0 0
      %2916 = vmatprep.subr.bf16.mxu0 0
      %2917 = vmatpush1.bf16.msra.mxu0 0
      %2918 = vmatprep.subr.bf16.mxu0 0
      %2919 = vmatpush1.bf16.msra.mxu0 0
      %2920 = vmatprep.subr.bf16.mxu0 0
      %2921 = vmatpush1.bf16.msra.mxu0 %v2906
      %2922 = vmatprep.subr.bf16.mxu0 0
      %2923 = vmatpush1.bf16.msra.mxu0 %v2896
      %2924 = vmatprep.subr.bf16.mxu0 0
      %2925 = vmatpush2.bf16.msra.mxu0 0
      %2926 = vmatprep.subr.bf16.mxu0 0
      %2927 = vmatpush2.bf16.msra.mxu0 0
      %2928 = vmatprep.subr.bf16.mxu0 0
      %2929 = vmatpush2.bf16.msra.mxu0 0
      %2930 = vmatprep.subr.bf16.mxu0 0
      %2931 = vmatpush2.bf16.msra.mxu0 0
      %2932 = vmatprep.subr.bf16.mxu0 0
      %2933 = vmatpush2.bf16.msra.mxu0 0
      %2934 = vmatprep.subr.bf16.mxu0 0
      %2935 = vmatpush2.bf16.msra.mxu0 0
      %2936 = vmatprep.subr.bf16.mxu0 0
      %2937 = vmatpush2.bf16.msra.mxu0 0
      %2938 = vmatprep.subr.bf16.mxu0 0
      %2939 = vmatpush2.bf16.msra.mxu0 0
      %2940 = vmatprep.mubr.bf16.mxu0 0
      %2941 = vmatmul.mubr.bf16.gmra.mxu0 %v2900
      %v2942 = vpop.f32.mrf.mxu0
      %v2943 = vadd.f32 0.0, %v2942
      %v2944 = vpop.f32.mrf.mxu0
      %v2945 = vpop.f32.mrf.mxu0
      %v2946 = vadd.f32 0.0, %v2945
      %v2947 = vpop.f32.mrf.mxu0
      %2948 = vmatprep.mubr.bf16.mxu0 0
      %2949 = vmatmul.mubr.bf16.gmra.mxu0 %v2903
      %v2950 = vpop.f32.mrf.mxu0
      %v2951 = vadd.f32 0.0, %v2950
      %v2952 = vpop.f32.mrf.mxu0
      %v2953 = vpop.f32.mrf.mxu0
      %v2954 = vpop.f32.mrf.mxu0
      %2955 = vdwg.mxu0
      %v2959 = vunpack.c.l.b16 %v2755
      %v2960 = vunpack.c.l.b16 %v2756
      %v2961 = vunpack.c.l.b16 %v2757
      %v2962 = vpack.c.b16 %v2960, %v2959
      %v2963 = vpack.c.b16 %v2961, %v2961
      %v2966 = vsel %vm1137, %v2744, 0
      %v2969 = vsel %vm1137, %v2745, 0
      %v2972 = vsel %vm409, %v2963, 0
      %2974 = vmatprep.subr.bf16.mxu0 0
      %2975 = vmatpush1.bf16.msra.mxu0 0
      %2976 = vmatprep.subr.bf16.mxu0 0
      %2977 = vmatpush1.bf16.msra.mxu0 0
      %2978 = vmatprep.subr.bf16.mxu0 0
      %2979 = vmatpush1.bf16.msra.mxu0 0
      %2980 = vmatprep.subr.bf16.mxu0 0
      %2981 = vmatpush1.bf16.msra.mxu0 0
      %2982 = vmatprep.subr.bf16.mxu0 0
      %2983 = vmatpush1.bf16.msra.mxu0 0
      %2984 = vmatprep.subr.bf16.mxu0 0
      %2985 = vmatpush1.bf16.msra.mxu0 0
      %2986 = vmatprep.subr.bf16.mxu0 0
      %2987 = vmatpush1.bf16.msra.mxu0 %v2972
      %2988 = vmatprep.subr.bf16.mxu0 0
      %2989 = vmatpush1.bf16.msra.mxu0 %v2962
      %2990 = vmatprep.subr.bf16.mxu0 0
      %2991 = vmatpush2.bf16.msra.mxu0 0
      %2992 = vmatprep.subr.bf16.mxu0 0
      %2993 = vmatpush2.bf16.msra.mxu0 0
      %2994 = vmatprep.subr.bf16.mxu0 0
      %2995 = vmatpush2.bf16.msra.mxu0 0
      %2996 = vmatprep.subr.bf16.mxu0 0
      %2997 = vmatpush2.bf16.msra.mxu0 0
      %2998 = vmatprep.subr.bf16.mxu0 0
      %2999 = vmatpush2.bf16.msra.mxu0 0
      %3000 = vmatprep.subr.bf16.mxu0 0
      %3001 = vmatpush2.bf16.msra.mxu0 0
      %3002 = vmatprep.subr.bf16.mxu0 0
      %3003 = vmatpush2.bf16.msra.mxu0 0
      %3004 = vmatprep.subr.bf16.mxu0 0
      %3005 = vmatpush2.bf16.msra.mxu0 0
      %3006 = vmatprep.mubr.bf16.mxu0 0
      %3007 = vmatmul.mubr.bf16.gmra.mxu0 %v2966
      %v3008 = vpop.f32.mrf.mxu0
      %v3009 = vadd.f32 0.0, %v3008
      %v3010 = vpop.f32.mrf.mxu0
      %v3011 = vpop.f32.mrf.mxu0
      %v3012 = vadd.f32 0.0, %v3011
      %v3013 = vpop.f32.mrf.mxu0
      %3014 = vmatprep.mubr.bf16.mxu0 0
      %3015 = vmatmul.mubr.bf16.gmra.mxu0 %v2969
      %v3016 = vpop.f32.mrf.mxu0
      %v3017 = vadd.f32 0.0, %v3016
      %v3018 = vpop.f32.mrf.mxu0
      %v3019 = vpop.f32.mrf.mxu0
      %v3020 = vpop.f32.mrf.mxu0
      %3021 = vdwg.mxu0
      %v3022 = vpack.c.bf16 %v2814, %v2811
      %v3023 = vpack.c.bf16 %v2819, %v2819
      %v3026 = vunpack.c.l.b16 %v3022
      %v3027 = vunpack.c.h.b16 %v3022
      %v3028 = vunpack.c.l.b16 %v3023
      %v3029 = vpack.c.b16 %v3026, %v3026
      %v3030 = vpack.c.b16 %v3027, %v3027
      %v3031 = vpack.c.b16 %v3028, %v3028
      %3035 = vst.msk [vmem:[#allocation5] sm:$0xf] %vm663, %v3029
      %3036 = vst.msk [vmem:[#allocation5 + $0x4] sm:$0xf] %vm663, %v3030
      %3037 = vst.msk [vmem:[#allocation5 + $0x8] sm:$0xf] %vm663, %v3031
      %v3038 = vpack.c.bf16 %v2880, %v2877
      %v3039 = vpack.c.bf16 %v2885, %v2885
      %v3042 = vunpack.c.l.b16 %v3038
      %v3043 = vunpack.c.h.b16 %v3038
      %v3044 = vunpack.c.l.b16 %v3039
      %v3045 = vpack.c.b16 %v3042, %v3042
      %v3046 = vpack.c.b16 %v3043, %v3043
      %v3047 = vpack.c.b16 %v3044, %v3044
      %3048 = vrot.lane.b32.xlu0 %v3045, 8
      %v3049 = vpop.permute.xlu0 %3048
      %3050 = vrot.lane.b32.xlu0 %v3046, 8
      %v3051 = vpop.permute.xlu0 %3050
      %3052 = vrot.lane.b32.xlu0 %v3047, 8
      %v3053 = vpop.permute.xlu0 %3052
      %3057 = vst.msk [vmem:[#allocation5] sm:$0xf] %vm1589, %v3049
      %3058 = vst.msk [vmem:[#allocation5 + $0x4] sm:$0xf] %vm1589, %v3051
      %3059 = vst.msk [vmem:[#allocation5 + $0x8] sm:$0xf] %vm1589, %v3053
      %v3060 = vpack.c.bf16 %v2946, %v2943
      %v3061 = vpack.c.bf16 %v2951, %v2951
      %v3064 = vunpack.c.l.b16 %v3060
      %v3065 = vunpack.c.h.b16 %v3060
      %v3066 = vunpack.c.l.b16 %v3061
      %v3067 = vpack.c.b16 %v3064, %v3064
      %v3068 = vpack.c.b16 %v3065, %v3065
      %v3069 = vpack.c.b16 %v3066, %v3066
      %3070 = vrot.lane.b32.xlu0 %v3067, 16
      %v3071 = vpop.permute.xlu0 %3070
      %3072 = vrot.lane.b32.xlu0 %v3068, 16
      %v3073 = vpop.permute.xlu0 %3072
      %3074 = vrot.lane.b32.xlu0 %v3069, 16
      %v3075 = vpop.permute.xlu0 %3074
      %3079 = vst.msk [vmem:[#allocation5] sm:$0xf] %vm1612, %v3071
      %3080 = vst.msk [vmem:[#allocation5 + $0x4] sm:$0xf] %vm1612, %v3073
      %3081 = vst.msk [vmem:[#allocation5 + $0x8] sm:$0xf] %vm1612, %v3075
      %v3082 = vpack.c.bf16 %v3012, %v3009
      %v3083 = vpack.c.bf16 %v3017, %v3017
      %v3086 = vunpack.c.l.b16 %v3082
      %v3087 = vunpack.c.h.b16 %v3082
      %v3088 = vunpack.c.l.b16 %v3083
      %v3089 = vpack.c.b16 %v3086, %v3086
      %v3090 = vpack.c.b16 %v3087, %v3087
      %v3091 = vpack.c.b16 %v3088, %v3088
      %3092 = vrot.lane.b32.xlu0 %v3089, 24
      %v3093 = vpop.permute.xlu0 %3092
      %3094 = vrot.lane.b32.xlu0 %v3090, 24
      %v3095 = vpop.permute.xlu0 %3094
      %3096 = vrot.lane.b32.xlu0 %v3091, 24
      %v3097 = vpop.permute.xlu0 %3096
      %3101 = vst.msk [vmem:[#allocation5] sm:$0xf] %vm1635, %v3093
      %3102 = vst.msk [vmem:[#allocation5 + $0x4] sm:$0xf] %vm1635, %v3095
      %3103 = vst.msk [vmem:[#allocation5 + $0x8] sm:$0xf] %vm1635, %v3097
      %v3104 = vld [vmem:[#allocation5] sm:$0xf]
      %v3105 = vld [vmem:[#allocation5 + $0x4] sm:$0xf]
      %v3106 = vld [vmem:[#allocation5 + $0x8] sm:$0xf]
      %s3107 = scalar_lea.vmem %s6, 16
      %v3108 = vld [vmem:[%s3107] sm:$0xf]
      %v3109 = vld [vmem:[%s3107 + $0x4] sm:$0xf]
      %v3110 = vld [vmem:[%s3107 + $0x8] sm:$0xf]
      %v3111 = vld [vmem:[%s3107 + $0xc] sm:$0xf]
      %v3115 = vunpack.c.l.b16 %v3104
      %v3116 = vunpack.c.l.b16 %v3105
      %v3117 = vunpack.c.l.b16 %v3106
      %v3118 = vpack.c.b16 %v3116, %v3115
      %v3119 = vpack.c.b16 %v3117, %v3117
      %v3124 = vunpack.c.l.b16 %v3108
      %v3125 = vunpack.c.l.b16 %v3109
      %v3126 = vunpack.c.l.b16 %v3110
      %v3127 = vunpack.c.l.b16 %v3111
      %v3128 = vpack.c.b16 %v3125, %v3124
      %v3129 = vpack.c.b16 %v3127, %v3126
      %v3133 = vsel %vm461, %v3118, 0
      %v3136 = vsel %vm461, %v3119, 0
      %3138 = vmatprep.subr.bf16.mxu0 0
      %3139 = vmatpush1.bf16.msra.mxu0 0
      %3140 = vmatprep.subr.bf16.mxu0 0
      %3141 = vmatpush1.bf16.msra.mxu0 0
      %3142 = vmatprep.subr.bf16.mxu0 0
      %3143 = vmatpush1.bf16.msra.mxu0 0
      %3144 = vmatprep.subr.bf16.mxu0 0
      %3145 = vmatpush1.bf16.msra.mxu0 0
      %3146 = vmatprep.subr.bf16.mxu0 0
      %3147 = vmatpush1.bf16.msra.mxu0 0
      %3148 = vmatprep.subr.bf16.mxu0 0
      %3149 = vmatpush1.bf16.msra.mxu0 0
      %3150 = vmatprep.subr.bf16.mxu0 0
      %3151 = vmatpush1.bf16.msra.mxu0 %v3129
      %3152 = vmatprep.subr.bf16.mxu0 0
      %3153 = vmatpush1.bf16.msra.mxu0 %v3128
      %3154 = vmatprep.subr.bf16.mxu0 0
      %3155 = vmatpush2.bf16.msra.mxu0 0
      %3156 = vmatprep.subr.bf16.mxu0 0
      %3157 = vmatpush2.bf16.msra.mxu0 0
      %3158 = vmatprep.subr.bf16.mxu0 0
      %3159 = vmatpush2.bf16.msra.mxu0 0
      %3160 = vmatprep.subr.bf16.mxu0 0
      %3161 = vmatpush2.bf16.msra.mxu0 0
      %3162 = vmatprep.subr.bf16.mxu0 0
      %3163 = vmatpush2.bf16.msra.mxu0 0
      %3164 = vmatprep.subr.bf16.mxu0 0
      %3165 = vmatpush2.bf16.msra.mxu0 0
      %3166 = vmatprep.subr.bf16.mxu0 0
      %3167 = vmatpush2.bf16.msra.mxu0 0
      %3168 = vmatprep.subr.bf16.mxu0 0
      %3169 = vmatpush2.bf16.msra.mxu0 0
      %3170 = vmatprep.mubr.bf16.mxu0 0
      %3171 = vmatmul.mubr.bf16.gmra.mxu0 %v3133
      %v3172 = vpop.f32.mrf.mxu0
      %v3173 = vadd.f32 0.0, %v3172
      %v3174 = vpop.f32.mrf.mxu0
      %v3175 = vpop.f32.mrf.mxu0
      %v3176 = vadd.f32 0.0, %v3175
      %v3177 = vpop.f32.mrf.mxu0
      %3178 = vmatprep.mubr.bf16.mxu0 0
      %3179 = vmatmul.mubr.bf16.gmra.mxu0 %v3136
      %v3180 = vpop.f32.mrf.mxu0
      %v3181 = vadd.f32 0.0, %v3180
      %v3182 = vpop.f32.mrf.mxu0
      %v3183 = vpop.f32.mrf.mxu0
      %v3184 = vpop.f32.mrf.mxu0
      %3185 = vdwg.mxu0
      %v3186 = vadd.f32 %v1995, %v3173
      %v3187 = vadd.f32 %v1996, %v3176
      %v3188 = vadd.f32 %v1997, %v3181
      %v3189 = vlaneseq
      %v3190 = vshrl.u32 %v3189, 7
      %v3191 = vsub.s32 5, %v3190
      %v3192 = vrot.slane %v1999, %v3191
      %v3193 = vadd.f32 %v3186, %v3192
      %v3194 = vadd.f32 %v3187, %v3192
      %v3195 = vadd.f32 %v3188, %v3192
      %v3196 = vsel %vm461, %v3193, 0.0
      %3197 = vadd.xlane.f32.xlu0 %v3196
      %v3198 = vpop.xlane.xlu0 %3197
      %v3199 = vsel %vm461, %v3194, 0.0
      %3200 = vadd.xlane.f32.xlu0 %v3199
      %v3201 = vpop.xlane.xlu0 %3200
      %v3202 = vsel %vm461, %v3195, 0.0
      %3203 = vadd.xlane.f32.xlu0 %v3202
      %v3204 = vpop.xlane.xlu0 %3203
      %v3205 = vmul.f32 %v3198, %v471
      %v3206 = vmul.f32 %v3201, %v471
      %v3207 = vmul.f32 %v3204, %v471
      %v3208 = vsub.f32 %v3193, %v3205
      %v3209 = vsub.f32 %v3194, %v3206
      %v3210 = vsub.f32 %v3195, %v3207
      %v3211 = vmul.f32 %v3208, %v3208
      %v3212 = vmul.f32 %v3209, %v3209
      %v3213 = vmul.f32 %v3210, %v3210
      %v3214 = vsel %vm461, %v3211, 0.0
      %3215 = vadd.xlane.f32.xlu0 %v3214
      %v3216 = vpop.xlane.xlu0 %3215
      %v3217 = vsel %vm461, %v3212, 0.0
      %3218 = vadd.xlane.f32.xlu0 %v3217
      %v3219 = vpop.xlane.xlu0 %3218
      %v3220 = vsel %vm461, %v3213, 0.0
      %3221 = vadd.xlane.f32.xlu0 %v3220
      %v3222 = vpop.xlane.xlu0 %3221
      %v3223 = vmul.f32 %v3216, %v471
      %v3224 = vmul.f32 %v3219, %v471
      %v3225 = vmul.f32 %v3222, %v471
      %v3226 = vadd.f32 %v3223, 1e-05
      %v3227 = vadd.f32 %v3224, 1e-05
      %v3228 = vadd.f32 %v3225, 1e-05
      %v3229 = vrsqrt.pop %v3226
      %v3230 = vrsqrt.pop %v3227
      %v3231 = vrsqrt.pop %v3228
      %v3232 = vmul.f32 %v3208, %v3229
      %v3233 = vmul.f32 %v3209, %v3230
      %v3234 = vmul.f32 %v3210, %v3231
      %v3235 = vlaneseq
      %v3236 = vshrl.u32 %v3235, 7
      %v3237 = vsub.s32 2, %v3236
      %v3238 = vrot.slane %v1999, %v3237
      %v3239 = vmul.f32 %v3232, %v3238
      %v3240 = vmul.f32 %v3233, %v3238
      %v3241 = vmul.f32 %v3234, %v3238
      %v3242 = vlaneseq
      %v3243 = vshrl.u32 %v3242, 7
      %v3244 = vsub.s32 3, %v3243
      %v3245 = vrot.slane %v1999, %v3244
      %v3246 = vadd.f32 %v3239, %v3245
      %v3247 = vadd.f32 %v3240, %v3245
      %v3248 = vadd.f32 %v3241, %v3245
      %v3249 = vpack.c.bf16 %v3247, %v3246
      %v3250 = vpack.c.bf16 %v3248, %v3248
      %s3251 = scalar_lea.vmem %s7, 16
      %v3252 = vld [vmem:[%s3251] sm:$0xf]
      %v3253 = vld [vmem:[%s3251 + $0x4] sm:$0xf]
      %v3254 = vld [vmem:[%s3251 + $0x8] sm:$0xf]
      %v3255 = vld [vmem:[%s3251 + $0xc] sm:$0xf]
      %v3256 = vlaneseq
      %v3257 = vshrl.u32 %v3256, 7
      %v3258 = vsub.s32 6, %v3257
      %v3259 = vrot.slane %v1999, %v3258
      %v3264 = vunpack.c.l.b16 %v3252
      %v3265 = vunpack.c.l.b16 %v3253
      %v3266 = vunpack.c.l.b16 %v3254
      %v3267 = vunpack.c.l.b16 %v3255
      %v3268 = vpack.c.b16 %v3265, %v3264
      %v3269 = vpack.c.b16 %v3267, %v3266
      %v3273 = vsel %vm461, %v3249, 0
      %v3276 = vsel %vm461, %v3250, 0
      %3278 = vmatprep.subr.bf16.mxu0 0
      %3279 = vmatpush1.bf16.msra.mxu0 0
      %3280 = vmatprep.subr.bf16.mxu0 0
      %3281 = vmatpush1.bf16.msra.mxu0 0
      %3282 = vmatprep.subr.bf16.mxu0 0
      %3283 = vmatpush1.bf16.msra.mxu0 0
      %3284 = vmatprep.subr.bf16.mxu0 0
      %3285 = vmatpush1.bf16.msra.mxu0 0
      %3286 = vmatprep.subr.bf16.mxu0 0
      %3287 = vmatpush1.bf16.msra.mxu0 0
      %3288 = vmatprep.subr.bf16.mxu0 0
      %3289 = vmatpush1.bf16.msra.mxu0 0
      %3290 = vmatprep.subr.bf16.mxu0 0
      %3291 = vmatpush1.bf16.msra.mxu0 %v3269
      %3292 = vmatprep.subr.bf16.mxu0 0
      %3293 = vmatpush1.bf16.msra.mxu0 %v3268
      %3294 = vmatprep.subr.bf16.mxu0 0
      %3295 = vmatpush2.bf16.msra.mxu0 0
      %3296 = vmatprep.subr.bf16.mxu0 0
      %3297 = vmatpush2.bf16.msra.mxu0 0
      %3298 = vmatprep.subr.bf16.mxu0 0
      %3299 = vmatpush2.bf16.msra.mxu0 0
      %3300 = vmatprep.subr.bf16.mxu0 0
      %3301 = vmatpush2.bf16.msra.mxu0 0
      %3302 = vmatprep.subr.bf16.mxu0 0
      %3303 = vmatpush2.bf16.msra.mxu0 0
      %3304 = vmatprep.subr.bf16.mxu0 0
      %3305 = vmatpush2.bf16.msra.mxu0 0
      %3306 = vmatprep.subr.bf16.mxu0 0
      %3307 = vmatpush2.bf16.msra.mxu0 0
      %3308 = vmatprep.subr.bf16.mxu0 0
      %3309 = vmatpush2.bf16.msra.mxu0 0
      %3310 = vmatprep.mubr.bf16.mxu0 0
      %3311 = vmatmul.mubr.bf16.gmra.mxu0 %v3273
      %v3312 = vpop.f32.mrf.mxu0
      %v3313 = vadd.f32 %v3259, %v3312
      %v3314 = vpop.f32.mrf.mxu0
      %v3315 = vpop.f32.mrf.mxu0
      %v3316 = vadd.f32 %v3259, %v3315
      %v3317 = vpop.f32.mrf.mxu0
      %3318 = vmatprep.mubr.bf16.mxu0 0
      %3319 = vmatmul.mubr.bf16.gmra.mxu0 %v3276
      %v3320 = vpop.f32.mrf.mxu0
      %v3321 = vadd.f32 %v3259, %v3320
      %v3322 = vpop.f32.mrf.mxu0
      %v3323 = vpop.f32.mrf.mxu0
      %v3324 = vpop.f32.mrf.mxu0
      %3325 = vdwg.mxu0
      %v3326 = vmul.f32 %v3313, -1.702
      %v3327 = vmul.f32 %v3316, -1.702
      %v3328 = vmul.f32 %v3321, -1.702
      %v3329 = vmul.f32 %v3326, 1.442695
      %v3330 = vpow.pop %v3329
      %v3331 = vmul.f32 %v3327, 1.442695
      %v3332 = vpow.pop %v3331
      %v3333 = vmul.f32 %v3328, 1.442695
      %v3334 = vpow.pop %v3333
      %v3335 = vadd.f32 %v3330, 1.0
      %v3336 = vadd.f32 %v3332, 1.0
      %v3337 = vadd.f32 %v3334, 1.0
      %v3338 = vrcp.pop %v3335
      %v3339 = vrcp.pop %v3336
      %v3340 = vrcp.pop %v3337
      %v3341 = vmul.f32 %v3313, %v3338
      %v3342 = vmul.f32 %v3316, %v3339
      %v3343 = vmul.f32 %v3321, %v3340
      %v3344 = vpack.c.bf16 %v3342, %v3341
      %v3345 = vpack.c.bf16 %v3343, %v3343
      %s3346 = scalar_lea.vmem %s8, 64
      %v3347 = vld [vmem:[%s3346] sm:$0xf]
      %v3348 = vld [vmem:[%s3346 + $0x4] sm:$0xf]
      %v3349 = vld [vmem:[%s3346 + $0x8] sm:$0xf]
      %v3350 = vld [vmem:[%s3346 + $0xc] sm:$0xf]
      %v3351 = vld [vmem:[%s3346 + $0x10] sm:$0xf]
      %v3352 = vld [vmem:[%s3346 + $0x14] sm:$0xf]
      %v3353 = vld [vmem:[%s3346 + $0x18] sm:$0xf]
      %v3354 = vld [vmem:[%s3346 + $0x1c] sm:$0xf]
      %v3355 = vld [vmem:[%s3346 + $0x20] sm:$0xf]
      %v3356 = vld [vmem:[%s3346 + $0x24] sm:$0xf]
      %v3357 = vld [vmem:[%s3346 + $0x28] sm:$0xf]
      %v3358 = vld [vmem:[%s3346 + $0x2c] sm:$0xf]
      %v3359 = vld [vmem:[%s3346 + $0x30] sm:$0xf]
      %v3360 = vld [vmem:[%s3346 + $0x34] sm:$0xf]
      %v3361 = vld [vmem:[%s3346 + $0x38] sm:$0xf]
      %v3362 = vld [vmem:[%s3346 + $0x3c] sm:$0xf]
      %v3363 = vlaneseq
      %v3364 = vshrl.u32 %v3363, 7
      %v3365 = vsub.s32 7, %v3364
      %v3366 = vrot.slane %v1999, %v3365
      %v3383 = vunpack.c.l.b16 %v3347
      %v3384 = vunpack.c.l.b16 %v3348
      %v3385 = vunpack.c.l.b16 %v3349
      %v3386 = vunpack.c.l.b16 %v3350
      %v3387 = vunpack.c.l.b16 %v3351
      %v3388 = vunpack.c.l.b16 %v3352
      %v3389 = vunpack.c.l.b16 %v3353
      %v3390 = vunpack.c.l.b16 %v3354
      %v3391 = vunpack.c.l.b16 %v3355
      %v3392 = vunpack.c.l.b16 %v3356
      %v3393 = vunpack.c.l.b16 %v3357
      %v3394 = vunpack.c.l.b16 %v3358
      %v3395 = vunpack.c.l.b16 %v3359
      %v3396 = vunpack.c.l.b16 %v3360
      %v3397 = vunpack.c.l.b16 %v3361
      %v3398 = vunpack.c.l.b16 %v3362
      %v3399 = vpack.c.b16 %v3384, %v3383
      %v3400 = vpack.c.b16 %v3386, %v3385
      %v3401 = vpack.c.b16 %v3388, %v3387
      %v3402 = vpack.c.b16 %v3390, %v3389
      %v3403 = vpack.c.b16 %v3392, %v3391
      %v3404 = vpack.c.b16 %v3394, %v3393
      %v3405 = vpack.c.b16 %v3396, %v3395
      %v3406 = vpack.c.b16 %v3398, %v3397
      %3415 = vmatprep.subr.bf16.mxu0 0
      %3416 = vmatpush1.bf16.msra.mxu0 %v3406
      %3417 = vmatprep.subr.bf16.mxu0 0
      %3418 = vmatpush1.bf16.msra.mxu0 %v3405
      %3419 = vmatprep.subr.bf16.mxu0 0
      %3420 = vmatpush1.bf16.msra.mxu0 %v3404
      %3421 = vmatprep.subr.bf16.mxu0 0
      %3422 = vmatpush1.bf16.msra.mxu0 %v3403
      %3423 = vmatprep.subr.bf16.mxu0 0
      %3424 = vmatpush1.bf16.msra.mxu0 %v3402
      %3425 = vmatprep.subr.bf16.mxu0 0
      %3426 = vmatpush1.bf16.msra.mxu0 %v3401
      %3427 = vmatprep.subr.bf16.mxu0 0
      %3428 = vmatpush1.bf16.msra.mxu0 %v3400
      %3429 = vmatprep.subr.bf16.mxu0 0
      %3430 = vmatpush1.bf16.msra.mxu0 %v3399
      %3431 = vmatprep.subr.bf16.mxu0 0
      %3432 = vmatpush2.bf16.msra.mxu0 0
      %3433 = vmatprep.subr.bf16.mxu0 0
      %3434 = vmatpush2.bf16.msra.mxu0 0
      %3435 = vmatprep.subr.bf16.mxu0 0
      %3436 = vmatpush2.bf16.msra.mxu0 0
      %3437 = vmatprep.subr.bf16.mxu0 0
      %3438 = vmatpush2.bf16.msra.mxu0 0
      %3439 = vmatprep.subr.bf16.mxu0 0
      %3440 = vmatpush2.bf16.msra.mxu0 0
      %3441 = vmatprep.subr.bf16.mxu0 0
      %3442 = vmatpush2.bf16.msra.mxu0 0
      %3443 = vmatprep.subr.bf16.mxu0 0
      %3444 = vmatpush2.bf16.msra.mxu0 0
      %3445 = vmatprep.subr.bf16.mxu0 0
      %3446 = vmatpush2.bf16.msra.mxu0 0
      %3447 = vmatprep.mubr.bf16.mxu0 0
      %3448 = vmatmul.mubr.bf16.gmra.mxu0 %v3344
      %v3449 = vpop.f32.mrf.mxu0
      %v3450 = vadd.f32 %v3366, %v3449
      %v3451 = vpop.f32.mrf.mxu0
      %v3452 = vpop.f32.mrf.mxu0
      %v3453 = vpop.f32.mrf.mxu0
      %3454 = vmatprep.mubr.bf16.mxu0 0
      %3455 = vmatmul.mubr.bf16.gmra.mxu0 %v3345
      %v3456 = vpop.f32.mrf.mxu0
      %v3457 = vpop.f32.mrf.mxu0
      %v3458 = vpop.f32.mrf.mxu0
      %v3459 = vpop.f32.mrf.mxu0
      %3460 = vdwg.mxu0
      %v3461 = vadd.f32 %v3193, %v3450
      %vm3462 = vcmask 253952
      %v3463 = vsel %vm3462, %v3461, 0.0
      %3464 = vadd.xlane.f32.xlu0 %v3463
      %v3465 = vpop.xlane.xlu0 %3464
      %v3466 = vmul.f32 %v3465, %v471
      %v3467 = vsub.f32 %v3461, %v3466
      %v3468 = vmul.f32 %v3467, %v3467
      %v3469 = vsel %vm3462, %v3468, 0.0
      %3470 = vadd.xlane.f32.xlu0 %v3469
      %v3471 = vpop.xlane.xlu0 %3470
      %v3472 = vmul.f32 %v3471, %v471
      %v3473 = vadd.f32 %v3472, 1e-05
      %v3474 = vrsqrt.pop %v3473
      %v3475 = vmul.f32 %v3467, %v3474
      %v3477 = vrot.slane %v359, 2
      %v3479 = vmul.f32 %v3475, %v3477
      %v3480 = vrot.slane %v359, 3
      %v3482 = vadd.f32 %v3479, %v3480
      %v3483 = vpack.c.bf16 %v3482, %v3482
      %v3484 = vld [vmem:[%s9] sm:$0xf]
      %v3485 = vld [vmem:[%s9 + $0x4] sm:$0xf]
      %v3486 = vld [vmem:[%s9 + $0x8] sm:$0xf]
      %v3487 = vld [vmem:[%s9 + $0xc] sm:$0xf]
      %v3492 = vunpack.c.l.b16 %v3484
      %v3493 = vunpack.c.l.b16 %v3485
      %v3494 = vunpack.c.l.b16 %v3486
      %v3495 = vunpack.c.l.b16 %v3487
      %v3496 = vpack.c.b16 %v3493, %v3492
      %v3497 = vpack.c.b16 %v3495, %v3494
      %v3500 = vrot.slane %v359, 4
      %v3503 = vsel %vm461, %v3483, 0
      %3505 = vmatprep.subr.bf16.mxu0 0
      %3506 = vmatpush1.bf16.msra.mxu0 0
      %3507 = vmatprep.subr.bf16.mxu0 0
      %3508 = vmatpush1.bf16.msra.mxu0 0
      %3509 = vmatprep.subr.bf16.mxu0 0
      %3510 = vmatpush1.bf16.msra.mxu0 0
      %3511 = vmatprep.subr.bf16.mxu0 0
      %3512 = vmatpush1.bf16.msra.mxu0 0
      %3513 = vmatprep.subr.bf16.mxu0 0
      %3514 = vmatpush1.bf16.msra.mxu0 0
      %3515 = vmatprep.subr.bf16.mxu0 0
      %3516 = vmatpush1.bf16.msra.mxu0 0
      %3517 = vmatprep.subr.bf16.mxu0 0
      %3518 = vmatpush1.bf16.msra.mxu0 %v3497
      %3519 = vmatprep.subr.bf16.mxu0 0
      %3520 = vmatpush1.bf16.msra.mxu0 %v3496
      %3521 = vmatprep.subr.bf16.mxu0 0
      %3522 = vmatpush2.bf16.msra.mxu0 0
      %3523 = vmatprep.subr.bf16.mxu0 0
      %3524 = vmatpush2.bf16.msra.mxu0 0
      %3525 = vmatprep.subr.bf16.mxu0 0
      %3526 = vmatpush2.bf16.msra.mxu0 0
      %3527 = vmatprep.subr.bf16.mxu0 0
      %3528 = vmatpush2.bf16.msra.mxu0 0
      %3529 = vmatprep.subr.bf16.mxu0 0
      %3530 = vmatpush2.bf16.msra.mxu0 0
      %3531 = vmatprep.subr.bf16.mxu0 0
      %3532 = vmatpush2.bf16.msra.mxu0 0
      %3533 = vmatprep.subr.bf16.mxu0 0
      %3534 = vmatpush2.bf16.msra.mxu0 0
      %3535 = vmatprep.subr.bf16.mxu0 0
      %3536 = vmatpush2.bf16.msra.mxu0 0
      %3537 = vmatprep.mubr.bf16.mxu0 0
      %3538 = vmatmul.mubr.bf16.gmra.mxu0 %v3503
      %v3539 = vpop.f32.mrf.mxu0
      %v3540 = vadd.f32 %v3500, %v3539
      %v3541 = vpop.f32.mrf.mxu0
      %v3542 = vpop.f32.mrf.mxu0
      %v3543 = vpop.f32.mrf.mxu0
      %3544 = vdwg.mxu0
      %3545 = vst [vmem:[%s357] sm:$0x1] %v3540
      %p3546 = scmp.lt.s32.totalorder %s21, 1
      %s3547 = scalar_select %p3546, %s21, 1
      %s3548 = scalar_lea.vmem %s10, %s3547
      // Predicated region
      $region61: #{forward.1} parent=59 // pred_check
        %p3549 = pneg %p254
      $region62: #{forward.1} parent=59 // pred_check_branch
        %3551 = sbr.rel (%p3549) target = $region64
      $region63: #{forward.1} parent=59 // pred_region
        _
      $region64: #{forward.1} parent=59 // pred_fallthru
        _
    $region60: #{forward.1} parent=5 // pred_fallthru
      _
    %p3552 = scmp.le.s32.totalorder 2, %s16
    // Predicated region
    $region65: #{forward.1} parent=5 // pred_check
      %p3553 = pneg %p3552
    $region66: #{forward.1} parent=5 // pred_check_branch
      %3555 = sbr.rel (%p3553) target = $region68
    $region67: #{forward.1} parent=5 // pred_region
      %s3556 = ssub.s32 %s16, 2
      // Predicated region
      $region69: #{forward.1} parent=67 // pred_check
        %p3557 = pneg %p260
      $region70: #{forward.1} parent=67 // pred_check_branch
        %3559 = sbr.rel (%p3557) target = $region72
      $region71: #{forward.1} parent=67 // pred_region
        %p3560 = scmp.lt.s32.totalorder %s22, 1
        %s3561 = scalar_select %p3560, %s22, 1
        %s3562 = scalar_lea.vmem %s10, %s3561
      $region72: #{forward.1} parent=67 // pred_fallthru
        _
    $region68: #{forward.1} parent=5 // pred_fallthru
      _
  $region6: #{forward.1} parent=0 // loop_footer
    %s20 = sadd.s32 1, %s16
  $region7: #{forward.1} parent=0 // loop_footer_branch
    %15 = sbr.rel target = $region3
  $region8: #{forward.1} parent=0 // loop_exit
    _

</llo_original>
